<compile_context>
chip_gen: v7x
topology: tpu7x:2x2x1
jax: 0.10.0
libtpu: 0.0.40
codegen_flags: <defaults>
</compile_context>

<pallas_src>
import functools
import math

import jax
import jax.numpy as jnp
from jax.experimental import pallas as pl
from jax.experimental.pallas import tpu as pltpu

_EPS = 1e-5  # torch.nn.LayerNorm default


def _layernorm(x, g, b):
    # x: (R, D); g, b: (1, D); all float32
    mu = jnp.mean(x, axis=-1, keepdims=True)
    var = jnp.mean((x - mu) ** 2, axis=-1, keepdims=True)
    return (x - mu) * jax.lax.rsqrt(var + _EPS) * g + b


def _fused_kernel(x_ref, g1_ref, b1_ref, win_ref, bin_ref,
                  wo_ref, bo_ref, g2_ref, b2_ref,
                  w1_ref, mb1_ref, w2_ref, mb2_ref,
                  o_ref,
                  attn_ref, qt_ref, k3_ref, v3_ref,
                  *, batch, seq, n_head):
    R, D = x_ref.shape                       # R = batch * seq
    S, H = seq, n_head                       # reference semantics force H == S
    dh = D // H
    scale = 1.0 / math.sqrt(dh)
    f32 = jnp.float32
    cd = win_ref.dtype                       # MXU operand dtype (bf16 or f32)
    approx_recip = cd != jnp.float32         # EUP reciprocal on the bf16 path

    x = x_ref[...]                           # (R, D) f32

    # ---- LayerNorm 1 + fused QKV projection over ALL B*S rows ---------------
    h1 = _layernorm(x, g1_ref[...], b1_ref[...])
    qkv = jnp.dot(h1.astype(cd), win_ref[...],
                  preferred_element_type=f32) + bin_ref[...]      # (R, 3D) f32
    q = qkv[:, 0:D] * scale                  # scale folded into q
    k = qkv[:, D:2 * D]
    v = qkv[:, 2 * D:3 * D]

    # ---- attention core (torch broadcast quirk: i indexes BOTH the q head
    #      and the k/v sequence row; requires H == S) -------------------------
    #   att[i, s, h]      = sum_j q[s, i*dh+j] * k[i, h*dh+j] / sqrt(dh)
    #   out[i, s, j]      = sum_h softmax_h(att)[i, s, h] * v[i, h*dh+j]
    #   attn[s, i*dh+j]   = out[i, s, j]
    for b in range(batch):                   # static, tiny loop (B grid folded)
        r0 = b * S
        # Head-split relayout via static-offset scratch stores (avoids
        # in-kernel lane-splitting reshapes / 3-D transposes).
        for hh in range(H):
            c = hh * dh
            qt_ref[hh] = q[r0:r0 + S, c:c + dh].astype(qt_ref.dtype)        # [i,s,j]
            k3_ref[:, hh, :] = k[r0:r0 + S, c:c + dh].astype(k3_ref.dtype)  # [i,h,j]
            v3_ref[:, hh, :] = v[r0:r0 + S, c:c + dh].astype(v3_ref.dtype)  # [i,h,j]
        qt = qt_ref[...]                     # (H, S, dh)
        k3 = k3_ref[...]                     # (S, H, dh)
        v3 = v3_ref[...]                     # (S, H, dh)

        att = jnp.einsum('isj,ihj->ish', qt, k3,
                         preferred_element_type=f32)              # (S, S, H) f32
        m = jnp.max(att, axis=-1, keepdims=True)
        e = jnp.exp(att - m)
        denom = jnp.sum(e, axis=-1, keepdims=True)
        w = e * pl.reciprocal(denom, approx=approx_recip)
        out = jnp.einsum('ish,ihj->isj', w.astype(cd), v3,
                         preferred_element_type=f32)              # (S, S, dh)

        # Assemble directly in the final (S, D) lane layout.
        for i in range(H):
            attn_ref[r0:r0 + S, i * dh:(i + 1) * dh] = out[i]

    # ---- out_proj + residual 1 ----------------------------------------------
    attn = attn_ref[...]
    x1 = jnp.dot(attn.astype(cd), wo_ref[...],
                 preferred_element_type=f32) + bo_ref[...] + x

    # ---- LayerNorm 2 + MLP (z * sigmoid(1.702 z)) + residual 2 ---------------
    h2 = _layernorm(x1, g2_ref[...], b2_ref[...])
    z = jnp.dot(h2.astype(cd), w1_ref[...],
                preferred_element_type=f32) + mb1_ref[...]
    z = z * jax.nn.sigmoid(1.702 * z)
    y = jnp.dot(z.astype(cd), w2_ref[...],
                preferred_element_type=f32) + mb2_ref[...]
    o_ref[...] = (y + x1).astype(o_ref.dtype)


def a_layer_forward(x, params, n_head, *, compute_dtype=jnp.bfloat16):
    """Fused a_layer forward.  compute_dtype sets the MXU operand dtype
    (bfloat16 = fast path, float32 = exact path); accumulation is always f32."""
    B, S, D = x.shape
    if n_head != S:
        # The torch code's batched matmul only broadcasts when n_head == seq_len.
        raise ValueError("reference semantics require n_head == seq_len")
    if D % n_head:
        raise ValueError("n_embd must be divisible by n_head")
    dh = D // n_head
    R = B * S
    f32 = jnp.float32
    cd = jnp.dtype(compute_dtype)

    x2 = x.reshape(R, D).astype(f32)          # fold batch into the matmul M dim
    wcast = lambda a: a.astype(cd)

    kernel = functools.partial(_fused_kernel, batch=B, seq=S, n_head=n_head)
    vmem = pl.BlockSpec(memory_space=pltpu.MemorySpace.VMEM)

    # Advisory cost estimate: 4 projections + attention core.
    flops = 24 * R * D * D + 4 * B * S * S * n_head * dh
    transcendentals = B * S * S * n_head + R * 4 * D          # exp + sigmoid
    bytes_accessed = 12 * D * D * cd.itemsize + 13 * D * 4 + 2 * R * D * 4

    out2 = pl.pallas_call(
        kernel,
        out_shape=jax.ShapeDtypeStruct((R, D), f32),
        in_specs=[vmem] * 13,
        out_specs=vmem,
        scratch_shapes=[
            pltpu.VMEM((R, D), f32),             # assembled attention output
            pltpu.VMEM((n_head, S, dh), cd),     # q, head-major   [i, s, j]
            pltpu.VMEM((S, n_head, dh), cd),     # k, head-split   [i, h, j]
            pltpu.VMEM((S, n_head, dh), cd),     # v, head-split   [i, h, j]
        ],
        cost_estimate=pl.CostEstimate(
            flops=int(flops),
            transcendentals=int(transcendentals),
            bytes_accessed=int(bytes_accessed)),
    )(x2,
      params["ln1_g"].astype(f32), params["ln1_b"].astype(f32),
      wcast(params["w_in"]), params["b_in"].astype(f32),
      wcast(params["w_out"]), params["b_out"].astype(f32),
      params["ln2_g"].astype(f32), params["ln2_b"].astype(f32),
      wcast(params["w1"]), params["b1"].astype(f32),
      wcast(params["w2"]), params["b2"].astype(f32))
    return out2.reshape(B, S, D)


# ---------------- pure-JAX mirror of the torch forward (for validation) ------
def _torch_reference(x, params, n_head):
    B, S, D = x.shape
    dh = D // n_head

    def ln(z, g, b):
        mu = z.mean(-1, keepdims=True)
        var = ((z - mu) ** 2).mean(-1, keepdims=True)
        return (z - mu) / jnp.sqrt(var + _EPS) * g[0] + b[0]

    res = x
    h = ln(x, params["ln1_g"], params["ln1_b"])
    qkv = h @ params["w_in"] + params["b_in"][0]
    qkv = qkv.reshape(B, S, 3, n_head, dh)
    q, k, v = qkv[:, :, 0], qkv[:, :, 1], qkv[:, :, 2]
    q = jnp.swapaxes(q, 1, 2)
    att = jnp.matmul(q, jnp.swapaxes(k, -2, -1)) / math.sqrt(dh)
    w = jax.nn.softmax(att, axis=-1)
    out = jnp.swapaxes(jnp.matmul(w, v), 1, 2).reshape(B, S, D)
    x1 = out @ params["w_out"] + params["b_out"][0] + res
    h = ln(x1, params["ln2_g"], params["ln2_b"])
    z = h @ params["w1"] + params["b1"][0]
    z = z * jax.nn.sigmoid(1.702 * z)
    return z @ params["w2"] + params["b2"][0] + x1


def init_params(key, n_embd):
    D = n_embd
    ks = jax.random.split(key, 12)

    def w(k, shape, scale=0.02):
        return jax.random.normal(k, shape, jnp.float32) * scale

    return dict(
        ln1_g=1.0 + w(ks[0], (1, D)), ln1_b=w(ks[1], (1, D)),
        w_in=w(ks[2], (D, 3 * D)),    b_in=w(ks[3], (1, 3 * D)),
        w_out=w(ks[4], (D, D)),       b_out=w(ks[5], (1, D)),
        ln2_g=1.0 + w(ks[6], (1, D)), ln2_b=w(ks[7], (1, D)),
        w1=w(ks[8], (D, 4 * D)),      b1=w(ks[9], (1, 4 * D)),
        w2=w(ks[10], (4 * D, D)),     b2=w(ks[11], (1, D)),
    )


if __name__ == "__main__":
    B, S, n_head, n_embd = 2, 8, 8, 64   # n_head == S (required by the torch broadcast)
    key = jax.random.PRNGKey(0)
    kx, kp = jax.random.split(key)
    x = jax.random.normal(kx, (B, S, n_embd), jnp.float32)
    params = init_params(kp, n_embd)

    y_ref = _torch_reference(x, params, n_head)

    # Exact path: f32 MXU operands, exact reciprocal -> tight tolerance.
    y32 = jax.jit(functools.partial(a_layer_forward, n_head=n_head,
                                    compute_dtype=jnp.float32))(x, params)
    y32 = jax.block_until_ready(y32)
    assert y32.shape == (B, S, n_embd)
    assert jnp.allclose(y32, y_ref, atol=1e-4, rtol=1e-4), "f32 path mismatch"

    # Fast path: bf16 MXU operands (f32 accumulation), approx reciprocal.
    ybf = jax.jit(functools.partial(a_layer_forward, n_head=n_head,
                                    compute_dtype=jnp.bfloat16))(x, params)
    ybf = jax.block_until_ready(ybf)
    assert jnp.allclose(ybf, y_ref, atol=2e-2, rtol=2e-2), "bf16 path mismatch"

    print("KERNEL_OK")
</pallas_src>

<mosaic_0001>
module attributes {stable_mosaic.version = 11 : i64} {
  func.func @_fused_kernel(%arg0: memref<16x64xf32, #tpu.memory_space<vmem>>, %arg1: memref<1x64xf32, #tpu.memory_space<vmem>>, %arg2: memref<1x64xf32, #tpu.memory_space<vmem>>, %arg3: memref<64x192xf32, #tpu.memory_space<vmem>>, %arg4: memref<1x192xf32, #tpu.memory_space<vmem>>, %arg5: memref<64x64xf32, #tpu.memory_space<vmem>>, %arg6: memref<1x64xf32, #tpu.memory_space<vmem>>, %arg7: memref<1x64xf32, #tpu.memory_space<vmem>>, %arg8: memref<1x64xf32, #tpu.memory_space<vmem>>, %arg9: memref<64x256xf32, #tpu.memory_space<vmem>>, %arg10: memref<1x256xf32, #tpu.memory_space<vmem>>, %arg11: memref<256x64xf32, #tpu.memory_space<vmem>>, %arg12: memref<1x64xf32, #tpu.memory_space<vmem>>, %arg13: memref<16x64xf32, #tpu.memory_space<vmem>>, %arg14: memref<16x64xf32, #tpu.memory_space<vmem>>, %arg15: memref<8x8x8xf32, #tpu.memory_space<vmem>>, %arg16: memref<8x8x8xf32, #tpu.memory_space<vmem>>, %arg17: memref<8x8x8xf32, #tpu.memory_space<vmem>>) attributes {dimension_semantics = [], scalar_prefetch = 0 : i64, scratch_operands = 4 : i64, tpu.core_type = #tpu.core_type<tc>} {
    %c0 = arith.constant 0 : index
    %c0_0 = arith.constant 0 : index
    %0 = vector.load %arg0[%c0, %c0_0] : memref<16x64xf32, #tpu.memory_space<vmem>>, vector<16x64xf32>
    %c0_1 = arith.constant 0 : index
    %c0_2 = arith.constant 0 : index
    %1 = vector.load %arg1[%c0_1, %c0_2] : memref<1x64xf32, #tpu.memory_space<vmem>>, vector<1x64xf32>
    %c0_3 = arith.constant 0 : index
    %c0_4 = arith.constant 0 : index
    %2 = vector.load %arg2[%c0_3, %c0_4] : memref<1x64xf32, #tpu.memory_space<vmem>>, vector<1x64xf32>
    %cst = arith.constant dense<0.000000e+00> : vector<16xf32>
    %3 = vector.multi_reduction <add>, %0, %cst [1] : vector<16x64xf32> to vector<16xf32>
    %4 = vector.shape_cast %3 : vector<16xf32> to vector<16x1xf32>
    %cst_5 = arith.constant 6.400000e+01 : f32
    %5 = vector.broadcast %cst_5 : f32 to vector<16x1xf32>
    %6 = arith.divf %4, %5 : vector<16x1xf32>
    %7 = vector.broadcast %6 : vector<16x1xf32> to vector<16x64xf32>
    %8 = arith.subf %0, %7 : vector<16x64xf32>
    %9 = arith.mulf %8, %8 : vector<16x64xf32>
    %cst_6 = arith.constant dense<0.000000e+00> : vector<16xf32>
    %10 = vector.multi_reduction <add>, %9, %cst_6 [1] : vector<16x64xf32> to vector<16xf32>
    %11 = vector.shape_cast %10 : vector<16xf32> to vector<16x1xf32>
    %cst_7 = arith.constant 6.400000e+01 : f32
    %12 = vector.broadcast %cst_7 : f32 to vector<16x1xf32>
    %13 = arith.divf %11, %12 : vector<16x1xf32>
    %14 = vector.broadcast %6 : vector<16x1xf32> to vector<16x64xf32>
    %15 = arith.subf %0, %14 : vector<16x64xf32>
    %cst_8 = arith.constant 9.99999974E-6 : f32
    %16 = vector.broadcast %cst_8 : f32 to vector<16x1xf32>
    %17 = arith.addf %13, %16 : vector<16x1xf32>
    %18 = math.rsqrt %17 : vector<16x1xf32>
    %19 = vector.broadcast %18 : vector<16x1xf32> to vector<16x64xf32>
    %20 = arith.mulf %15, %19 : vector<16x64xf32>
    %21 = vector.broadcast %1 : vector<1x64xf32> to vector<16x64xf32>
    %22 = arith.mulf %20, %21 : vector<16x64xf32>
    %23 = vector.broadcast %2 : vector<1x64xf32> to vector<16x64xf32>
    %24 = arith.addf %22, %23 : vector<16x64xf32>
    %c0_9 = arith.constant 0 : index
    %c0_10 = arith.constant 0 : index
    %25 = vector.load %arg3[%c0_9, %c0_10] : memref<64x192xf32, #tpu.memory_space<vmem>>, vector<64x192xf32>
    %cst_11 = arith.constant dense<0.000000e+00> : vector<16x192xf32>
    %26 = tpu.matmul %24, %25, %cst_11 {dimension_numbers = #tpu.dot_dimension_numbers<[1], [0], [0], [1], [0, 0, 1, 1], [], []>} : vector<16x64xf32>, vector<64x192xf32>, vector<16x192xf32> -> vector<16x192xf32>
    %c0_12 = arith.constant 0 : index
    %c0_13 = arith.constant 0 : index
    %27 = vector.load %arg4[%c0_12, %c0_13] : memref<1x192xf32, #tpu.memory_space<vmem>>, vector<1x192xf32>
    %28 = vector.broadcast %27 : vector<1x192xf32> to vector<16x192xf32>
    %29 = arith.addf %26, %28 : vector<16x192xf32>
    %30 = vector.extract_strided_slice %29 {offsets = [0, 0], sizes = [16, 64], strides = [1, 1]} : vector<16x192xf32> to vector<16x64xf32>
    %cst_14 = arith.constant 0.353553385 : f32
    %31 = vector.broadcast %cst_14 : f32 to vector<16x64xf32>
    %32 = arith.mulf %30, %31 : vector<16x64xf32>
    %33 = vector.extract_strided_slice %29 {offsets = [0, 64], sizes = [16, 64], strides = [1, 1]} : vector<16x192xf32> to vector<16x64xf32>
    %34 = vector.extract_strided_slice %29 {offsets = [0, 128], sizes = [16, 64], strides = [1, 1]} : vector<16x192xf32> to vector<16x64xf32>
    %35 = vector.extract_strided_slice %32 {offsets = [0, 0], sizes = [8, 8], strides = [1, 1]} : vector<16x64xf32> to vector<8x8xf32>
    %c0_15 = arith.constant 0 : index
    %c0_16 = arith.constant 0 : index
    %c0_17 = arith.constant 0 : index
    %36 = vector.load %arg15[%c0_15, %c0_16, %c0_17] : memref<8x8x8xf32, #tpu.memory_space<vmem>>, vector<1x8x8xf32>
    %37 = vector.shape_cast %36 : vector<1x8x8xf32> to vector<8x8xf32>
    %38 = vector.shape_cast %35 : vector<8x8xf32> to vector<1x8x8xf32>
    tpu.vector_store %arg15[%c0_15, %c0_16, %c0_17], %38 {strides = array<i32>} : memref<8x8x8xf32, #tpu.memory_space<vmem>>, vector<1x8x8xf32>,
    %39 = vector.extract_strided_slice %33 {offsets = [0, 0], sizes = [8, 8], strides = [1, 1]} : vector<16x64xf32> to vector<8x8xf32>
    %c0_18 = arith.constant 0 : index
    %c0_19 = arith.constant 0 : index
    %c0_20 = arith.constant 0 : index
    %40 = vector.load %arg16[%c0_18, %c0_19, %c0_20] : memref<8x8x8xf32, #tpu.memory_space<vmem>>, vector<8x1x8xf32>
    %41 = vector.shape_cast %40 : vector<8x1x8xf32> to vector<8x8xf32>
    %42 = vector.shape_cast %39 : vector<8x8xf32> to vector<8x1x8xf32>
    tpu.vector_store %arg16[%c0_18, %c0_19, %c0_20], %42 {strides = array<i32>} : memref<8x8x8xf32, #tpu.memory_space<vmem>>, vector<8x1x8xf32>,
    %43 = vector.extract_strided_slice %34 {offsets = [0, 0], sizes = [8, 8], strides = [1, 1]} : vector<16x64xf32> to vector<8x8xf32>
    %c0_21 = arith.constant 0 : index
    %c0_22 = arith.constant 0 : index
    %c0_23 = arith.constant 0 : index
    %44 = vector.load %arg17[%c0_21, %c0_22, %c0_23] : memref<8x8x8xf32, #tpu.memory_space<vmem>>, vector<8x1x8xf32>
    %45 = vector.shape_cast %44 : vector<8x1x8xf32> to vector<8x8xf32>
    %46 = vector.shape_cast %43 : vector<8x8xf32> to vector<8x1x8xf32>
    tpu.vector_store %arg17[%c0_21, %c0_22, %c0_23], %46 {strides = array<i32>} : memref<8x8x8xf32, #tpu.memory_space<vmem>>, vector<8x1x8xf32>,
    %47 = vector.extract_strided_slice %32 {offsets = [0, 8], sizes = [8, 8], strides = [1, 1]} : vector<16x64xf32> to vector<8x8xf32>
    %c1 = arith.constant 1 : index
    %c0_24 = arith.constant 0 : index
    %c0_25 = arith.constant 0 : index
    %48 = vector.load %arg15[%c1, %c0_24, %c0_25] : memref<8x8x8xf32, #tpu.memory_space<vmem>>, vector<1x8x8xf32>
    %49 = vector.shape_cast %48 : vector<1x8x8xf32> to vector<8x8xf32>
    %50 = vector.shape_cast %47 : vector<8x8xf32> to vector<1x8x8xf32>
    tpu.vector_store %arg15[%c1, %c0_24, %c0_25], %50 {strides = array<i32>} : memref<8x8x8xf32, #tpu.memory_space<vmem>>, vector<1x8x8xf32>,
    %51 = vector.extract_strided_slice %33 {offsets = [0, 8], sizes = [8, 8], strides = [1, 1]} : vector<16x64xf32> to vector<8x8xf32>
    %c0_26 = arith.constant 0 : index
    %c1_27 = arith.constant 1 : index
    %c0_28 = arith.constant 0 : index
    %52 = vector.load %arg16[%c0_26, %c1_27, %c0_28] : memref<8x8x8xf32, #tpu.memory_space<vmem>>, vector<8x1x8xf32>
    %53 = vector.shape_cast %52 : vector<8x1x8xf32> to vector<8x8xf32>
    %54 = vector.shape_cast %51 : vector<8x8xf32> to vector<8x1x8xf32>
    tpu.vector_store %arg16[%c0_26, %c1_27, %c0_28], %54 {strides = array<i32>} : memref<8x8x8xf32, #tpu.memory_space<vmem>>, vector<8x1x8xf32>,
    %55 = vector.extract_strided_slice %34 {offsets = [0, 8], sizes = [8, 8], strides = [1, 1]} : vector<16x64xf32> to vector<8x8xf32>
    %c0_29 = arith.constant 0 : index
    %c1_30 = arith.constant 1 : index
    %c0_31 = arith.constant 0 : index
    %56 = vector.load %arg17[%c0_29, %c1_30, %c0_31] : memref<8x8x8xf32, #tpu.memory_space<vmem>>, vector<8x1x8xf32>
    %57 = vector.shape_cast %56 : vector<8x1x8xf32> to vector<8x8xf32>
    %58 = vector.shape_cast %55 : vector<8x8xf32> to vector<8x1x8xf32>
    tpu.vector_store %arg17[%c0_29, %c1_30, %c0_31], %58 {strides = array<i32>} : memref<8x8x8xf32, #tpu.memory_space<vmem>>, vector<8x1x8xf32>,
    %59 = vector.extract_strided_slice %32 {offsets = [0, 16], sizes = [8, 8], strides = [1, 1]} : vector<16x64xf32> to vector<8x8xf32>
    %c2 = arith.constant 2 : index
    %c0_32 = arith.constant 0 : index
    %c0_33 = arith.constant 0 : index
    %60 = vector.load %arg15[%c2, %c0_32, %c0_33] : memref<8x8x8xf32, #tpu.memory_space<vmem>>, vector<1x8x8xf32>
    %61 = vector.shape_cast %60 : vector<1x8x8xf32> to vector<8x8xf32>
    %62 = vector.shape_cast %59 : vector<8x8xf32> to vector<1x8x8xf32>
    tpu.vector_store %arg15[%c2, %c0_32, %c0_33], %62 {strides = array<i32>} : memref<8x8x8xf32, #tpu.memory_space<vmem>>, vector<1x8x8xf32>,
    %63 = vector.extract_strided_slice %33 {offsets = [0, 16], sizes = [8, 8], strides = [1, 1]} : vector<16x64xf32> to vector<8x8xf32>
    %c0_34 = arith.constant 0 : index
    %c2_35 = arith.constant 2 : index
    %c0_36 = arith.constant 0 : index
    %64 = vector.load %arg16[%c0_34, %c2_35, %c0_36] : memref<8x8x8xf32, #tpu.memory_space<vmem>>, vector<8x1x8xf32>
    %65 = vector.shape_cast %64 : vector<8x1x8xf32> to vector<8x8xf32>
    %66 = vector.shape_cast %63 : vector<8x8xf32> to vector<8x1x8xf32>
    tpu.vector_store %arg16[%c0_34, %c2_35, %c0_36], %66 {strides = array<i32>} : memref<8x8x8xf32, #tpu.memory_space<vmem>>, vector<8x1x8xf32>,
    %67 = vector.extract_strided_slice %34 {offsets = [0, 16], sizes = [8, 8], strides = [1, 1]} : vector<16x64xf32> to vector<8x8xf32>
    %c0_37 = arith.constant 0 : index
    %c2_38 = arith.constant 2 : index
    %c0_39 = arith.constant 0 : index
    %68 = vector.load %arg17[%c0_37, %c2_38, %c0_39] : memref<8x8x8xf32, #tpu.memory_space<vmem>>, vector<8x1x8xf32>
    %69 = vector.shape_cast %68 : vector<8x1x8xf32> to vector<8x8xf32>
    %70 = vector.shape_cast %67 : vector<8x8xf32> to vector<8x1x8xf32>
    tpu.vector_store %arg17[%c0_37, %c2_38, %c0_39], %70 {strides = array<i32>} : memref<8x8x8xf32, #tpu.memory_space<vmem>>, vector<8x1x8xf32>,
    %71 = vector.extract_strided_slice %32 {offsets = [0, 24], sizes = [8, 8], strides = [1, 1]} : vector<16x64xf32> to vector<8x8xf32>
    %c3 = arith.constant 3 : index
    %c0_40 = arith.constant 0 : index
    %c0_41 = arith.constant 0 : index
    %72 = vector.load %arg15[%c3, %c0_40, %c0_41] : memref<8x8x8xf32, #tpu.memory_space<vmem>>, vector<1x8x8xf32>
    %73 = vector.shape_cast %72 : vector<1x8x8xf32> to vector<8x8xf32>
    %74 = vector.shape_cast %71 : vector<8x8xf32> to vector<1x8x8xf32>
    tpu.vector_store %arg15[%c3, %c0_40, %c0_41], %74 {strides = array<i32>} : memref<8x8x8xf32, #tpu.memory_space<vmem>>, vector<1x8x8xf32>,
    %75 = vector.extract_strided_slice %33 {offsets = [0, 24], sizes = [8, 8], strides = [1, 1]} : vector<16x64xf32> to vector<8x8xf32>
    %c0_42 = arith.constant 0 : index
    %c3_43 = arith.constant 3 : index
    %c0_44 = arith.constant 0 : index
    %76 = vector.load %arg16[%c0_42, %c3_43, %c0_44] : memref<8x8x8xf32, #tpu.memory_space<vmem>>, vector<8x1x8xf32>
    %77 = vector.shape_cast %76 : vector<8x1x8xf32> to vector<8x8xf32>
    %78 = vector.shape_cast %75 : vector<8x8xf32> to vector<8x1x8xf32>
    tpu.vector_store %arg16[%c0_42, %c3_43, %c0_44], %78 {strides = array<i32>} : memref<8x8x8xf32, #tpu.memory_space<vmem>>, vector<8x1x8xf32>,
    %79 = vector.extract_strided_slice %34 {offsets = [0, 24], sizes = [8, 8], strides = [1, 1]} : vector<16x64xf32> to vector<8x8xf32>
    %c0_45 = arith.constant 0 : index
    %c3_46 = arith.constant 3 : index
    %c0_47 = arith.constant 0 : index
    %80 = vector.load %arg17[%c0_45, %c3_46, %c0_47] : memref<8x8x8xf32, #tpu.memory_space<vmem>>, vector<8x1x8xf32>
    %81 = vector.shape_cast %80 : vector<8x1x8xf32> to vector<8x8xf32>
    %82 = vector.shape_cast %79 : vector<8x8xf32> to vector<8x1x8xf32>
    tpu.vector_store %arg17[%c0_45, %c3_46, %c0_47], %82 {strides = array<i32>} : memref<8x8x8xf32, #tpu.memory_space<vmem>>, vector<8x1x8xf32>,
    %83 = vector.extract_strided_slice %32 {offsets = [0, 32], sizes = [8, 8], strides = [1, 1]} : vector<16x64xf32> to vector<8x8xf32>
    %c4 = arith.constant 4 : index
    %c0_48 = arith.constant 0 : index
    %c0_49 = arith.constant 0 : index
    %84 = vector.load %arg15[%c4, %c0_48, %c0_49] : memref<8x8x8xf32, #tpu.memory_space<vmem>>, vector<1x8x8xf32>
    %85 = vector.shape_cast %84 : vector<1x8x8xf32> to vector<8x8xf32>
    %86 = vector.shape_cast %83 : vector<8x8xf32> to vector<1x8x8xf32>
    tpu.vector_store %arg15[%c4, %c0_48, %c0_49], %86 {strides = array<i32>} : memref<8x8x8xf32, #tpu.memory_space<vmem>>, vector<1x8x8xf32>,
    %87 = vector.extract_strided_slice %33 {offsets = [0, 32], sizes = [8, 8], strides = [1, 1]} : vector<16x64xf32> to vector<8x8xf32>
    %c0_50 = arith.constant 0 : index
    %c4_51 = arith.constant 4 : index
    %c0_52 = arith.constant 0 : index
    %88 = vector.load %arg16[%c0_50, %c4_51, %c0_52] : memref<8x8x8xf32, #tpu.memory_space<vmem>>, vector<8x1x8xf32>
    %89 = vector.shape_cast %88 : vector<8x1x8xf32> to vector<8x8xf32>
    %90 = vector.shape_cast %87 : vector<8x8xf32> to vector<8x1x8xf32>
    tpu.vector_store %arg16[%c0_50, %c4_51, %c0_52], %90 {strides = array<i32>} : memref<8x8x8xf32, #tpu.memory_space<vmem>>, vector<8x1x8xf32>,
    %91 = vector.extract_strided_slice %34 {offsets = [0, 32], sizes = [8, 8], strides = [1, 1]} : vector<16x64xf32> to vector<8x8xf32>
    %c0_53 = arith.constant 0 : index
    %c4_54 = arith.constant 4 : index
    %c0_55 = arith.constant 0 : index
    %92 = vector.load %arg17[%c0_53, %c4_54, %c0_55] : memref<8x8x8xf32, #tpu.memory_space<vmem>>, vector<8x1x8xf32>
    %93 = vector.shape_cast %92 : vector<8x1x8xf32> to vector<8x8xf32>
    %94 = vector.shape_cast %91 : vector<8x8xf32> to vector<8x1x8xf32>
    tpu.vector_store %arg17[%c0_53, %c4_54, %c0_55], %94 {strides = array<i32>} : memref<8x8x8xf32, #tpu.memory_space<vmem>>, vector<8x1x8xf32>,
    %95 = vector.extract_strided_slice %32 {offsets = [0, 40], sizes = [8, 8], strides = [1, 1]} : vector<16x64xf32> to vector<8x8xf32>
    %c5 = arith.constant 5 : index
    %c0_56 = arith.constant 0 : index
    %c0_57 = arith.constant 0 : index
    %96 = vector.load %arg15[%c5, %c0_56, %c0_57] : memref<8x8x8xf32, #tpu.memory_space<vmem>>, vector<1x8x8xf32>
    %97 = vector.shape_cast %96 : vector<1x8x8xf32> to vector<8x8xf32>
    %98 = vector.shape_cast %95 : vector<8x8xf32> to vector<1x8x8xf32>
    tpu.vector_store %arg15[%c5, %c0_56, %c0_57], %98 {strides = array<i32>} : memref<8x8x8xf32, #tpu.memory_space<vmem>>, vector<1x8x8xf32>,
    %99 = vector.extract_strided_slice %33 {offsets = [0, 40], sizes = [8, 8], strides = [1, 1]} : vector<16x64xf32> to vector<8x8xf32>
    %c0_58 = arith.constant 0 : index
    %c5_59 = arith.constant 5 : index
    %c0_60 = arith.constant 0 : index
    %100 = vector.load %arg16[%c0_58, %c5_59, %c0_60] : memref<8x8x8xf32, #tpu.memory_space<vmem>>, vector<8x1x8xf32>
    %101 = vector.shape_cast %100 : vector<8x1x8xf32> to vector<8x8xf32>
    %102 = vector.shape_cast %99 : vector<8x8xf32> to vector<8x1x8xf32>
    tpu.vector_store %arg16[%c0_58, %c5_59, %c0_60], %102 {strides = array<i32>} : memref<8x8x8xf32, #tpu.memory_space<vmem>>, vector<8x1x8xf32>,
    %103 = vector.extract_strided_slice %34 {offsets = [0, 40], sizes = [8, 8], strides = [1, 1]} : vector<16x64xf32> to vector<8x8xf32>
    %c0_61 = arith.constant 0 : index
    %c5_62 = arith.constant 5 : index
    %c0_63 = arith.constant 0 : index
    %104 = vector.load %arg17[%c0_61, %c5_62, %c0_63] : memref<8x8x8xf32, #tpu.memory_space<vmem>>, vector<8x1x8xf32>
    %105 = vector.shape_cast %104 : vector<8x1x8xf32> to vector<8x8xf32>
    %106 = vector.shape_cast %103 : vector<8x8xf32> to vector<8x1x8xf32>
    tpu.vector_store %arg17[%c0_61, %c5_62, %c0_63], %106 {strides = array<i32>} : memref<8x8x8xf32, #tpu.memory_space<vmem>>, vector<8x1x8xf32>,
    %107 = vector.extract_strided_slice %32 {offsets = [0, 48], sizes = [8, 8], strides = [1, 1]} : vector<16x64xf32> to vector<8x8xf32>
    %c6 = arith.constant 6 : index
    %c0_64 = arith.constant 0 : index
    %c0_65 = arith.constant 0 : index
    %108 = vector.load %arg15[%c6, %c0_64, %c0_65] : memref<8x8x8xf32, #tpu.memory_space<vmem>>, vector<1x8x8xf32>
    %109 = vector.shape_cast %108 : vector<1x8x8xf32> to vector<8x8xf32>
    %110 = vector.shape_cast %107 : vector<8x8xf32> to vector<1x8x8xf32>
    tpu.vector_store %arg15[%c6, %c0_64, %c0_65], %110 {strides = array<i32>} : memref<8x8x8xf32, #tpu.memory_space<vmem>>, vector<1x8x8xf32>,
    %111 = vector.extract_strided_slice %33 {offsets = [0, 48], sizes = [8, 8], strides = [1, 1]} : vector<16x64xf32> to vector<8x8xf32>
    %c0_66 = arith.constant 0 : index
    %c6_67 = arith.constant 6 : index
    %c0_68 = arith.constant 0 : index
    %112 = vector.load %arg16[%c0_66, %c6_67, %c0_68] : memref<8x8x8xf32, #tpu.memory_space<vmem>>, vector<8x1x8xf32>
    %113 = vector.shape_cast %112 : vector<8x1x8xf32> to vector<8x8xf32>
    %114 = vector.shape_cast %111 : vector<8x8xf32> to vector<8x1x8xf32>
    tpu.vector_store %arg16[%c0_66, %c6_67, %c0_68], %114 {strides = array<i32>} : memref<8x8x8xf32, #tpu.memory_space<vmem>>, vector<8x1x8xf32>,
    %115 = vector.extract_strided_slice %34 {offsets = [0, 48], sizes = [8, 8], strides = [1, 1]} : vector<16x64xf32> to vector<8x8xf32>
    %c0_69 = arith.constant 0 : index
    %c6_70 = arith.constant 6 : index
    %c0_71 = arith.constant 0 : index
    %116 = vector.load %arg17[%c0_69, %c6_70, %c0_71] : memref<8x8x8xf32, #tpu.memory_space<vmem>>, vector<8x1x8xf32>
    %117 = vector.shape_cast %116 : vector<8x1x8xf32> to vector<8x8xf32>
    %118 = vector.shape_cast %115 : vector<8x8xf32> to vector<8x1x8xf32>
    tpu.vector_store %arg17[%c0_69, %c6_70, %c0_71], %118 {strides = array<i32>} : memref<8x8x8xf32, #tpu.memory_space<vmem>>, vector<8x1x8xf32>,
    %119 = vector.extract_strided_slice %32 {offsets = [0, 56], sizes = [8, 8], strides = [1, 1]} : vector<16x64xf32> to vector<8x8xf32>
    %c7 = arith.constant 7 : index
    %c0_72 = arith.constant 0 : index
    %c0_73 = arith.constant 0 : index
    %120 = vector.load %arg15[%c7, %c0_72, %c0_73] : memref<8x8x8xf32, #tpu.memory_space<vmem>>, vector<1x8x8xf32>
    %121 = vector.shape_cast %120 : vector<1x8x8xf32> to vector<8x8xf32>
    %122 = vector.shape_cast %119 : vector<8x8xf32> to vector<1x8x8xf32>
    tpu.vector_store %arg15[%c7, %c0_72, %c0_73], %122 {strides = array<i32>} : memref<8x8x8xf32, #tpu.memory_space<vmem>>, vector<1x8x8xf32>,
    %123 = vector.extract_strided_slice %33 {offsets = [0, 56], sizes = [8, 8], strides = [1, 1]} : vector<16x64xf32> to vector<8x8xf32>
    %c0_74 = arith.constant 0 : index
    %c7_75 = arith.constant 7 : index
    %c0_76 = arith.constant 0 : index
    %124 = vector.load %arg16[%c0_74, %c7_75, %c0_76] : memref<8x8x8xf32, #tpu.memory_space<vmem>>, vector<8x1x8xf32>
    %125 = vector.shape_cast %124 : vector<8x1x8xf32> to vector<8x8xf32>
    %126 = vector.shape_cast %123 : vector<8x8xf32> to vector<8x1x8xf32>
    tpu.vector_store %arg16[%c0_74, %c7_75, %c0_76], %126 {strides = array<i32>} : memref<8x8x8xf32, #tpu.memory_space<vmem>>, vector<8x1x8xf32>,
    %127 = vector.extract_strided_slice %34 {offsets = [0, 56], sizes = [8, 8], strides = [1, 1]} : vector<16x64xf32> to vector<8x8xf32>
    %c0_77 = arith.constant 0 : index
    %c7_78 = arith.constant 7 : index
    %c0_79 = arith.constant 0 : index
    %128 = vector.load %arg17[%c0_77, %c7_78, %c0_79] : memref<8x8x8xf32, #tpu.memory_space<vmem>>, vector<8x1x8xf32>
    %129 = vector.shape_cast %128 : vector<8x1x8xf32> to vector<8x8xf32>
    %130 = vector.shape_cast %127 : vector<8x8xf32> to vector<8x1x8xf32>
    tpu.vector_store %arg17[%c0_77, %c7_78, %c0_79], %130 {strides = array<i32>} : memref<8x8x8xf32, #tpu.memory_space<vmem>>, vector<8x1x8xf32>,
    %c0_80 = arith.constant 0 : index
    %c0_81 = arith.constant 0 : index
    %c0_82 = arith.constant 0 : index
    %131 = vector.load %arg15[%c0_80, %c0_81, %c0_82] : memref<8x8x8xf32, #tpu.memory_space<vmem>>, vector<8x8x8xf32>
    %c0_83 = arith.constant 0 : index
    %c0_84 = arith.constant 0 : index
    %c0_85 = arith.constant 0 : index
    %132 = vector.load %arg16[%c0_83, %c0_84, %c0_85] : memref<8x8x8xf32, #tpu.memory_space<vmem>>, vector<8x8x8xf32>
    %c0_86 = arith.constant 0 : index
    %c0_87 = arith.constant 0 : index
    %c0_88 = arith.constant 0 : index
    %133 = vector.load %arg17[%c0_86, %c0_87, %c0_88] : memref<8x8x8xf32, #tpu.memory_space<vmem>>, vector<8x8x8xf32>
    "tpu.trace_start"() <{level = 10 : i32, message = "isj,ihj->ish"}> : () -> ()
    %cst_89 = arith.constant dense<0.000000e+00> : vector<8x8x8xf32>
    %134 = tpu.matmul %131, %132, %cst_89 {dimension_numbers = #tpu.dot_dimension_numbers<[2], [2], [1], [1], [0, 0, 0, 1, 1, 1], [0], [0]>} : vector<8x8x8xf32>, vector<8x8x8xf32>, vector<8x8x8xf32> -> vector<8x8x8xf32>
    "tpu.trace_stop"() : () -> ()
    %cst_90 = arith.constant dense<0xFF800000> : vector<8x8xf32>
    %135 = vector.multi_reduction <maximumf>, %134, %cst_90 [2] : vector<8x8x8xf32> to vector<8x8xf32>
    %136 = vector.shape_cast %135 : vector<8x8xf32> to vector<8x8x1xf32>
    %137 = vector.broadcast %136 : vector<8x8x1xf32> to vector<8x8x8xf32>
    %138 = arith.subf %134, %137 : vector<8x8x8xf32>
    %139 = math.exp %138 : vector<8x8x8xf32>
    %cst_91 = arith.constant dense<0.000000e+00> : vector<8x8xf32>
    %140 = vector.multi_reduction <add>, %139, %cst_91 [2] : vector<8x8x8xf32> to vector<8x8xf32>
    %141 = vector.shape_cast %140 : vector<8x8xf32> to vector<8x8x1xf32>
    %142 = tpu.reciprocal %141 : vector<8x8x1xf32> -> vector<8x8x1xf32>
    %143 = vector.broadcast %142 : vector<8x8x1xf32> to vector<8x8x8xf32>
    %144 = arith.mulf %139, %143 : vector<8x8x8xf32>
    "tpu.trace_start"() <{level = 10 : i32, message = "ish,ihj->isj"}> : () -> ()
    %cst_92 = arith.constant dense<0.000000e+00> : vector<8x8x8xf32>
    %145 = tpu.matmul %144, %133, %cst_92 {dimension_numbers = #tpu.dot_dimension_numbers<[2], [1], [1], [2], [0, 0, 0, 1, 1, 2], [0], [0]>} : vector<8x8x8xf32>, vector<8x8x8xf32>, vector<8x8x8xf32> -> vector<8x8x8xf32>
    "tpu.trace_stop"() : () -> ()
    %146 = vector.extract_strided_slice %145 {offsets = [0, 0, 0], sizes = [1, 8, 8], strides = [1, 1, 1]} : vector<8x8x8xf32> to vector<1x8x8xf32>
    %147 = vector.shape_cast %146 : vector<1x8x8xf32> to vector<8x8xf32>
    %c0_93 = arith.constant 0 : index
    %c0_94 = arith.constant 0 : index
    %148 = vector.load %arg14[%c0_93, %c0_94] : memref<16x64xf32, #tpu.memory_space<vmem>>, vector<8x8xf32>
    tpu.vector_store %arg14[%c0_93, %c0_94], %147 {strides = array<i32>} : memref<16x64xf32, #tpu.memory_space<vmem>>, vector<8x8xf32>,
    %149 = vector.extract_strided_slice %145 {offsets = [1, 0, 0], sizes = [1, 8, 8], strides = [1, 1, 1]} : vector<8x8x8xf32> to vector<1x8x8xf32>
    %150 = vector.shape_cast %149 : vector<1x8x8xf32> to vector<8x8xf32>
    %c0_95 = arith.constant 0 : index
    %c8 = arith.constant 8 : index
    %151 = vector.load %arg14[%c0_95, %c8] : memref<16x64xf32, #tpu.memory_space<vmem>>, vector<8x8xf32>
    tpu.vector_store %arg14[%c0_95, %c8], %150 {strides = array<i32>} : memref<16x64xf32, #tpu.memory_space<vmem>>, vector<8x8xf32>,
    %152 = vector.extract_strided_slice %145 {offsets = [2, 0, 0], sizes = [1, 8, 8], strides = [1, 1, 1]} : vector<8x8x8xf32> to vector<1x8x8xf32>
    %153 = vector.shape_cast %152 : vector<1x8x8xf32> to vector<8x8xf32>
    %c0_96 = arith.constant 0 : index
    %c16 = arith.constant 16 : index
    %154 = vector.load %arg14[%c0_96, %c16] : memref<16x64xf32, #tpu.memory_space<vmem>>, vector<8x8xf32>
    tpu.vector_store %arg14[%c0_96, %c16], %153 {strides = array<i32>} : memref<16x64xf32, #tpu.memory_space<vmem>>, vector<8x8xf32>,
    %155 = vector.extract_strided_slice %145 {offsets = [3, 0, 0], sizes = [1, 8, 8], strides = [1, 1, 1]} : vector<8x8x8xf32> to vector<1x8x8xf32>
    %156 = vector.shape_cast %155 : vector<1x8x8xf32> to vector<8x8xf32>
    %c0_97 = arith.constant 0 : index
    %c24 = arith.constant 24 : index
    %157 = vector.load %arg14[%c0_97, %c24] : memref<16x64xf32, #tpu.memory_space<vmem>>, vector<8x8xf32>
    tpu.vector_store %arg14[%c0_97, %c24], %156 {strides = array<i32>} : memref<16x64xf32, #tpu.memory_space<vmem>>, vector<8x8xf32>,
    %158 = vector.extract_strided_slice %145 {offsets = [4, 0, 0], sizes = [1, 8, 8], strides = [1, 1, 1]} : vector<8x8x8xf32> to vector<1x8x8xf32>
    %159 = vector.shape_cast %158 : vector<1x8x8xf32> to vector<8x8xf32>
    %c0_98 = arith.constant 0 : index
    %c32 = arith.constant 32 : index
    %160 = vector.load %arg14[%c0_98, %c32] : memref<16x64xf32, #tpu.memory_space<vmem>>, vector<8x8xf32>
    tpu.vector_store %arg14[%c0_98, %c32], %159 {strides = array<i32>} : memref<16x64xf32, #tpu.memory_space<vmem>>, vector<8x8xf32>,
    %161 = vector.extract_strided_slice %145 {offsets = [5, 0, 0], sizes = [1, 8, 8], strides = [1, 1, 1]} : vector<8x8x8xf32> to vector<1x8x8xf32>
    %162 = vector.shape_cast %161 : vector<1x8x8xf32> to vector<8x8xf32>
    %c0_99 = arith.constant 0 : index
    %c40 = arith.constant 40 : index
    %163 = vector.load %arg14[%c0_99, %c40] : memref<16x64xf32, #tpu.memory_space<vmem>>, vector<8x8xf32>
    tpu.vector_store %arg14[%c0_99, %c40], %162 {strides = array<i32>} : memref<16x64xf32, #tpu.memory_space<vmem>>, vector<8x8xf32>,
    %164 = vector.extract_strided_slice %145 {offsets = [6, 0, 0], sizes = [1, 8, 8], strides = [1, 1, 1]} : vector<8x8x8xf32> to vector<1x8x8xf32>
    %165 = vector.shape_cast %164 : vector<1x8x8xf32> to vector<8x8xf32>
    %c0_100 = arith.constant 0 : index
    %c48 = arith.constant 48 : index
    %166 = vector.load %arg14[%c0_100, %c48] : memref<16x64xf32, #tpu.memory_space<vmem>>, vector<8x8xf32>
    tpu.vector_store %arg14[%c0_100, %c48], %165 {strides = array<i32>} : memref<16x64xf32, #tpu.memory_space<vmem>>, vector<8x8xf32>,
    %167 = vector.extract_strided_slice %145 {offsets = [7, 0, 0], sizes = [1, 8, 8], strides = [1, 1, 1]} : vector<8x8x8xf32> to vector<1x8x8xf32>
    %168 = vector.shape_cast %167 : vector<1x8x8xf32> to vector<8x8xf32>
    %c0_101 = arith.constant 0 : index
    %c56 = arith.constant 56 : index
    %169 = vector.load %arg14[%c0_101, %c56] : memref<16x64xf32, #tpu.memory_space<vmem>>, vector<8x8xf32>
    tpu.vector_store %arg14[%c0_101, %c56], %168 {strides = array<i32>} : memref<16x64xf32, #tpu.memory_space<vmem>>, vector<8x8xf32>,
    %170 = vector.extract_strided_slice %32 {offsets = [8, 0], sizes = [8, 8], strides = [1, 1]} : vector<16x64xf32> to vector<8x8xf32>
    %c0_102 = arith.constant 0 : index
    %c0_103 = arith.constant 0 : index
    %c0_104 = arith.constant 0 : index
    %171 = vector.load %arg15[%c0_102, %c0_103, %c0_104] : memref<8x8x8xf32, #tpu.memory_space<vmem>>, vector<1x8x8xf32>
    %172 = vector.shape_cast %171 : vector<1x8x8xf32> to vector<8x8xf32>
    %173 = vector.shape_cast %170 : vector<8x8xf32> to vector<1x8x8xf32>
    tpu.vector_store %arg15[%c0_102, %c0_103, %c0_104], %173 {strides = array<i32>} : memref<8x8x8xf32, #tpu.memory_space<vmem>>, vector<1x8x8xf32>,
    %174 = vector.extract_strided_slice %33 {offsets = [8, 0], sizes = [8, 8], strides = [1, 1]} : vector<16x64xf32> to vector<8x8xf32>
    %c0_105 = arith.constant 0 : index
    %c0_106 = arith.constant 0 : index
    %c0_107 = arith.constant 0 : index
    %175 = vector.load %arg16[%c0_105, %c0_106, %c0_107] : memref<8x8x8xf32, #tpu.memory_space<vmem>>, vector<8x1x8xf32>
    %176 = vector.shape_cast %175 : vector<8x1x8xf32> to vector<8x8xf32>
    %177 = vector.shape_cast %174 : vector<8x8xf32> to vector<8x1x8xf32>
    tpu.vector_store %arg16[%c0_105, %c0_106, %c0_107], %177 {strides = array<i32>} : memref<8x8x8xf32, #tpu.memory_space<vmem>>, vector<8x1x8xf32>,
    %178 = vector.extract_strided_slice %34 {offsets = [8, 0], sizes = [8, 8], strides = [1, 1]} : vector<16x64xf32> to vector<8x8xf32>
    %c0_108 = arith.constant 0 : index
    %c0_109 = arith.constant 0 : index
    %c0_110 = arith.constant 0 : index
    %179 = vector.load %arg17[%c0_108, %c0_109, %c0_110] : memref<8x8x8xf32, #tpu.memory_space<vmem>>, vector<8x1x8xf32>
    %180 = vector.shape_cast %179 : vector<8x1x8xf32> to vector<8x8xf32>
    %181 = vector.shape_cast %178 : vector<8x8xf32> to vector<8x1x8xf32>
    tpu.vector_store %arg17[%c0_108, %c0_109, %c0_110], %181 {strides = array<i32>} : memref<8x8x8xf32, #tpu.memory_space<vmem>>, vector<8x1x8xf32>,
    %182 = vector.extract_strided_slice %32 {offsets = [8, 8], sizes = [8, 8], strides = [1, 1]} : vector<16x64xf32> to vector<8x8xf32>
    %c1_111 = arith.constant 1 : index
    %c0_112 = arith.constant 0 : index
    %c0_113 = arith.constant 0 : index
    %183 = vector.load %arg15[%c1_111, %c0_112, %c0_113] : memref<8x8x8xf32, #tpu.memory_space<vmem>>, vector<1x8x8xf32>
    %184 = vector.shape_cast %183 : vector<1x8x8xf32> to vector<8x8xf32>
    %185 = vector.shape_cast %182 : vector<8x8xf32> to vector<1x8x8xf32>
    tpu.vector_store %arg15[%c1_111, %c0_112, %c0_113], %185 {strides = array<i32>} : memref<8x8x8xf32, #tpu.memory_space<vmem>>, vector<1x8x8xf32>,
    %186 = vector.extract_strided_slice %33 {offsets = [8, 8], sizes = [8, 8], strides = [1, 1]} : vector<16x64xf32> to vector<8x8xf32>
    %c0_114 = arith.constant 0 : index
    %c1_115 = arith.constant 1 : index
    %c0_116 = arith.constant 0 : index
    %187 = vector.load %arg16[%c0_114, %c1_115, %c0_116] : memref<8x8x8xf32, #tpu.memory_space<vmem>>, vector<8x1x8xf32>
    %188 = vector.shape_cast %187 : vector<8x1x8xf32> to vector<8x8xf32>
    %189 = vector.shape_cast %186 : vector<8x8xf32> to vector<8x1x8xf32>
    tpu.vector_store %arg16[%c0_114, %c1_115, %c0_116], %189 {strides = array<i32>} : memref<8x8x8xf32, #tpu.memory_space<vmem>>, vector<8x1x8xf32>,
    %190 = vector.extract_strided_slice %34 {offsets = [8, 8], sizes = [8, 8], strides = [1, 1]} : vector<16x64xf32> to vector<8x8xf32>
    %c0_117 = arith.constant 0 : index
    %c1_118 = arith.constant 1 : index
    %c0_119 = arith.constant 0 : index
    %191 = vector.load %arg17[%c0_117, %c1_118, %c0_119] : memref<8x8x8xf32, #tpu.memory_space<vmem>>, vector<8x1x8xf32>
    %192 = vector.shape_cast %191 : vector<8x1x8xf32> to vector<8x8xf32>
    %193 = vector.shape_cast %190 : vector<8x8xf32> to vector<8x1x8xf32>
    tpu.vector_store %arg17[%c0_117, %c1_118, %c0_119], %193 {strides = array<i32>} : memref<8x8x8xf32, #tpu.memory_space<vmem>>, vector<8x1x8xf32>,
    %194 = vector.extract_strided_slice %32 {offsets = [8, 16], sizes = [8, 8], strides = [1, 1]} : vector<16x64xf32> to vector<8x8xf32>
    %c2_120 = arith.constant 2 : index
    %c0_121 = arith.constant 0 : index
    %c0_122 = arith.constant 0 : index
    %195 = vector.load %arg15[%c2_120, %c0_121, %c0_122] : memref<8x8x8xf32, #tpu.memory_space<vmem>>, vector<1x8x8xf32>
    %196 = vector.shape_cast %195 : vector<1x8x8xf32> to vector<8x8xf32>
    %197 = vector.shape_cast %194 : vector<8x8xf32> to vector<1x8x8xf32>
    tpu.vector_store %arg15[%c2_120, %c0_121, %c0_122], %197 {strides = array<i32>} : memref<8x8x8xf32, #tpu.memory_space<vmem>>, vector<1x8x8xf32>,
    %198 = vector.extract_strided_slice %33 {offsets = [8, 16], sizes = [8, 8], strides = [1, 1]} : vector<16x64xf32> to vector<8x8xf32>
    %c0_123 = arith.constant 0 : index
    %c2_124 = arith.constant 2 : index
    %c0_125 = arith.constant 0 : index
    %199 = vector.load %arg16[%c0_123, %c2_124, %c0_125] : memref<8x8x8xf32, #tpu.memory_space<vmem>>, vector<8x1x8xf32>
    %200 = vector.shape_cast %199 : vector<8x1x8xf32> to vector<8x8xf32>
    %201 = vector.shape_cast %198 : vector<8x8xf32> to vector<8x1x8xf32>
    tpu.vector_store %arg16[%c0_123, %c2_124, %c0_125], %201 {strides = array<i32>} : memref<8x8x8xf32, #tpu.memory_space<vmem>>, vector<8x1x8xf32>,
    %202 = vector.extract_strided_slice %34 {offsets = [8, 16], sizes = [8, 8], strides = [1, 1]} : vector<16x64xf32> to vector<8x8xf32>
    %c0_126 = arith.constant 0 : index
    %c2_127 = arith.constant 2 : index
    %c0_128 = arith.constant 0 : index
    %203 = vector.load %arg17[%c0_126, %c2_127, %c0_128] : memref<8x8x8xf32, #tpu.memory_space<vmem>>, vector<8x1x8xf32>
    %204 = vector.shape_cast %203 : vector<8x1x8xf32> to vector<8x8xf32>
    %205 = vector.shape_cast %202 : vector<8x8xf32> to vector<8x1x8xf32>
    tpu.vector_store %arg17[%c0_126, %c2_127, %c0_128], %205 {strides = array<i32>} : memref<8x8x8xf32, #tpu.memory_space<vmem>>, vector<8x1x8xf32>,
    %206 = vector.extract_strided_slice %32 {offsets = [8, 24], sizes = [8, 8], strides = [1, 1]} : vector<16x64xf32> to vector<8x8xf32>
    %c3_129 = arith.constant 3 : index
    %c0_130 = arith.constant 0 : index
    %c0_131 = arith.constant 0 : index
    %207 = vector.load %arg15[%c3_129, %c0_130, %c0_131] : memref<8x8x8xf32, #tpu.memory_space<vmem>>, vector<1x8x8xf32>
    %208 = vector.shape_cast %207 : vector<1x8x8xf32> to vector<8x8xf32>
    %209 = vector.shape_cast %206 : vector<8x8xf32> to vector<1x8x8xf32>
    tpu.vector_store %arg15[%c3_129, %c0_130, %c0_131], %209 {strides = array<i32>} : memref<8x8x8xf32, #tpu.memory_space<vmem>>, vector<1x8x8xf32>,
    %210 = vector.extract_strided_slice %33 {offsets = [8, 24], sizes = [8, 8], strides = [1, 1]} : vector<16x64xf32> to vector<8x8xf32>
    %c0_132 = arith.constant 0 : index
    %c3_133 = arith.constant 3 : index
    %c0_134 = arith.constant 0 : index
    %211 = vector.load %arg16[%c0_132, %c3_133, %c0_134] : memref<8x8x8xf32, #tpu.memory_space<vmem>>, vector<8x1x8xf32>
    %212 = vector.shape_cast %211 : vector<8x1x8xf32> to vector<8x8xf32>
    %213 = vector.shape_cast %210 : vector<8x8xf32> to vector<8x1x8xf32>
    tpu.vector_store %arg16[%c0_132, %c3_133, %c0_134], %213 {strides = array<i32>} : memref<8x8x8xf32, #tpu.memory_space<vmem>>, vector<8x1x8xf32>,
    %214 = vector.extract_strided_slice %34 {offsets = [8, 24], sizes = [8, 8], strides = [1, 1]} : vector<16x64xf32> to vector<8x8xf32>
    %c0_135 = arith.constant 0 : index
    %c3_136 = arith.constant 3 : index
    %c0_137 = arith.constant 0 : index
    %215 = vector.load %arg17[%c0_135, %c3_136, %c0_137] : memref<8x8x8xf32, #tpu.memory_space<vmem>>, vector<8x1x8xf32>
    %216 = vector.shape_cast %215 : vector<8x1x8xf32> to vector<8x8xf32>
    %217 = vector.shape_cast %214 : vector<8x8xf32> to vector<8x1x8xf32>
    tpu.vector_store %arg17[%c0_135, %c3_136, %c0_137], %217 {strides = array<i32>} : memref<8x8x8xf32, #tpu.memory_space<vmem>>, vector<8x1x8xf32>,
    %218 = vector.extract_strided_slice %32 {offsets = [8, 32], sizes = [8, 8], strides = [1, 1]} : vector<16x64xf32> to vector<8x8xf32>
    %c4_138 = arith.constant 4 : index
    %c0_139 = arith.constant 0 : index
    %c0_140 = arith.constant 0 : index
    %219 = vector.load %arg15[%c4_138, %c0_139, %c0_140] : memref<8x8x8xf32, #tpu.memory_space<vmem>>, vector<1x8x8xf32>
    %220 = vector.shape_cast %219 : vector<1x8x8xf32> to vector<8x8xf32>
    %221 = vector.shape_cast %218 : vector<8x8xf32> to vector<1x8x8xf32>
    tpu.vector_store %arg15[%c4_138, %c0_139, %c0_140], %221 {strides = array<i32>} : memref<8x8x8xf32, #tpu.memory_space<vmem>>, vector<1x8x8xf32>,
    %222 = vector.extract_strided_slice %33 {offsets = [8, 32], sizes = [8, 8], strides = [1, 1]} : vector<16x64xf32> to vector<8x8xf32>
    %c0_141 = arith.constant 0 : index
    %c4_142 = arith.constant 4 : index
    %c0_143 = arith.constant 0 : index
    %223 = vector.load %arg16[%c0_141, %c4_142, %c0_143] : memref<8x8x8xf32, #tpu.memory_space<vmem>>, vector<8x1x8xf32>
    %224 = vector.shape_cast %223 : vector<8x1x8xf32> to vector<8x8xf32>
    %225 = vector.shape_cast %222 : vector<8x8xf32> to vector<8x1x8xf32>
    tpu.vector_store %arg16[%c0_141, %c4_142, %c0_143], %225 {strides = array<i32>} : memref<8x8x8xf32, #tpu.memory_space<vmem>>, vector<8x1x8xf32>,
    %226 = vector.extract_strided_slice %34 {offsets = [8, 32], sizes = [8, 8], strides = [1, 1]} : vector<16x64xf32> to vector<8x8xf32>
    %c0_144 = arith.constant 0 : index
    %c4_145 = arith.constant 4 : index
    %c0_146 = arith.constant 0 : index
    %227 = vector.load %arg17[%c0_144, %c4_145, %c0_146] : memref<8x8x8xf32, #tpu.memory_space<vmem>>, vector<8x1x8xf32>
    %228 = vector.shape_cast %227 : vector<8x1x8xf32> to vector<8x8xf32>
    %229 = vector.shape_cast %226 : vector<8x8xf32> to vector<8x1x8xf32>
    tpu.vector_store %arg17[%c0_144, %c4_145, %c0_146], %229 {strides = array<i32>} : memref<8x8x8xf32, #tpu.memory_space<vmem>>, vector<8x1x8xf32>,
    %230 = vector.extract_strided_slice %32 {offsets = [8, 40], sizes = [8, 8], strides = [1, 1]} : vector<16x64xf32> to vector<8x8xf32>
    %c5_147 = arith.constant 5 : index
    %c0_148 = arith.constant 0 : index
    %c0_149 = arith.constant 0 : index
    %231 = vector.load %arg15[%c5_147, %c0_148, %c0_149] : memref<8x8x8xf32, #tpu.memory_space<vmem>>, vector<1x8x8xf32>
    %232 = vector.shape_cast %231 : vector<1x8x8xf32> to vector<8x8xf32>
    %233 = vector.shape_cast %230 : vector<8x8xf32> to vector<1x8x8xf32>
    tpu.vector_store %arg15[%c5_147, %c0_148, %c0_149], %233 {strides = array<i32>} : memref<8x8x8xf32, #tpu.memory_space<vmem>>, vector<1x8x8xf32>,
    %234 = vector.extract_strided_slice %33 {offsets = [8, 40], sizes = [8, 8], strides = [1, 1]} : vector<16x64xf32> to vector<8x8xf32>
    %c0_150 = arith.constant 0 : index
    %c5_151 = arith.constant 5 : index
    %c0_152 = arith.constant 0 : index
    %235 = vector.load %arg16[%c0_150, %c5_151, %c0_152] : memref<8x8x8xf32, #tpu.memory_space<vmem>>, vector<8x1x8xf32>
    %236 = vector.shape_cast %235 : vector<8x1x8xf32> to vector<8x8xf32>
    %237 = vector.shape_cast %234 : vector<8x8xf32> to vector<8x1x8xf32>
    tpu.vector_store %arg16[%c0_150, %c5_151, %c0_152], %237 {strides = array<i32>} : memref<8x8x8xf32, #tpu.memory_space<vmem>>, vector<8x1x8xf32>,
    %238 = vector.extract_strided_slice %34 {offsets = [8, 40], sizes = [8, 8], strides = [1, 1]} : vector<16x64xf32> to vector<8x8xf32>
    %c0_153 = arith.constant 0 : index
    %c5_154 = arith.constant 5 : index
    %c0_155 = arith.constant 0 : index
    %239 = vector.load %arg17[%c0_153, %c5_154, %c0_155] : memref<8x8x8xf32, #tpu.memory_space<vmem>>, vector<8x1x8xf32>
    %240 = vector.shape_cast %239 : vector<8x1x8xf32> to vector<8x8xf32>
    %241 = vector.shape_cast %238 : vector<8x8xf32> to vector<8x1x8xf32>
    tpu.vector_store %arg17[%c0_153, %c5_154, %c0_155], %241 {strides = array<i32>} : memref<8x8x8xf32, #tpu.memory_space<vmem>>, vector<8x1x8xf32>,
    %242 = vector.extract_strided_slice %32 {offsets = [8, 48], sizes = [8, 8], strides = [1, 1]} : vector<16x64xf32> to vector<8x8xf32>
    %c6_156 = arith.constant 6 : index
    %c0_157 = arith.constant 0 : index
    %c0_158 = arith.constant 0 : index
    %243 = vector.load %arg15[%c6_156, %c0_157, %c0_158] : memref<8x8x8xf32, #tpu.memory_space<vmem>>, vector<1x8x8xf32>
    %244 = vector.shape_cast %243 : vector<1x8x8xf32> to vector<8x8xf32>
    %245 = vector.shape_cast %242 : vector<8x8xf32> to vector<1x8x8xf32>
    tpu.vector_store %arg15[%c6_156, %c0_157, %c0_158], %245 {strides = array<i32>} : memref<8x8x8xf32, #tpu.memory_space<vmem>>, vector<1x8x8xf32>,
    %246 = vector.extract_strided_slice %33 {offsets = [8, 48], sizes = [8, 8], strides = [1, 1]} : vector<16x64xf32> to vector<8x8xf32>
    %c0_159 = arith.constant 0 : index
    %c6_160 = arith.constant 6 : index
    %c0_161 = arith.constant 0 : index
    %247 = vector.load %arg16[%c0_159, %c6_160, %c0_161] : memref<8x8x8xf32, #tpu.memory_space<vmem>>, vector<8x1x8xf32>
    %248 = vector.shape_cast %247 : vector<8x1x8xf32> to vector<8x8xf32>
    %249 = vector.shape_cast %246 : vector<8x8xf32> to vector<8x1x8xf32>
    tpu.vector_store %arg16[%c0_159, %c6_160, %c0_161], %249 {strides = array<i32>} : memref<8x8x8xf32, #tpu.memory_space<vmem>>, vector<8x1x8xf32>,
    %250 = vector.extract_strided_slice %34 {offsets = [8, 48], sizes = [8, 8], strides = [1, 1]} : vector<16x64xf32> to vector<8x8xf32>
    %c0_162 = arith.constant 0 : index
    %c6_163 = arith.constant 6 : index
    %c0_164 = arith.constant 0 : index
    %251 = vector.load %arg17[%c0_162, %c6_163, %c0_164] : memref<8x8x8xf32, #tpu.memory_space<vmem>>, vector<8x1x8xf32>
    %252 = vector.shape_cast %251 : vector<8x1x8xf32> to vector<8x8xf32>
    %253 = vector.shape_cast %250 : vector<8x8xf32> to vector<8x1x8xf32>
    tpu.vector_store %arg17[%c0_162, %c6_163, %c0_164], %253 {strides = array<i32>} : memref<8x8x8xf32, #tpu.memory_space<vmem>>, vector<8x1x8xf32>,
    %254 = vector.extract_strided_slice %32 {offsets = [8, 56], sizes = [8, 8], strides = [1, 1]} : vector<16x64xf32> to vector<8x8xf32>
    %c7_165 = arith.constant 7 : index
    %c0_166 = arith.constant 0 : index
    %c0_167 = arith.constant 0 : index
    %255 = vector.load %arg15[%c7_165, %c0_166, %c0_167] : memref<8x8x8xf32, #tpu.memory_space<vmem>>, vector<1x8x8xf32>
    %256 = vector.shape_cast %255 : vector<1x8x8xf32> to vector<8x8xf32>
    %257 = vector.shape_cast %254 : vector<8x8xf32> to vector<1x8x8xf32>
    tpu.vector_store %arg15[%c7_165, %c0_166, %c0_167], %257 {strides = array<i32>} : memref<8x8x8xf32, #tpu.memory_space<vmem>>, vector<1x8x8xf32>,
    %258 = vector.extract_strided_slice %33 {offsets = [8, 56], sizes = [8, 8], strides = [1, 1]} : vector<16x64xf32> to vector<8x8xf32>
    %c0_168 = arith.constant 0 : index
    %c7_169 = arith.constant 7 : index
    %c0_170 = arith.constant 0 : index
    %259 = vector.load %arg16[%c0_168, %c7_169, %c0_170] : memref<8x8x8xf32, #tpu.memory_space<vmem>>, vector<8x1x8xf32>
    %260 = vector.shape_cast %259 : vector<8x1x8xf32> to vector<8x8xf32>
    %261 = vector.shape_cast %258 : vector<8x8xf32> to vector<8x1x8xf32>
    tpu.vector_store %arg16[%c0_168, %c7_169, %c0_170], %261 {strides = array<i32>} : memref<8x8x8xf32, #tpu.memory_space<vmem>>, vector<8x1x8xf32>,
    %262 = vector.extract_strided_slice %34 {offsets = [8, 56], sizes = [8, 8], strides = [1, 1]} : vector<16x64xf32> to vector<8x8xf32>
    %c0_171 = arith.constant 0 : index
    %c7_172 = arith.constant 7 : index
    %c0_173 = arith.constant 0 : index
    %263 = vector.load %arg17[%c0_171, %c7_172, %c0_173] : memref<8x8x8xf32, #tpu.memory_space<vmem>>, vector<8x1x8xf32>
    %264 = vector.shape_cast %263 : vector<8x1x8xf32> to vector<8x8xf32>
    %265 = vector.shape_cast %262 : vector<8x8xf32> to vector<8x1x8xf32>
    tpu.vector_store %arg17[%c0_171, %c7_172, %c0_173], %265 {strides = array<i32>} : memref<8x8x8xf32, #tpu.memory_space<vmem>>, vector<8x1x8xf32>,
    %c0_174 = arith.constant 0 : index
    %c0_175 = arith.constant 0 : index
    %c0_176 = arith.constant 0 : index
    %266 = vector.load %arg15[%c0_174, %c0_175, %c0_176] : memref<8x8x8xf32, #tpu.memory_space<vmem>>, vector<8x8x8xf32>
    %c0_177 = arith.constant 0 : index
    %c0_178 = arith.constant 0 : index
    %c0_179 = arith.constant 0 : index
    %267 = vector.load %arg16[%c0_177, %c0_178, %c0_179] : memref<8x8x8xf32, #tpu.memory_space<vmem>>, vector<8x8x8xf32>
    %c0_180 = arith.constant 0 : index
    %c0_181 = arith.constant 0 : index
    %c0_182 = arith.constant 0 : index
    %268 = vector.load %arg17[%c0_180, %c0_181, %c0_182] : memref<8x8x8xf32, #tpu.memory_space<vmem>>, vector<8x8x8xf32>
    "tpu.trace_start"() <{level = 10 : i32, message = "isj,ihj->ish"}> : () -> ()
    %cst_183 = arith.constant dense<0.000000e+00> : vector<8x8x8xf32>
    %269 = tpu.matmul %266, %267, %cst_183 {dimension_numbers = #tpu.dot_dimension_numbers<[2], [2], [1], [1], [0, 0, 0, 1, 1, 1], [0], [0]>} : vector<8x8x8xf32>, vector<8x8x8xf32>, vector<8x8x8xf32> -> vector<8x8x8xf32>
    "tpu.trace_stop"() : () -> ()
    %cst_184 = arith.constant dense<0xFF800000> : vector<8x8xf32>
    %270 = vector.multi_reduction <maximumf>, %269, %cst_184 [2] : vector<8x8x8xf32> to vector<8x8xf32>
    %271 = vector.shape_cast %270 : vector<8x8xf32> to vector<8x8x1xf32>
    %272 = vector.broadcast %271 : vector<8x8x1xf32> to vector<8x8x8xf32>
    %273 = arith.subf %269, %272 : vector<8x8x8xf32>
    %274 = math.exp %273 : vector<8x8x8xf32>
    %cst_185 = arith.constant dense<0.000000e+00> : vector<8x8xf32>
    %275 = vector.multi_reduction <add>, %274, %cst_185 [2] : vector<8x8x8xf32> to vector<8x8xf32>
    %276 = vector.shape_cast %275 : vector<8x8xf32> to vector<8x8x1xf32>
    %277 = tpu.reciprocal %276 : vector<8x8x1xf32> -> vector<8x8x1xf32>
    %278 = vector.broadcast %277 : vector<8x8x1xf32> to vector<8x8x8xf32>
    %279 = arith.mulf %274, %278 : vector<8x8x8xf32>
    "tpu.trace_start"() <{level = 10 : i32, message = "ish,ihj->isj"}> : () -> ()
    %cst_186 = arith.constant dense<0.000000e+00> : vector<8x8x8xf32>
    %280 = tpu.matmul %279, %268, %cst_186 {dimension_numbers = #tpu.dot_dimension_numbers<[2], [1], [1], [2], [0, 0, 0, 1, 1, 2], [0], [0]>} : vector<8x8x8xf32>, vector<8x8x8xf32>, vector<8x8x8xf32> -> vector<8x8x8xf32>
    "tpu.trace_stop"() : () -> ()
    %281 = vector.extract_strided_slice %280 {offsets = [0, 0, 0], sizes = [1, 8, 8], strides = [1, 1, 1]} : vector<8x8x8xf32> to vector<1x8x8xf32>
    %282 = vector.shape_cast %281 : vector<1x8x8xf32> to vector<8x8xf32>
    %c8_187 = arith.constant 8 : index
    %c0_188 = arith.constant 0 : index
    %283 = vector.load %arg14[%c8_187, %c0_188] : memref<16x64xf32, #tpu.memory_space<vmem>>, vector<8x8xf32>
    tpu.vector_store %arg14[%c8_187, %c0_188], %282 {strides = array<i32>} : memref<16x64xf32, #tpu.memory_space<vmem>>, vector<8x8xf32>,
    %284 = vector.extract_strided_slice %280 {offsets = [1, 0, 0], sizes = [1, 8, 8], strides = [1, 1, 1]} : vector<8x8x8xf32> to vector<1x8x8xf32>
    %285 = vector.shape_cast %284 : vector<1x8x8xf32> to vector<8x8xf32>
    %c8_189 = arith.constant 8 : index
    %c8_190 = arith.constant 8 : index
    %286 = vector.load %arg14[%c8_189, %c8_190] : memref<16x64xf32, #tpu.memory_space<vmem>>, vector<8x8xf32>
    tpu.vector_store %arg14[%c8_189, %c8_190], %285 {strides = array<i32>} : memref<16x64xf32, #tpu.memory_space<vmem>>, vector<8x8xf32>,
    %287 = vector.extract_strided_slice %280 {offsets = [2, 0, 0], sizes = [1, 8, 8], strides = [1, 1, 1]} : vector<8x8x8xf32> to vector<1x8x8xf32>
    %288 = vector.shape_cast %287 : vector<1x8x8xf32> to vector<8x8xf32>
    %c8_191 = arith.constant 8 : index
    %c16_192 = arith.constant 16 : index
    %289 = vector.load %arg14[%c8_191, %c16_192] : memref<16x64xf32, #tpu.memory_space<vmem>>, vector<8x8xf32>
    tpu.vector_store %arg14[%c8_191, %c16_192], %288 {strides = array<i32>} : memref<16x64xf32, #tpu.memory_space<vmem>>, vector<8x8xf32>,
    %290 = vector.extract_strided_slice %280 {offsets = [3, 0, 0], sizes = [1, 8, 8], strides = [1, 1, 1]} : vector<8x8x8xf32> to vector<1x8x8xf32>
    %291 = vector.shape_cast %290 : vector<1x8x8xf32> to vector<8x8xf32>
    %c8_193 = arith.constant 8 : index
    %c24_194 = arith.constant 24 : index
    %292 = vector.load %arg14[%c8_193, %c24_194] : memref<16x64xf32, #tpu.memory_space<vmem>>, vector<8x8xf32>
    tpu.vector_store %arg14[%c8_193, %c24_194], %291 {strides = array<i32>} : memref<16x64xf32, #tpu.memory_space<vmem>>, vector<8x8xf32>,
    %293 = vector.extract_strided_slice %280 {offsets = [4, 0, 0], sizes = [1, 8, 8], strides = [1, 1, 1]} : vector<8x8x8xf32> to vector<1x8x8xf32>
    %294 = vector.shape_cast %293 : vector<1x8x8xf32> to vector<8x8xf32>
    %c8_195 = arith.constant 8 : index
    %c32_196 = arith.constant 32 : index
    %295 = vector.load %arg14[%c8_195, %c32_196] : memref<16x64xf32, #tpu.memory_space<vmem>>, vector<8x8xf32>
    tpu.vector_store %arg14[%c8_195, %c32_196], %294 {strides = array<i32>} : memref<16x64xf32, #tpu.memory_space<vmem>>, vector<8x8xf32>,
    %296 = vector.extract_strided_slice %280 {offsets = [5, 0, 0], sizes = [1, 8, 8], strides = [1, 1, 1]} : vector<8x8x8xf32> to vector<1x8x8xf32>
    %297 = vector.shape_cast %296 : vector<1x8x8xf32> to vector<8x8xf32>
    %c8_197 = arith.constant 8 : index
    %c40_198 = arith.constant 40 : index
    %298 = vector.load %arg14[%c8_197, %c40_198] : memref<16x64xf32, #tpu.memory_space<vmem>>, vector<8x8xf32>
    tpu.vector_store %arg14[%c8_197, %c40_198], %297 {strides = array<i32>} : memref<16x64xf32, #tpu.memory_space<vmem>>, vector<8x8xf32>,
    %299 = vector.extract_strided_slice %280 {offsets = [6, 0, 0], sizes = [1, 8, 8], strides = [1, 1, 1]} : vector<8x8x8xf32> to vector<1x8x8xf32>
    %300 = vector.shape_cast %299 : vector<1x8x8xf32> to vector<8x8xf32>
    %c8_199 = arith.constant 8 : index
    %c48_200 = arith.constant 48 : index
    %301 = vector.load %arg14[%c8_199, %c48_200] : memref<16x64xf32, #tpu.memory_space<vmem>>, vector<8x8xf32>
    tpu.vector_store %arg14[%c8_199, %c48_200], %300 {strides = array<i32>} : memref<16x64xf32, #tpu.memory_space<vmem>>, vector<8x8xf32>,
    %302 = vector.extract_strided_slice %280 {offsets = [7, 0, 0], sizes = [1, 8, 8], strides = [1, 1, 1]} : vector<8x8x8xf32> to vector<1x8x8xf32>
    %303 = vector.shape_cast %302 : vector<1x8x8xf32> to vector<8x8xf32>
    %c8_201 = arith.constant 8 : index
    %c56_202 = arith.constant 56 : index
    %304 = vector.load %arg14[%c8_201, %c56_202] : memref<16x64xf32, #tpu.memory_space<vmem>>, vector<8x8xf32>
    tpu.vector_store %arg14[%c8_201, %c56_202], %303 {strides = array<i32>} : memref<16x64xf32, #tpu.memory_space<vmem>>, vector<8x8xf32>,
    %c0_203 = arith.constant 0 : index
    %c0_204 = arith.constant 0 : index
    %305 = vector.load %arg14[%c0_203, %c0_204] : memref<16x64xf32, #tpu.memory_space<vmem>>, vector<16x64xf32>
    %c0_205 = arith.constant 0 : index
    %c0_206 = arith.constant 0 : index
    %306 = vector.load %arg5[%c0_205, %c0_206] : memref<64x64xf32, #tpu.memory_space<vmem>>, vector<64x64xf32>
    %cst_207 = arith.constant dense<0.000000e+00> : vector<16x64xf32>
    %307 = tpu.matmul %305, %306, %cst_207 {dimension_numbers = #tpu.dot_dimension_numbers<[1], [0], [0], [1], [0, 0, 1, 1], [], []>} : vector<16x64xf32>, vector<64x64xf32>, vector<16x64xf32> -> vector<16x64xf32>
    %c0_208 = arith.constant 0 : index
    %c0_209 = arith.constant 0 : index
    %308 = vector.load %arg6[%c0_208, %c0_209] : memref<1x64xf32, #tpu.memory_space<vmem>>, vector<1x64xf32>
    %309 = vector.broadcast %308 : vector<1x64xf32> to vector<16x64xf32>
    %310 = arith.addf %307, %309 : vector<16x64xf32>
    %311 = arith.addf %310, %0 : vector<16x64xf32>
    %c0_210 = arith.constant 0 : index
    %c0_211 = arith.constant 0 : index
    %312 = vector.load %arg7[%c0_210, %c0_211] : memref<1x64xf32, #tpu.memory_space<vmem>>, vector<1x64xf32>
    %c0_212 = arith.constant 0 : index
    %c0_213 = arith.constant 0 : index
    %313 = vector.load %arg8[%c0_212, %c0_213] : memref<1x64xf32, #tpu.memory_space<vmem>>, vector<1x64xf32>
    %cst_214 = arith.constant dense<0.000000e+00> : vector<16xf32>
    %314 = vector.multi_reduction <add>, %311, %cst_214 [1] : vector<16x64xf32> to vector<16xf32>
    %315 = vector.shape_cast %314 : vector<16xf32> to vector<16x1xf32>
    %cst_215 = arith.constant 6.400000e+01 : f32
    %316 = vector.broadcast %cst_215 : f32 to vector<16x1xf32>
    %317 = arith.divf %315, %316 : vector<16x1xf32>
    %318 = vector.broadcast %317 : vector<16x1xf32> to vector<16x64xf32>
    %319 = arith.subf %311, %318 : vector<16x64xf32>
    %320 = arith.mulf %319, %319 : vector<16x64xf32>
    %cst_216 = arith.constant dense<0.000000e+00> : vector<16xf32>
    %321 = vector.multi_reduction <add>, %320, %cst_216 [1] : vector<16x64xf32> to vector<16xf32>
    %322 = vector.shape_cast %321 : vector<16xf32> to vector<16x1xf32>
    %cst_217 = arith.constant 6.400000e+01 : f32
    %323 = vector.broadcast %cst_217 : f32 to vector<16x1xf32>
    %324 = arith.divf %322, %323 : vector<16x1xf32>
    %325 = vector.broadcast %317 : vector<16x1xf32> to vector<16x64xf32>
    %326 = arith.subf %311, %325 : vector<16x64xf32>
    %cst_218 = arith.constant 9.99999974E-6 : f32
    %327 = vector.broadcast %cst_218 : f32 to vector<16x1xf32>
    %328 = arith.addf %324, %327 : vector<16x1xf32>
    %329 = math.rsqrt %328 : vector<16x1xf32>
    %330 = vector.broadcast %329 : vector<16x1xf32> to vector<16x64xf32>
    %331 = arith.mulf %326, %330 : vector<16x64xf32>
    %332 = vector.broadcast %312 : vector<1x64xf32> to vector<16x64xf32>
    %333 = arith.mulf %331, %332 : vector<16x64xf32>
    %334 = vector.broadcast %313 : vector<1x64xf32> to vector<16x64xf32>
    %335 = arith.addf %333, %334 : vector<16x64xf32>
    %c0_219 = arith.constant 0 : index
    %c0_220 = arith.constant 0 : index
    %336 = vector.load %arg9[%c0_219, %c0_220] : memref<64x256xf32, #tpu.memory_space<vmem>>, vector<64x256xf32>
    %cst_221 = arith.constant dense<0.000000e+00> : vector<16x256xf32>
    %337 = tpu.matmul %335, %336, %cst_221 {dimension_numbers = #tpu.dot_dimension_numbers<[1], [0], [0], [1], [0, 0, 1, 1], [], []>} : vector<16x64xf32>, vector<64x256xf32>, vector<16x256xf32> -> vector<16x256xf32>
    %c0_222 = arith.constant 0 : index
    %c0_223 = arith.constant 0 : index
    %338 = vector.load %arg10[%c0_222, %c0_223] : memref<1x256xf32, #tpu.memory_space<vmem>>, vector<1x256xf32>
    %339 = vector.broadcast %338 : vector<1x256xf32> to vector<16x256xf32>
    %340 = arith.addf %337, %339 : vector<16x256xf32>
    %cst_224 = arith.constant 1.702000e+00 : f32
    %341 = vector.broadcast %cst_224 : f32 to vector<16x256xf32>
    %342 = arith.mulf %341, %340 : vector<16x256xf32>
    %343 = arith.negf %342 : vector<16x256xf32>
    %344 = math.exp %343 : vector<16x256xf32>
    %cst_225 = arith.constant 1.000000e+00 : f32
    %345 = vector.broadcast %cst_225 : f32 to vector<16x256xf32>
    %346 = arith.addf %345, %344 : vector<16x256xf32>
    %347 = arith.divf %345, %346 : vector<16x256xf32>
    %348 = arith.mulf %340, %347 : vector<16x256xf32>
    %c0_226 = arith.constant 0 : index
    %c0_227 = arith.constant 0 : index
    %349 = vector.load %arg11[%c0_226, %c0_227] : memref<256x64xf32, #tpu.memory_space<vmem>>, vector<256x64xf32>
    %cst_228 = arith.constant dense<0.000000e+00> : vector<16x64xf32>
    %350 = tpu.matmul %348, %349, %cst_228 {dimension_numbers = #tpu.dot_dimension_numbers<[1], [0], [0], [1], [0, 0, 1, 1], [], []>} : vector<16x256xf32>, vector<256x64xf32>, vector<16x64xf32> -> vector<16x64xf32>
    %c0_229 = arith.constant 0 : index
    %c0_230 = arith.constant 0 : index
    %351 = vector.load %arg12[%c0_229, %c0_230] : memref<1x64xf32, #tpu.memory_space<vmem>>, vector<1x64xf32>
    %352 = vector.broadcast %351 : vector<1x64xf32> to vector<16x64xf32>
    %353 = arith.addf %350, %352 : vector<16x64xf32>
    %354 = arith.addf %353, %311 : vector<16x64xf32>
    %c0_231 = arith.constant 0 : index
    %c0_232 = arith.constant 0 : index
    %355 = vector.load %arg13[%c0_231, %c0_232] : memref<16x64xf32, #tpu.memory_space<vmem>>, vector<16x64xf32>
    tpu.vector_store %arg13[%c0_231, %c0_232], %354 {strides = array<i32>} : memref<16x64xf32, #tpu.memory_space<vmem>>, vector<16x64xf32>,
    return
  }
}

</mosaic_0001>

<llo_original>
// kernel: a_layer_forward.1
$region0: #{a_layer_forward.1}
  #allocation0 [shape = 'u32[]', space=smem, size = 0x4, offset = 0x4, fixed_abs, tag = 'smem constant byte address 0x4 - core index']
  #allocation1 [shape = 'u32[144,128]{1,0:T(1,128)}', space=vmem, size = 0x12000, scoped, tag = 'internal scratch']
  #allocation2 [shape = 'f32[16,64]{1,0:T(8,128)}', space=vmem, size = 0x2000, scoped, tag = 'scratch operand']
  #allocation3 [shape = 'f32[8,8,8]{2,1,0:T(8,128)}', space=vmem, size = 0x8000, scoped, tag = 'scratch operand']
  #allocation4 [shape = 'f32[8,8,8]{2,1,0:T(8,128)}', space=vmem, size = 0x8000, scoped, tag = 'scratch operand']
  #allocation5 [shape = 'f32[8,8,8]{2,1,0:T(8,128)}', space=vmem, size = 0x8000, scoped, tag = 'scratch operand']
  %s0 = inlined_call_operand.vmem [shape: f32[16,64], index: 0, kind: input, shape index: {}]
  %s1 = inlined_call_operand.vmem [shape: f32[1,64], index: 1, kind: input, shape index: {}]
  %s2 = inlined_call_operand.vmem [shape: f32[1,64], index: 2, kind: input, shape index: {}]
  %s3 = inlined_call_operand.vmem [shape: f32[64,192], index: 3, kind: input, shape index: {}]
  %s4 = inlined_call_operand.vmem [shape: f32[1,192], index: 4, kind: input, shape index: {}]
  %s5 = inlined_call_operand.vmem [shape: f32[64,64], index: 5, kind: input, shape index: {}]
  %s6 = inlined_call_operand.vmem [shape: f32[1,64], index: 6, kind: input, shape index: {}]
  %s7 = inlined_call_operand.vmem [shape: f32[1,64], index: 7, kind: input, shape index: {}]
  %s8 = inlined_call_operand.vmem [shape: f32[1,64], index: 8, kind: input, shape index: {}]
  %s9 = inlined_call_operand.vmem [shape: f32[64,256], index: 9, kind: input, shape index: {}]
  %s10 = inlined_call_operand.vmem [shape: f32[1,256], index: 10, kind: input, shape index: {}]
  %s11 = inlined_call_operand.vmem [shape: f32[256,64], index: 11, kind: input, shape index: {}]
  %s12 = inlined_call_operand.vmem [shape: f32[1,64], index: 12, kind: input, shape index: {}]
  %s13 = inlined_call_operand.hbm [shape: f32[16,64], index: 13, kind: output, shape index: {}]
  %s14 = sld [smem:[#allocation0]]
  $region62: #{a_layer_forward.1} parent=0
    _
  %s16 = ssub.s32 1, %s14
  %s17 = scalar_select 0, %s16, %s14
  $region1: #{a_layer_forward.1} parent=0
    #allocation6 [shape = 'u8[8192]{0}', space=vmem, size = 0x2000, scoped, tag = 'output window, operand 0, single buffered']
    #allocation7 [shape = 's32[1]{0}', space=sflag, size = 0x4, scoped, tag = 'scoped memory for a_layer_forward.1']
    %18 = vsyncpa [#allocation7], 0
    // Predicated region
    $region2: #{a_layer_forward.1} parent=1 // pred_check
      _
    $region3: #{a_layer_forward.1} parent=1 // pred_check_branch
      %20 = sbr.rel (0) target = $region5
    $region4: #{a_layer_forward.1} parent=1 // pred_region
      _
    $region5: #{a_layer_forward.1} parent=1 // pred_fallthru
      _
    // Predicated region
    $region6: #{a_layer_forward.1} parent=1 // pred_check
      _
    $region7: #{a_layer_forward.1} parent=1 // pred_check_branch
      %22 = sbr.rel (0) target = $region9
    $region8: #{a_layer_forward.1} parent=1 // pred_region
      _
    $region9: #{a_layer_forward.1} parent=1 // pred_fallthru
      _
    // Predicated region
    $region10: #{a_layer_forward.1} parent=1 // pred_check
      _
    $region11: #{a_layer_forward.1} parent=1 // pred_check_branch
      %24 = sbr.rel (0) target = $region13
    $region12: #{a_layer_forward.1} parent=1 // pred_region
      _
    $region13: #{a_layer_forward.1} parent=1 // pred_fallthru
      _
    // Predicated region
    $region14: #{a_layer_forward.1} parent=1 // pred_check
      _
    $region15: #{a_layer_forward.1} parent=1 // pred_check_branch
      %26 = sbr.rel (0) target = $region17
    $region16: #{a_layer_forward.1} parent=1 // pred_region
      _
    $region17: #{a_layer_forward.1} parent=1 // pred_fallthru
      _
    // Predicated region
    $region18: #{a_layer_forward.1} parent=1 // pred_check
      _
    $region19: #{a_layer_forward.1} parent=1 // pred_check_branch
      %28 = sbr.rel (0) target = $region21
    $region20: #{a_layer_forward.1} parent=1 // pred_region
      _
    $region21: #{a_layer_forward.1} parent=1 // pred_fallthru
      _
    // Predicated region
    $region22: #{a_layer_forward.1} parent=1 // pred_check
      _
    $region23: #{a_layer_forward.1} parent=1 // pred_check_branch
      %30 = sbr.rel (0) target = $region25
    $region24: #{a_layer_forward.1} parent=1 // pred_region
      _
    $region25: #{a_layer_forward.1} parent=1 // pred_fallthru
      _
    // Predicated region
    $region26: #{a_layer_forward.1} parent=1 // pred_check
      _
    $region27: #{a_layer_forward.1} parent=1 // pred_check_branch
      %32 = sbr.rel (0) target = $region29
    $region28: #{a_layer_forward.1} parent=1 // pred_region
      _
    $region29: #{a_layer_forward.1} parent=1 // pred_fallthru
      _
    // Predicated region
    $region30: #{a_layer_forward.1} parent=1 // pred_check
      _
    $region31: #{a_layer_forward.1} parent=1 // pred_check_branch
      %34 = sbr.rel (0) target = $region33
    $region32: #{a_layer_forward.1} parent=1 // pred_region
      _
    $region33: #{a_layer_forward.1} parent=1 // pred_fallthru
      _
    // Predicated region
    $region34: #{a_layer_forward.1} parent=1 // pred_check
      _
    $region35: #{a_layer_forward.1} parent=1 // pred_check_branch
      %36 = sbr.rel (0) target = $region37
    $region36: #{a_layer_forward.1} parent=1 // pred_region
      _
    $region37: #{a_layer_forward.1} parent=1 // pred_fallthru
      _
    // Predicated region
    $region38: #{a_layer_forward.1} parent=1 // pred_check
      _
    $region39: #{a_layer_forward.1} parent=1 // pred_check_branch
      %38 = sbr.rel (0) target = $region41
    $region40: #{a_layer_forward.1} parent=1 // pred_region
      _
    $region41: #{a_layer_forward.1} parent=1 // pred_fallthru
      _
    // Predicated region
    $region42: #{a_layer_forward.1} parent=1 // pred_check
      _
    $region43: #{a_layer_forward.1} parent=1 // pred_check_branch
      %40 = sbr.rel (0) target = $region45
    $region44: #{a_layer_forward.1} parent=1 // pred_region
      _
    $region45: #{a_layer_forward.1} parent=1 // pred_fallthru
      _
    // Predicated region
    $region46: #{a_layer_forward.1} parent=1 // pred_check
      _
    $region47: #{a_layer_forward.1} parent=1 // pred_check_branch
      %42 = sbr.rel (0) target = $region49
    $region48: #{a_layer_forward.1} parent=1 // pred_region
      _
    $region49: #{a_layer_forward.1} parent=1 // pred_fallthru
      _
    // Predicated region
    $region50: #{a_layer_forward.1} parent=1 // pred_check
      _
    $region51: #{a_layer_forward.1} parent=1 // pred_check_branch
      %44 = sbr.rel (0) target = $region53
    $region52: #{a_layer_forward.1} parent=1 // pred_region
      _
    $region53: #{a_layer_forward.1} parent=1 // pred_fallthru
      _
    %v45 = vld [vmem:[%s0] sm:$0xff]
    %v46 = vld [vmem:[%s0 + $0x8] sm:$0xff]
    %v47 = vld [vmem:[%s1] sm:$0x1]
    %v48 = vld [vmem:[%s2] sm:$0x1]
    %vm49 = vcmask 523264
    %v50 = vsel %vm49, %v45, 0.0
    %51 = vadd.xlane.f32.xlu0 %v50
    %v52 = vpop.xlane.xlu0 %51
    %v53 = vsel %vm49, %v46, 0.0
    %54 = vadd.xlane.f32.xlu0 %v53
    %v55 = vpop.xlane.xlu0 %54
    %v56 = vrcp.pop 64.0
    %v57 = vmul.f32 %v52, %v56
    %v58 = vmul.f32 %v55, %v56
    %v59 = vsub.f32 %v45, %v57
    %v60 = vsub.f32 %v46, %v58
    %v61 = vmul.f32 %v59, %v59
    %v62 = vmul.f32 %v60, %v60
    %v63 = vsel %vm49, %v61, 0.0
    %64 = vadd.xlane.f32.xlu0 %v63
    %v65 = vpop.xlane.xlu0 %64
    %v66 = vsel %vm49, %v62, 0.0
    %67 = vadd.xlane.f32.xlu0 %v66
    %v68 = vpop.xlane.xlu0 %67
    %v69 = vmul.f32 %v65, %v56
    %v70 = vmul.f32 %v68, %v56
    %v71 = vadd.f32 %v69, 1e-05
    %v72 = vadd.f32 %v70, 1e-05
    %v73 = vrsqrt.pop %v71
    %v74 = vrsqrt.pop %v72
    %v75 = vmul.f32 %v59, %v73
    %v76 = vmul.f32 %v60, %v74
    %v78 = vlaneseq
    %v79 = vshrl.u32 %v78, 7
    %v80 = vsub.s32 0, %v79
    %v81 = vrot.slane %v47, %v80
    %v83 = vmul.f32 %v75, %v81
    %v84 = vmul.f32 %v76, %v81
    %v86 = vlaneseq
    %v87 = vshrl.u32 %v86, 7
    %v88 = vsub.s32 0, %v87
    %v89 = vrot.slane %v48, %v88
    %v91 = vadd.f32 %v83, %v89
    %v92 = vadd.f32 %v84, %v89
    %v93 = vld [vmem:[%s3] sm:$0xff]
    %v94 = vld [vmem:[%s3 + $0x8] sm:$0xff]
    %v95 = vld [vmem:[%s3 + $0x10] sm:$0xff]
    %v96 = vld [vmem:[%s3 + $0x18] sm:$0xff]
    %v97 = vld [vmem:[%s3 + $0x20] sm:$0xff]
    %v98 = vld [vmem:[%s3 + $0x28] sm:$0xff]
    %v99 = vld [vmem:[%s3 + $0x30] sm:$0xff]
    %v100 = vld [vmem:[%s3 + $0x38] sm:$0xff]
    %v101 = vld [vmem:[%s3 + $0x40] sm:$0xff]
    %v102 = vld [vmem:[%s3 + $0x48] sm:$0xff]
    %v103 = vld [vmem:[%s3 + $0x50] sm:$0xff]
    %v104 = vld [vmem:[%s3 + $0x58] sm:$0xff]
    %v105 = vld [vmem:[%s3 + $0x60] sm:$0xff]
    %v106 = vld [vmem:[%s3 + $0x68] sm:$0xff]
    %v107 = vld [vmem:[%s3 + $0x70] sm:$0xff]
    %v108 = vld [vmem:[%s3 + $0x78] sm:$0xff]
    %v109 = vld [vmem:[%s4] sm:$0x3]
    %v111 = vlaneseq
    %v112 = vshrl.u32 %v111, 7
    %v113 = vsub.s32 0, %v112
    %v114 = vrot.slane %v109, %v113
    %v115 = vlaneseq
    %v116 = vshrl.u32 %v115, 7
    %v117 = vsub.s32 1, %v116
    %v118 = vrot.slane %v109, %v117
    %v122 = vsel %vm49, %v91, 0
    %v125 = vsel %vm49, %v92, 0
    %127 = vmatprep.subr.mxu0 %v94
    %128 = vmatpush1.msra.mxu0 %v93
    %129 = vmatprep.subr.mxu0 %v96
    %130 = vmatpush1.msra.mxu0 %v95
    %131 = vmatprep.subr.mxu0 %v98
    %132 = vmatpush1.msra.mxu0 %v97
    %133 = vmatprep.subr.mxu0 %v100
    %134 = vmatpush1.msra.mxu0 %v99
    %135 = vmatprep.subr.mxu0 %v102
    %136 = vmatpush1.msra.mxu0 %v101
    %137 = vmatprep.subr.mxu0 %v104
    %138 = vmatpush1.msra.mxu0 %v103
    %139 = vmatprep.subr.mxu0 %v106
    %140 = vmatpush1.msra.mxu0 %v105
    %141 = vmatprep.subr.mxu0 %v108
    %142 = vmatpush1.msra.mxu0 %v107
    %143 = vmatprep.subr.mxu0 0.0
    %144 = vmatpush1.msra.mxu0 0.0
    %145 = vmatprep.subr.mxu0 0.0
    %146 = vmatpush1.msra.mxu0 0.0
    %147 = vmatprep.subr.mxu0 0.0
    %148 = vmatpush1.msra.mxu0 0.0
    %149 = vmatprep.subr.mxu0 0.0
    %150 = vmatpush1.msra.mxu0 0.0
    %151 = vmatprep.subr.mxu0 0.0
    %152 = vmatpush1.msra.mxu0 0.0
    %153 = vmatprep.subr.mxu0 0.0
    %154 = vmatpush1.msra.mxu0 0.0
    %155 = vmatprep.subr.mxu0 0.0
    %156 = vmatpush1.msra.mxu0 0.0
    %157 = vmatprep.subr.mxu0 0.0
    %158 = vmatpush1.msra.mxu0 0.0
    %159 = vmatprep.subr.mxu0 0.0
    %160 = vmatpush1.msra.mxu0 0.0
    %161 = vmatprep.subr.mxu0 0.0
    %162 = vmatpush1.msra.mxu0 0.0
    %163 = vmatprep.subr.mxu0 0.0
    %164 = vmatpush1.msra.mxu0 0.0
    %165 = vmatprep.subr.mxu0 0.0
    %166 = vmatpush1.msra.mxu0 0.0
    %167 = vmatprep.subr.mxu0 0.0
    %168 = vmatpush1.msra.mxu0 0.0
    %169 = vmatprep.subr.mxu0 0.0
    %170 = vmatpush1.msra.mxu0 0.0
    %171 = vmatprep.subr.mxu0 0.0
    %172 = vmatpush1.msra.mxu0 0.0
    %173 = vmatprep.subr.mxu0 0.0
    %174 = vmatpush1.msra.mxu0 0.0
    %175 = vmatprep.subr.mxu0 0.0
    %176 = vmatpush1.msra.mxu0 0.0
    %177 = vmatprep.subr.mxu0 0.0
    %178 = vmatpush1.msra.mxu0 0.0
    %179 = vmatprep.subr.mxu0 0.0
    %180 = vmatpush1.msra.mxu0 0.0
    %181 = vmatprep.subr.mxu0 0.0
    %182 = vmatpush1.msra.mxu0 0.0
    %183 = vmatprep.subr.mxu0 0.0
    %184 = vmatpush1.msra.mxu0 0.0
    %185 = vmatprep.subr.mxu0 0.0
    %186 = vmatpush1.msra.mxu0 0.0
    %187 = vmatprep.subr.mxu0 0.0
    %188 = vmatpush1.msra.mxu0 0.0
    %189 = vmatprep.subr.mxu0 0.0
    %190 = vmatpush1.msra.mxu0 0.0
    %191 = vmatprep.mubr.f32.mxu0 0.0
    %192 = vmatmul.mubr.f32.gmra.mrb[0].mxu0 %v122
    %v193 = vpop.f32.mrb[0].mxu0
    %v194 = vadd.f32 %v114, %v193
    %v195 = vpop.f32.mrb[0].mxu0
    %v196 = vadd.f32 %v118, %v195
    %197 = vmatprep.mubr.f32.mxu0 0.0
    %198 = vmatmul.mubr.f32.gmra.mrb[0].mxu0 %v125
    %v199 = vpop.f32.mrb[0].mxu0
    %v200 = vadd.f32 %v114, %v199
    %v201 = vpop.f32.mrb[0].mxu0
    %v202 = vadd.f32 %v118, %v201
    %203 = vdwg.mxu0
    %v204 = vmul.f32 %v194, 0.35355338
    %v205 = vmul.f32 %v200, 0.35355338
    %vm206 = vcmask 64512
    %207 = vst.msk [vmem:[#allocation3] sm:$0xff] %vm206, %v204
    %v209 = vcombine.high %v194, %v194
    %v211 = vunpack.c.l.s4 1966171168
    %v212 = vunpack.c.0.s8 %v211
    %v213 = vlaneseq
    %v214 = vshrl.u32 %v213, 7
    %v215 = vsub.s32 %v212, %v214
    %v216 = vrot.slane %v194, %v215
    %v218 = vunpack.c.l.s4 1966171168
    %v219 = vunpack.c.0.s8 %v218
    %v220 = vlaneseq
    %v221 = vshrl.u32 %v220, 7
    %v222 = vsub.s32 %v219, %v221
    %v223 = vrot.slane %v209, %v222
    %v224 = vcombine.high %v216, %v216
    %v225 = vcombine.high %v223, %v223
    %v227 = vunpack.c.l.s4 1966171168
    %v228 = vunpack.c.0.s8 %v227
    %v229 = vlaneseq
    %v230 = vshrl.u32 %v229, 7
    %v231 = vsub.s32 %v228, %v230
    %v232 = vrot.slane %v216, %v231
    %v234 = vunpack.c.l.s4 1966171168
    %v235 = vunpack.c.0.s8 %v234
    %v236 = vlaneseq
    %v237 = vshrl.u32 %v236, 7
    %v238 = vsub.s32 %v235, %v237
    %v239 = vrot.slane %v223, %v238
    %v241 = vunpack.c.l.s4 1966171168
    %v242 = vunpack.c.0.s8 %v241
    %v243 = vlaneseq
    %v244 = vshrl.u32 %v243, 7
    %v245 = vsub.s32 %v242, %v244
    %v246 = vrot.slane %v224, %v245
    %v248 = vunpack.c.l.s4 1966171168
    %v249 = vunpack.c.0.s8 %v248
    %v250 = vlaneseq
    %v251 = vshrl.u32 %v250, 7
    %v252 = vsub.s32 %v249, %v251
    %v253 = vrot.slane %v225, %v252
    %v254 = vcombine.high %v232, %v232
    %v255 = vcombine.high %v239, %v239
    %v256 = vcombine.high %v246, %v246
    %v257 = vcombine.high %v253, %v253
    %v258 = vlaneseq
    %v259 = vshrl.u32 %v258, 7
    %v260 = vsub.s32 0, %v259
    %v261 = vrot.slane %v232, %v260
    %v262 = vlaneseq
    %v263 = vshrl.u32 %v262, 7
    %v264 = vsub.s32 0, %v263
    %v265 = vrot.slane %v246, %v264
    %v266 = vlaneseq
    %v267 = vshrl.u32 %v266, 7
    %v268 = vsub.s32 0, %v267
    %v269 = vrot.slane %v254, %v268
    %v270 = vlaneseq
    %v271 = vshrl.u32 %v270, 7
    %v272 = vsub.s32 0, %v271
    %v273 = vrot.slane %v256, %v272
    %v274 = vlaneseq
    %v275 = vshrl.u32 %v274, 7
    %v276 = vsub.s32 0, %v275
    %v277 = vrot.slane %v239, %v276
    %v278 = vlaneseq
    %v279 = vshrl.u32 %v278, 7
    %v280 = vsub.s32 0, %v279
    %v281 = vrot.slane %v253, %v280
    %v282 = vlaneseq
    %v283 = vshrl.u32 %v282, 7
    %v284 = vsub.s32 0, %v283
    %v285 = vrot.slane %v255, %v284
    %v286 = vlaneseq
    %v287 = vshrl.u32 %v286, 7
    %v288 = vsub.s32 0, %v287
    %v289 = vrot.slane %v257, %v288
    %290 = vrot.lane.b32.xlu0 %v261, 64
    %v291 = vpop.permute.xlu0 %290
    %292 = vrot.lane.b32.xlu0 %v265, 64
    %v293 = vpop.permute.xlu0 %292
    %294 = vrot.lane.b32.xlu0 %v269, 64
    %v295 = vpop.permute.xlu0 %294
    %296 = vrot.lane.b32.xlu0 %v273, 64
    %v297 = vpop.permute.xlu0 %296
    %298 = vrot.lane.b32.xlu0 %v277, 64
    %v299 = vpop.permute.xlu0 %298
    %300 = vrot.lane.b32.xlu0 %v281, 64
    %v301 = vpop.permute.xlu0 %300
    %302 = vrot.lane.b32.xlu0 %v285, 64
    %v303 = vpop.permute.xlu0 %302
    %304 = vrot.lane.b32.xlu0 %v289, 64
    %v305 = vpop.permute.xlu0 %304
    %vm314 = vcmask 57344
    %315 = vst.msk [vmem:[#allocation4] sm:$0x1] %vm314, %v291
    %316 = vst.msk [vmem:[#allocation4 + $0x8] sm:$0x1] %vm314, %v293
    %317 = vst.msk [vmem:[#allocation4 + $0x10] sm:$0x1] %vm314, %v295
    %318 = vst.msk [vmem:[#allocation4 + $0x18] sm:$0x1] %vm314, %v297
    %319 = vst.msk [vmem:[#allocation4 + $0x20] sm:$0x1] %vm314, %v299
    %320 = vst.msk [vmem:[#allocation4 + $0x28] sm:$0x1] %vm314, %v301
    %321 = vst.msk [vmem:[#allocation4 + $0x30] sm:$0x1] %vm314, %v303
    %322 = vst.msk [vmem:[#allocation4 + $0x38] sm:$0x1] %vm314, %v305
    %v324 = vcombine.high %v196, %v196
    %v326 = vunpack.c.l.s4 1966171168
    %v327 = vunpack.c.0.s8 %v326
    %v328 = vlaneseq
    %v329 = vshrl.u32 %v328, 7
    %v330 = vsub.s32 %v327, %v329
    %v331 = vrot.slane %v196, %v330
    %v333 = vunpack.c.l.s4 1966171168
    %v334 = vunpack.c.0.s8 %v333
    %v335 = vlaneseq
    %v336 = vshrl.u32 %v335, 7
    %v337 = vsub.s32 %v334, %v336
    %v338 = vrot.slane %v324, %v337
    %v339 = vcombine.high %v331, %v331
    %v340 = vcombine.high %v338, %v338
    %v342 = vunpack.c.l.s4 1966171168
    %v343 = vunpack.c.0.s8 %v342
    %v344 = vlaneseq
    %v345 = vshrl.u32 %v344, 7
    %v346 = vsub.s32 %v343, %v345
    %v347 = vrot.slane %v331, %v346
    %v349 = vunpack.c.l.s4 1966171168
    %v350 = vunpack.c.0.s8 %v349
    %v351 = vlaneseq
    %v352 = vshrl.u32 %v351, 7
    %v353 = vsub.s32 %v350, %v352
    %v354 = vrot.slane %v338, %v353
    %v356 = vunpack.c.l.s4 1966171168
    %v357 = vunpack.c.0.s8 %v356
    %v358 = vlaneseq
    %v359 = vshrl.u32 %v358, 7
    %v360 = vsub.s32 %v357, %v359
    %v361 = vrot.slane %v339, %v360
    %v363 = vunpack.c.l.s4 1966171168
    %v364 = vunpack.c.0.s8 %v363
    %v365 = vlaneseq
    %v366 = vshrl.u32 %v365, 7
    %v367 = vsub.s32 %v364, %v366
    %v368 = vrot.slane %v340, %v367
    %v369 = vcombine.high %v347, %v347
    %v370 = vcombine.high %v354, %v354
    %v371 = vcombine.high %v361, %v361
    %v372 = vcombine.high %v368, %v368
    %381 = vst.msk [vmem:[#allocation5] sm:$0x1] %vm314, %v347
    %382 = vst.msk [vmem:[#allocation5 + $0x8] sm:$0x1] %vm314, %v361
    %383 = vst.msk [vmem:[#allocation5 + $0x10] sm:$0x1] %vm314, %v369
    %384 = vst.msk [vmem:[#allocation5 + $0x18] sm:$0x1] %vm314, %v371
    %385 = vst.msk [vmem:[#allocation5 + $0x20] sm:$0x1] %vm314, %v354
    %386 = vst.msk [vmem:[#allocation5 + $0x28] sm:$0x1] %vm314, %v368
    %387 = vst.msk [vmem:[#allocation5 + $0x30] sm:$0x1] %vm314, %v370
    %388 = vst.msk [vmem:[#allocation5 + $0x38] sm:$0x1] %vm314, %v372
    %390 = vrot.lane.b32.xlu0 %v204, 120
    %v391 = vpop.permute.xlu0 %390
    %s393 = scalar_lea.vmem [#allocation3], 8
    %394 = vst.msk [vmem:[%s393] sm:$0xff] %vm206, %v391
    %395 = vrot.lane.b32.xlu0 %v261, 56
    %v396 = vpop.permute.xlu0 %395
    %397 = vrot.lane.b32.xlu0 %v265, 56
    %v398 = vpop.permute.xlu0 %397
    %399 = vrot.lane.b32.xlu0 %v269, 56
    %v400 = vpop.permute.xlu0 %399
    %401 = vrot.lane.b32.xlu0 %v273, 56
    %v402 = vpop.permute.xlu0 %401
    %403 = vrot.lane.b32.xlu0 %v277, 56
    %v404 = vpop.permute.xlu0 %403
    %405 = vrot.lane.b32.xlu0 %v281, 56
    %v406 = vpop.permute.xlu0 %405
    %407 = vrot.lane.b32.xlu0 %v285, 56
    %v408 = vpop.permute.xlu0 %407
    %409 = vrot.lane.b32.xlu0 %v289, 56
    %v410 = vpop.permute.xlu0 %409
    %419 = vst.msk [vmem:[#allocation4 + $0x1] sm:$0x1] %vm314, %v396
    %420 = vst.msk [vmem:[#allocation4 + $0x9] sm:$0x1] %vm314, %v398
    %421 = vst.msk [vmem:[#allocation4 + $0x11] sm:$0x1] %vm314, %v400
    %422 = vst.msk [vmem:[#allocation4 + $0x19] sm:$0x1] %vm314, %v402
    %423 = vst.msk [vmem:[#allocation4 + $0x21] sm:$0x1] %vm314, %v404
    %424 = vst.msk [vmem:[#allocation4 + $0x29] sm:$0x1] %vm314, %v406
    %425 = vst.msk [vmem:[#allocation4 + $0x31] sm:$0x1] %vm314, %v408
    %426 = vst.msk [vmem:[#allocation4 + $0x39] sm:$0x1] %vm314, %v410
    %v427 = vlaneseq
    %v428 = vshrl.u32 %v427, 7
    %v429 = vsub.s32 0, %v428
    %v430 = vrot.slane %v347, %v429
    %v431 = vlaneseq
    %v432 = vshrl.u32 %v431, 7
    %v433 = vsub.s32 0, %v432
    %v434 = vrot.slane %v361, %v433
    %v435 = vlaneseq
    %v436 = vshrl.u32 %v435, 7
    %v437 = vsub.s32 0, %v436
    %v438 = vrot.slane %v369, %v437
    %v439 = vlaneseq
    %v440 = vshrl.u32 %v439, 7
    %v441 = vsub.s32 0, %v440
    %v442 = vrot.slane %v371, %v441
    %v443 = vlaneseq
    %v444 = vshrl.u32 %v443, 7
    %v445 = vsub.s32 0, %v444
    %v446 = vrot.slane %v354, %v445
    %v447 = vlaneseq
    %v448 = vshrl.u32 %v447, 7
    %v449 = vsub.s32 0, %v448
    %v450 = vrot.slane %v368, %v449
    %v451 = vlaneseq
    %v452 = vshrl.u32 %v451, 7
    %v453 = vsub.s32 0, %v452
    %v454 = vrot.slane %v370, %v453
    %v455 = vlaneseq
    %v456 = vshrl.u32 %v455, 7
    %v457 = vsub.s32 0, %v456
    %v458 = vrot.slane %v372, %v457
    %459 = vrot.lane.b32.xlu0 %v430, 120
    %v460 = vpop.permute.xlu0 %459
    %461 = vrot.lane.b32.xlu0 %v434, 120
    %v462 = vpop.permute.xlu0 %461
    %463 = vrot.lane.b32.xlu0 %v438, 120
    %v464 = vpop.permute.xlu0 %463
    %465 = vrot.lane.b32.xlu0 %v442, 120
    %v466 = vpop.permute.xlu0 %465
    %467 = vrot.lane.b32.xlu0 %v446, 120
    %v468 = vpop.permute.xlu0 %467
    %469 = vrot.lane.b32.xlu0 %v450, 120
    %v470 = vpop.permute.xlu0 %469
    %471 = vrot.lane.b32.xlu0 %v454, 120
    %v472 = vpop.permute.xlu0 %471
    %473 = vrot.lane.b32.xlu0 %v458, 120
    %v474 = vpop.permute.xlu0 %473
    %483 = vst.msk [vmem:[#allocation5 + $0x1] sm:$0x1] %vm314, %v460
    %484 = vst.msk [vmem:[#allocation5 + $0x9] sm:$0x1] %vm314, %v462
    %485 = vst.msk [vmem:[#allocation5 + $0x11] sm:$0x1] %vm314, %v464
    %486 = vst.msk [vmem:[#allocation5 + $0x19] sm:$0x1] %vm314, %v466
    %487 = vst.msk [vmem:[#allocation5 + $0x21] sm:$0x1] %vm314, %v468
    %488 = vst.msk [vmem:[#allocation5 + $0x29] sm:$0x1] %vm314, %v470
    %489 = vst.msk [vmem:[#allocation5 + $0x31] sm:$0x1] %vm314, %v472
    %490 = vst.msk [vmem:[#allocation5 + $0x39] sm:$0x1] %vm314, %v474
    %491 = vrot.lane.b32.xlu0 %v204, 112
    %v492 = vpop.permute.xlu0 %491
    %s494 = scalar_lea.vmem [#allocation3], 16
    %495 = vst.msk [vmem:[%s494] sm:$0xff] %vm206, %v492
    %496 = vrot.lane.b32.xlu0 %v261, 48
    %v497 = vpop.permute.xlu0 %496
    %498 = vrot.lane.b32.xlu0 %v265, 48
    %v499 = vpop.permute.xlu0 %498
    %500 = vrot.lane.b32.xlu0 %v269, 48
    %v501 = vpop.permute.xlu0 %500
    %502 = vrot.lane.b32.xlu0 %v273, 48
    %v503 = vpop.permute.xlu0 %502
    %504 = vrot.lane.b32.xlu0 %v277, 48
    %v505 = vpop.permute.xlu0 %504
    %506 = vrot.lane.b32.xlu0 %v281, 48
    %v507 = vpop.permute.xlu0 %506
    %508 = vrot.lane.b32.xlu0 %v285, 48
    %v509 = vpop.permute.xlu0 %508
    %510 = vrot.lane.b32.xlu0 %v289, 48
    %v511 = vpop.permute.xlu0 %510
    %520 = vst.msk [vmem:[#allocation4 + $0x2] sm:$0x1] %vm314, %v497
    %521 = vst.msk [vmem:[#allocation4 + $0xa] sm:$0x1] %vm314, %v499
    %522 = vst.msk [vmem:[#allocation4 + $0x12] sm:$0x1] %vm314, %v501
    %523 = vst.msk [vmem:[#allocation4 + $0x1a] sm:$0x1] %vm314, %v503
    %524 = vst.msk [vmem:[#allocation4 + $0x22] sm:$0x1] %vm314, %v505
    %525 = vst.msk [vmem:[#allocation4 + $0x2a] sm:$0x1] %vm314, %v507
    %526 = vst.msk [vmem:[#allocation4 + $0x32] sm:$0x1] %vm314, %v509
    %527 = vst.msk [vmem:[#allocation4 + $0x3a] sm:$0x1] %vm314, %v511
    %528 = vrot.lane.b32.xlu0 %v430, 112
    %v529 = vpop.permute.xlu0 %528
    %530 = vrot.lane.b32.xlu0 %v434, 112
    %v531 = vpop.permute.xlu0 %530
    %532 = vrot.lane.b32.xlu0 %v438, 112
    %v533 = vpop.permute.xlu0 %532
    %534 = vrot.lane.b32.xlu0 %v442, 112
    %v535 = vpop.permute.xlu0 %534
    %536 = vrot.lane.b32.xlu0 %v446, 112
    %v537 = vpop.permute.xlu0 %536
    %538 = vrot.lane.b32.xlu0 %v450, 112
    %v539 = vpop.permute.xlu0 %538
    %540 = vrot.lane.b32.xlu0 %v454, 112
    %v541 = vpop.permute.xlu0 %540
    %542 = vrot.lane.b32.xlu0 %v458, 112
    %v543 = vpop.permute.xlu0 %542
    %552 = vst.msk [vmem:[#allocation5 + $0x2] sm:$0x1] %vm314, %v529
    %553 = vst.msk [vmem:[#allocation5 + $0xa] sm:$0x1] %vm314, %v531
    %554 = vst.msk [vmem:[#allocation5 + $0x12] sm:$0x1] %vm314, %v533
    %555 = vst.msk [vmem:[#allocation5 + $0x1a] sm:$0x1] %vm314, %v535
    %556 = vst.msk [vmem:[#allocation5 + $0x22] sm:$0x1] %vm314, %v537
    %557 = vst.msk [vmem:[#allocation5 + $0x2a] sm:$0x1] %vm314, %v539
    %558 = vst.msk [vmem:[#allocation5 + $0x32] sm:$0x1] %vm314, %v541
    %559 = vst.msk [vmem:[#allocation5 + $0x3a] sm:$0x1] %vm314, %v543
    %560 = vrot.lane.b32.xlu0 %v204, 104
    %v561 = vpop.permute.xlu0 %560
    %s563 = scalar_lea.vmem [#allocation3], 24
    %564 = vst.msk [vmem:[%s563] sm:$0xff] %vm206, %v561
    %565 = vrot.lane.b32.xlu0 %v261, 40
    %v566 = vpop.permute.xlu0 %565
    %567 = vrot.lane.b32.xlu0 %v265, 40
    %v568 = vpop.permute.xlu0 %567
    %569 = vrot.lane.b32.xlu0 %v269, 40
    %v570 = vpop.permute.xlu0 %569
    %571 = vrot.lane.b32.xlu0 %v273, 40
    %v572 = vpop.permute.xlu0 %571
    %573 = vrot.lane.b32.xlu0 %v277, 40
    %v574 = vpop.permute.xlu0 %573
    %575 = vrot.lane.b32.xlu0 %v281, 40
    %v576 = vpop.permute.xlu0 %575
    %577 = vrot.lane.b32.xlu0 %v285, 40
    %v578 = vpop.permute.xlu0 %577
    %579 = vrot.lane.b32.xlu0 %v289, 40
    %v580 = vpop.permute.xlu0 %579
    %589 = vst.msk [vmem:[#allocation4 + $0x3] sm:$0x1] %vm314, %v566
    %590 = vst.msk [vmem:[#allocation4 + $0xb] sm:$0x1] %vm314, %v568
    %591 = vst.msk [vmem:[#allocation4 + $0x13] sm:$0x1] %vm314, %v570
    %592 = vst.msk [vmem:[#allocation4 + $0x1b] sm:$0x1] %vm314, %v572
    %593 = vst.msk [vmem:[#allocation4 + $0x23] sm:$0x1] %vm314, %v574
    %594 = vst.msk [vmem:[#allocation4 + $0x2b] sm:$0x1] %vm314, %v576
    %595 = vst.msk [vmem:[#allocation4 + $0x33] sm:$0x1] %vm314, %v578
    %596 = vst.msk [vmem:[#allocation4 + $0x3b] sm:$0x1] %vm314, %v580
    %597 = vrot.lane.b32.xlu0 %v430, 104
    %v598 = vpop.permute.xlu0 %597
    %599 = vrot.lane.b32.xlu0 %v434, 104
    %v600 = vpop.permute.xlu0 %599
    %601 = vrot.lane.b32.xlu0 %v438, 104
    %v602 = vpop.permute.xlu0 %601
    %603 = vrot.lane.b32.xlu0 %v442, 104
    %v604 = vpop.permute.xlu0 %603
    %605 = vrot.lane.b32.xlu0 %v446, 104
    %v606 = vpop.permute.xlu0 %605
    %607 = vrot.lane.b32.xlu0 %v450, 104
    %v608 = vpop.permute.xlu0 %607
    %609 = vrot.lane.b32.xlu0 %v454, 104
    %v610 = vpop.permute.xlu0 %609
    %611 = vrot.lane.b32.xlu0 %v458, 104
    %v612 = vpop.permute.xlu0 %611
    %621 = vst.msk [vmem:[#allocation5 + $0x3] sm:$0x1] %vm314, %v598
    %622 = vst.msk [vmem:[#allocation5 + $0xb] sm:$0x1] %vm314, %v600
    %623 = vst.msk [vmem:[#allocation5 + $0x13] sm:$0x1] %vm314, %v602
    %624 = vst.msk [vmem:[#allocation5 + $0x1b] sm:$0x1] %vm314, %v604
    %625 = vst.msk [vmem:[#allocation5 + $0x23] sm:$0x1] %vm314, %v606
    %626 = vst.msk [vmem:[#allocation5 + $0x2b] sm:$0x1] %vm314, %v608
    %627 = vst.msk [vmem:[#allocation5 + $0x33] sm:$0x1] %vm314, %v610
    %628 = vst.msk [vmem:[#allocation5 + $0x3b] sm:$0x1] %vm314, %v612
    %629 = vrot.lane.b32.xlu0 %v204, 96
    %v630 = vpop.permute.xlu0 %629
    %s632 = scalar_lea.vmem [#allocation3], 32
    %633 = vst.msk [vmem:[%s632] sm:$0xff] %vm206, %v630
    %634 = vrot.lane.b32.xlu0 %v261, 32
    %v635 = vpop.permute.xlu0 %634
    %636 = vrot.lane.b32.xlu0 %v265, 32
    %v637 = vpop.permute.xlu0 %636
    %638 = vrot.lane.b32.xlu0 %v269, 32
    %v639 = vpop.permute.xlu0 %638
    %640 = vrot.lane.b32.xlu0 %v273, 32
    %v641 = vpop.permute.xlu0 %640
    %642 = vrot.lane.b32.xlu0 %v277, 32
    %v643 = vpop.permute.xlu0 %642
    %644 = vrot.lane.b32.xlu0 %v281, 32
    %v645 = vpop.permute.xlu0 %644
    %646 = vrot.lane.b32.xlu0 %v285, 32
    %v647 = vpop.permute.xlu0 %646
    %648 = vrot.lane.b32.xlu0 %v289, 32
    %v649 = vpop.permute.xlu0 %648
    %658 = vst.msk [vmem:[#allocation4 + $0x4] sm:$0x1] %vm314, %v635
    %659 = vst.msk [vmem:[#allocation4 + $0xc] sm:$0x1] %vm314, %v637
    %660 = vst.msk [vmem:[#allocation4 + $0x14] sm:$0x1] %vm314, %v639
    %661 = vst.msk [vmem:[#allocation4 + $0x1c] sm:$0x1] %vm314, %v641
    %662 = vst.msk [vmem:[#allocation4 + $0x24] sm:$0x1] %vm314, %v643
    %663 = vst.msk [vmem:[#allocation4 + $0x2c] sm:$0x1] %vm314, %v645
    %664 = vst.msk [vmem:[#allocation4 + $0x34] sm:$0x1] %vm314, %v647
    %665 = vst.msk [vmem:[#allocation4 + $0x3c] sm:$0x1] %vm314, %v649
    %666 = vrot.lane.b32.xlu0 %v430, 96
    %v667 = vpop.permute.xlu0 %666
    %668 = vrot.lane.b32.xlu0 %v434, 96
    %v669 = vpop.permute.xlu0 %668
    %670 = vrot.lane.b32.xlu0 %v438, 96
    %v671 = vpop.permute.xlu0 %670
    %672 = vrot.lane.b32.xlu0 %v442, 96
    %v673 = vpop.permute.xlu0 %672
    %674 = vrot.lane.b32.xlu0 %v446, 96
    %v675 = vpop.permute.xlu0 %674
    %676 = vrot.lane.b32.xlu0 %v450, 96
    %v677 = vpop.permute.xlu0 %676
    %678 = vrot.lane.b32.xlu0 %v454, 96
    %v679 = vpop.permute.xlu0 %678
    %680 = vrot.lane.b32.xlu0 %v458, 96
    %v681 = vpop.permute.xlu0 %680
    %690 = vst.msk [vmem:[#allocation5 + $0x4] sm:$0x1] %vm314, %v667
    %691 = vst.msk [vmem:[#allocation5 + $0xc] sm:$0x1] %vm314, %v669
    %692 = vst.msk [vmem:[#allocation5 + $0x14] sm:$0x1] %vm314, %v671
    %693 = vst.msk [vmem:[#allocation5 + $0x1c] sm:$0x1] %vm314, %v673
    %694 = vst.msk [vmem:[#allocation5 + $0x24] sm:$0x1] %vm314, %v675
    %695 = vst.msk [vmem:[#allocation5 + $0x2c] sm:$0x1] %vm314, %v677
    %696 = vst.msk [vmem:[#allocation5 + $0x34] sm:$0x1] %vm314, %v679
    %697 = vst.msk [vmem:[#allocation5 + $0x3c] sm:$0x1] %vm314, %v681
    %698 = vrot.lane.b32.xlu0 %v204, 88
    %v699 = vpop.permute.xlu0 %698
    %s701 = scalar_lea.vmem [#allocation3], 40
    %702 = vst.msk [vmem:[%s701] sm:$0xff] %vm206, %v699
    %703 = vrot.lane.b32.xlu0 %v261, 24
    %v704 = vpop.permute.xlu0 %703
    %705 = vrot.lane.b32.xlu0 %v265, 24
    %v706 = vpop.permute.xlu0 %705
    %707 = vrot.lane.b32.xlu0 %v269, 24
    %v708 = vpop.permute.xlu0 %707
    %709 = vrot.lane.b32.xlu0 %v273, 24
    %v710 = vpop.permute.xlu0 %709
    %711 = vrot.lane.b32.xlu0 %v277, 24
    %v712 = vpop.permute.xlu0 %711
    %713 = vrot.lane.b32.xlu0 %v281, 24
    %v714 = vpop.permute.xlu0 %713
    %715 = vrot.lane.b32.xlu0 %v285, 24
    %v716 = vpop.permute.xlu0 %715
    %717 = vrot.lane.b32.xlu0 %v289, 24
    %v718 = vpop.permute.xlu0 %717
    %727 = vst.msk [vmem:[#allocation4 + $0x5] sm:$0x1] %vm314, %v704
    %728 = vst.msk [vmem:[#allocation4 + $0xd] sm:$0x1] %vm314, %v706
    %729 = vst.msk [vmem:[#allocation4 + $0x15] sm:$0x1] %vm314, %v708
    %730 = vst.msk [vmem:[#allocation4 + $0x1d] sm:$0x1] %vm314, %v710
    %731 = vst.msk [vmem:[#allocation4 + $0x25] sm:$0x1] %vm314, %v712
    %732 = vst.msk [vmem:[#allocation4 + $0x2d] sm:$0x1] %vm314, %v714
    %733 = vst.msk [vmem:[#allocation4 + $0x35] sm:$0x1] %vm314, %v716
    %734 = vst.msk [vmem:[#allocation4 + $0x3d] sm:$0x1] %vm314, %v718
    %735 = vrot.lane.b32.xlu0 %v430, 88
    %v736 = vpop.permute.xlu0 %735
    %737 = vrot.lane.b32.xlu0 %v434, 88
    %v738 = vpop.permute.xlu0 %737
    %739 = vrot.lane.b32.xlu0 %v438, 88
    %v740 = vpop.permute.xlu0 %739
    %741 = vrot.lane.b32.xlu0 %v442, 88
    %v742 = vpop.permute.xlu0 %741
    %743 = vrot.lane.b32.xlu0 %v446, 88
    %v744 = vpop.permute.xlu0 %743
    %745 = vrot.lane.b32.xlu0 %v450, 88
    %v746 = vpop.permute.xlu0 %745
    %747 = vrot.lane.b32.xlu0 %v454, 88
    %v748 = vpop.permute.xlu0 %747
    %749 = vrot.lane.b32.xlu0 %v458, 88
    %v750 = vpop.permute.xlu0 %749
    %759 = vst.msk [vmem:[#allocation5 + $0x5] sm:$0x1] %vm314, %v736
    %760 = vst.msk [vmem:[#allocation5 + $0xd] sm:$0x1] %vm314, %v738
    %761 = vst.msk [vmem:[#allocation5 + $0x15] sm:$0x1] %vm314, %v740
    %762 = vst.msk [vmem:[#allocation5 + $0x1d] sm:$0x1] %vm314, %v742
    %763 = vst.msk [vmem:[#allocation5 + $0x25] sm:$0x1] %vm314, %v744
    %764 = vst.msk [vmem:[#allocation5 + $0x2d] sm:$0x1] %vm314, %v746
    %765 = vst.msk [vmem:[#allocation5 + $0x35] sm:$0x1] %vm314, %v748
    %766 = vst.msk [vmem:[#allocation5 + $0x3d] sm:$0x1] %vm314, %v750
    %767 = vrot.lane.b32.xlu0 %v204, 80
    %v768 = vpop.permute.xlu0 %767
    %s770 = scalar_lea.vmem [#allocation3], 48
    %771 = vst.msk [vmem:[%s770] sm:$0xff] %vm206, %v768
    %772 = vrot.lane.b32.xlu0 %v261, 16
    %v773 = vpop.permute.xlu0 %772
    %774 = vrot.lane.b32.xlu0 %v265, 16
    %v775 = vpop.permute.xlu0 %774
    %776 = vrot.lane.b32.xlu0 %v269, 16
    %v777 = vpop.permute.xlu0 %776
    %778 = vrot.lane.b32.xlu0 %v273, 16
    %v779 = vpop.permute.xlu0 %778
    %780 = vrot.lane.b32.xlu0 %v277, 16
    %v781 = vpop.permute.xlu0 %780
    %782 = vrot.lane.b32.xlu0 %v281, 16
    %v783 = vpop.permute.xlu0 %782
    %784 = vrot.lane.b32.xlu0 %v285, 16
    %v785 = vpop.permute.xlu0 %784
    %786 = vrot.lane.b32.xlu0 %v289, 16
    %v787 = vpop.permute.xlu0 %786
    %796 = vst.msk [vmem:[#allocation4 + $0x6] sm:$0x1] %vm314, %v773
    %797 = vst.msk [vmem:[#allocation4 + $0xe] sm:$0x1] %vm314, %v775
    %798 = vst.msk [vmem:[#allocation4 + $0x16] sm:$0x1] %vm314, %v777
    %799 = vst.msk [vmem:[#allocation4 + $0x1e] sm:$0x1] %vm314, %v779
    %800 = vst.msk [vmem:[#allocation4 + $0x26] sm:$0x1] %vm314, %v781
    %801 = vst.msk [vmem:[#allocation4 + $0x2e] sm:$0x1] %vm314, %v783
    %802 = vst.msk [vmem:[#allocation4 + $0x36] sm:$0x1] %vm314, %v785
    %803 = vst.msk [vmem:[#allocation4 + $0x3e] sm:$0x1] %vm314, %v787
    %804 = vrot.lane.b32.xlu0 %v430, 80
    %v805 = vpop.permute.xlu0 %804
    %806 = vrot.lane.b32.xlu0 %v434, 80
    %v807 = vpop.permute.xlu0 %806
    %808 = vrot.lane.b32.xlu0 %v438, 80
    %v809 = vpop.permute.xlu0 %808
    %810 = vrot.lane.b32.xlu0 %v442, 80
    %v811 = vpop.permute.xlu0 %810
    %812 = vrot.lane.b32.xlu0 %v446, 80
    %v813 = vpop.permute.xlu0 %812
    %814 = vrot.lane.b32.xlu0 %v450, 80
    %v815 = vpop.permute.xlu0 %814
    %816 = vrot.lane.b32.xlu0 %v454, 80
    %v817 = vpop.permute.xlu0 %816
    %818 = vrot.lane.b32.xlu0 %v458, 80
    %v819 = vpop.permute.xlu0 %818
    %828 = vst.msk [vmem:[#allocation5 + $0x6] sm:$0x1] %vm314, %v805
    %829 = vst.msk [vmem:[#allocation5 + $0xe] sm:$0x1] %vm314, %v807
    %830 = vst.msk [vmem:[#allocation5 + $0x16] sm:$0x1] %vm314, %v809
    %831 = vst.msk [vmem:[#allocation5 + $0x1e] sm:$0x1] %vm314, %v811
    %832 = vst.msk [vmem:[#allocation5 + $0x26] sm:$0x1] %vm314, %v813
    %833 = vst.msk [vmem:[#allocation5 + $0x2e] sm:$0x1] %vm314, %v815
    %834 = vst.msk [vmem:[#allocation5 + $0x36] sm:$0x1] %vm314, %v817
    %835 = vst.msk [vmem:[#allocation5 + $0x3e] sm:$0x1] %vm314, %v819
    %836 = vrot.lane.b32.xlu0 %v204, 72
    %v837 = vpop.permute.xlu0 %836
    %s839 = scalar_lea.vmem [#allocation3], 56
    %840 = vst.msk [vmem:[%s839] sm:$0xff] %vm206, %v837
    %841 = vrot.lane.b32.xlu0 %v261, 8
    %v842 = vpop.permute.xlu0 %841
    %843 = vrot.lane.b32.xlu0 %v265, 8
    %v844 = vpop.permute.xlu0 %843
    %845 = vrot.lane.b32.xlu0 %v269, 8
    %v846 = vpop.permute.xlu0 %845
    %847 = vrot.lane.b32.xlu0 %v273, 8
    %v848 = vpop.permute.xlu0 %847
    %849 = vrot.lane.b32.xlu0 %v277, 8
    %v850 = vpop.permute.xlu0 %849
    %851 = vrot.lane.b32.xlu0 %v281, 8
    %v852 = vpop.permute.xlu0 %851
    %853 = vrot.lane.b32.xlu0 %v285, 8
    %v854 = vpop.permute.xlu0 %853
    %855 = vrot.lane.b32.xlu0 %v289, 8
    %v856 = vpop.permute.xlu0 %855
    %865 = vst.msk [vmem:[#allocation4 + $0x7] sm:$0x1] %vm314, %v842
    %866 = vst.msk [vmem:[#allocation4 + $0xf] sm:$0x1] %vm314, %v844
    %867 = vst.msk [vmem:[#allocation4 + $0x17] sm:$0x1] %vm314, %v846
    %868 = vst.msk [vmem:[#allocation4 + $0x1f] sm:$0x1] %vm314, %v848
    %869 = vst.msk [vmem:[#allocation4 + $0x27] sm:$0x1] %vm314, %v850
    %870 = vst.msk [vmem:[#allocation4 + $0x2f] sm:$0x1] %vm314, %v852
    %871 = vst.msk [vmem:[#allocation4 + $0x37] sm:$0x1] %vm314, %v854
    %872 = vst.msk [vmem:[#allocation4 + $0x3f] sm:$0x1] %vm314, %v856
    %873 = vrot.lane.b32.xlu0 %v430, 72
    %v874 = vpop.permute.xlu0 %873
    %875 = vrot.lane.b32.xlu0 %v434, 72
    %v876 = vpop.permute.xlu0 %875
    %877 = vrot.lane.b32.xlu0 %v438, 72
    %v878 = vpop.permute.xlu0 %877
    %879 = vrot.lane.b32.xlu0 %v442, 72
    %v880 = vpop.permute.xlu0 %879
    %881 = vrot.lane.b32.xlu0 %v446, 72
    %v882 = vpop.permute.xlu0 %881
    %883 = vrot.lane.b32.xlu0 %v450, 72
    %v884 = vpop.permute.xlu0 %883
    %885 = vrot.lane.b32.xlu0 %v454, 72
    %v886 = vpop.permute.xlu0 %885
    %887 = vrot.lane.b32.xlu0 %v458, 72
    %v888 = vpop.permute.xlu0 %887
    %897 = vst.msk [vmem:[#allocation5 + $0x7] sm:$0x1] %vm314, %v874
    %898 = vst.msk [vmem:[#allocation5 + $0xf] sm:$0x1] %vm314, %v876
    %899 = vst.msk [vmem:[#allocation5 + $0x17] sm:$0x1] %vm314, %v878
    %900 = vst.msk [vmem:[#allocation5 + $0x1f] sm:$0x1] %vm314, %v880
    %901 = vst.msk [vmem:[#allocation5 + $0x27] sm:$0x1] %vm314, %v882
    %902 = vst.msk [vmem:[#allocation5 + $0x2f] sm:$0x1] %vm314, %v884
    %903 = vst.msk [vmem:[#allocation5 + $0x37] sm:$0x1] %vm314, %v886
    %904 = vst.msk [vmem:[#allocation5 + $0x3f] sm:$0x1] %vm314, %v888
    %v905 = vld [vmem:[#allocation3] sm:$0xff]
    %v906 = vld [vmem:[#allocation3 + $0x8] sm:$0xff]
    %v907 = vld [vmem:[#allocation3 + $0x10] sm:$0xff]
    %v908 = vld [vmem:[#allocation3 + $0x18] sm:$0xff]
    %v909 = vld [vmem:[#allocation3 + $0x20] sm:$0xff]
    %v910 = vld [vmem:[#allocation3 + $0x28] sm:$0xff]
    %v911 = vld [vmem:[#allocation3 + $0x30] sm:$0xff]
    %v912 = vld [vmem:[#allocation3 + $0x38] sm:$0xff]
    %v913 = vld [vmem:[#allocation4] sm:$0xff]
    %v914 = vld [vmem:[#allocation4 + $0x8] sm:$0xff]
    %v915 = vld [vmem:[#allocation4 + $0x10] sm:$0xff]
    %v916 = vld [vmem:[#allocation4 + $0x18] sm:$0xff]
    %v917 = vld [vmem:[#allocation4 + $0x20] sm:$0xff]
    %v918 = vld [vmem:[#allocation4 + $0x28] sm:$0xff]
    %v919 = vld [vmem:[#allocation4 + $0x30] sm:$0xff]
    %v920 = vld [vmem:[#allocation4 + $0x38] sm:$0xff]
    %v921 = vld [vmem:[#allocation5] sm:$0xff]
    %v922 = vld [vmem:[#allocation5 + $0x8] sm:$0xff]
    %v923 = vld [vmem:[#allocation5 + $0x10] sm:$0xff]
    %v924 = vld [vmem:[#allocation5 + $0x18] sm:$0xff]
    %v925 = vld [vmem:[#allocation5 + $0x20] sm:$0xff]
    %v926 = vld [vmem:[#allocation5 + $0x28] sm:$0xff]
    %v927 = vld [vmem:[#allocation5 + $0x30] sm:$0xff]
    %v928 = vld [vmem:[#allocation5 + $0x38] sm:$0xff]
    %v930 = vsel %vm206, %v905, 0
    %v933 = vsel %vm206, %v913, 0
    %935 = vmatprep.subr.mxu0 0.0
    %936 = vmatpush1.xpose.msra.mxu0 %v933
    %937 = vmatprep.subr.mxu0 0.0
    %938 = vmatpush1.xpose.msra.mxu0 0.0
    %939 = vmatprep.subr.mxu0 0.0
    %940 = vmatpush1.xpose.msra.mxu0 0.0
    %941 = vmatprep.subr.mxu0 0.0
    %942 = vmatpush1.xpose.msra.mxu0 0.0
    %943 = vmatprep.subr.mxu0 0.0
    %944 = vmatpush1.xpose.msra.mxu0 0.0
    %945 = vmatprep.subr.mxu0 0.0
    %946 = vmatpush1.xpose.msra.mxu0 0.0
    %947 = vmatprep.subr.mxu0 0.0
    %948 = vmatpush1.xpose.msra.mxu0 0.0
    %949 = vmatprep.subr.mxu0 0.0
    %950 = vmatpush1.xpose.msra.mxu0 0.0
    %951 = vmatprep.subr.mxu0 0.0
    %952 = vmatpush1.xpose.msra.mxu0 0.0
    %953 = vmatprep.subr.mxu0 0.0
    %954 = vmatpush1.xpose.msra.mxu0 0.0
    %955 = vmatprep.subr.mxu0 0.0
    %956 = vmatpush1.xpose.msra.mxu0 0.0
    %957 = vmatprep.subr.mxu0 0.0
    %958 = vmatpush1.xpose.msra.mxu0 0.0
    %959 = vmatprep.subr.mxu0 0.0
    %960 = vmatpush1.xpose.msra.mxu0 0.0
    %961 = vmatprep.subr.mxu0 0.0
    %962 = vmatpush1.xpose.msra.mxu0 0.0
    %963 = vmatprep.subr.mxu0 0.0
    %964 = vmatpush1.xpose.msra.mxu0 0.0
    %965 = vmatprep.subr.mxu0 0.0
    %966 = vmatpush1.xpose.msra.mxu0 0.0
    %967 = vmatprep.subr.mxu0 0.0
    %968 = vmatpush1.xpose.msra.mxu0 0.0
    %969 = vmatprep.subr.mxu0 0.0
    %970 = vmatpush1.xpose.msra.mxu0 0.0
    %971 = vmatprep.subr.mxu0 0.0
    %972 = vmatpush1.xpose.msra.mxu0 0.0
    %973 = vmatprep.subr.mxu0 0.0
    %974 = vmatpush1.xpose.msra.mxu0 0.0
    %975 = vmatprep.subr.mxu0 0.0
    %976 = vmatpush1.xpose.msra.mxu0 0.0
    %977 = vmatprep.subr.mxu0 0.0
    %978 = vmatpush1.xpose.msra.mxu0 0.0
    %979 = vmatprep.subr.mxu0 0.0
    %980 = vmatpush1.xpose.msra.mxu0 0.0
    %981 = vmatprep.subr.mxu0 0.0
    %982 = vmatpush1.xpose.msra.mxu0 0.0
    %983 = vmatprep.subr.mxu0 0.0
    %984 = vmatpush1.xpose.msra.mxu0 0.0
    %985 = vmatprep.subr.mxu0 0.0
    %986 = vmatpush1.xpose.msra.mxu0 0.0
    %987 = vmatprep.subr.mxu0 0.0
    %988 = vmatpush1.xpose.msra.mxu0 0.0
    %989 = vmatprep.subr.mxu0 0.0
    %990 = vmatpush1.xpose.msra.mxu0 0.0
    %991 = vmatprep.subr.mxu0 0.0
    %992 = vmatpush1.xpose.msra.mxu0 0.0
    %993 = vmatprep.subr.mxu0 0.0
    %994 = vmatpush1.xpose.msra.mxu0 0.0
    %995 = vmatprep.subr.mxu0 0.0
    %996 = vmatpush1.xpose.msra.mxu0 0.0
    %997 = vmatprep.subr.mxu0 0.0
    %998 = vmatpush1.xpose.msra.mxu0 0.0
    %999 = vmatprep.mubr.f32.mxu0 0.0
    %1000 = vmatmul.mubr.f32.gmra.mrb[0].mxu0 %v930
    %v1001 = vpop.f32.mrb[0].mxu0
    %v1002 = vadd.f32 0.0, %v1001
    %v1003 = vpop.f32.mrb[0].mxu0
    %1004 = vdwg.mxu0
    %v1006 = vsel %vm206, %v906, 0
    %v1009 = vsel %vm206, %v914, 0
    %1011 = vmatprep.subr.mxu0 0.0
    %1012 = vmatpush1.xpose.msra.mxu0 %v1009
    %1013 = vmatprep.subr.mxu0 0.0
    %1014 = vmatpush1.xpose.msra.mxu0 0.0
    %1015 = vmatprep.subr.mxu0 0.0
    %1016 = vmatpush1.xpose.msra.mxu0 0.0
    %1017 = vmatprep.subr.mxu0 0.0
    %1018 = vmatpush1.xpose.msra.mxu0 0.0
    %1019 = vmatprep.subr.mxu0 0.0
    %1020 = vmatpush1.xpose.msra.mxu0 0.0
    %1021 = vmatprep.subr.mxu0 0.0
    %1022 = vmatpush1.xpose.msra.mxu0 0.0
    %1023 = vmatprep.subr.mxu0 0.0
    %1024 = vmatpush1.xpose.msra.mxu0 0.0
    %1025 = vmatprep.subr.mxu0 0.0
    %1026 = vmatpush1.xpose.msra.mxu0 0.0
    %1027 = vmatprep.subr.mxu0 0.0
    %1028 = vmatpush1.xpose.msra.mxu0 0.0
    %1029 = vmatprep.subr.mxu0 0.0
    %1030 = vmatpush1.xpose.msra.mxu0 0.0
    %1031 = vmatprep.subr.mxu0 0.0
    %1032 = vmatpush1.xpose.msra.mxu0 0.0
    %1033 = vmatprep.subr.mxu0 0.0
    %1034 = vmatpush1.xpose.msra.mxu0 0.0
    %1035 = vmatprep.subr.mxu0 0.0
    %1036 = vmatpush1.xpose.msra.mxu0 0.0
    %1037 = vmatprep.subr.mxu0 0.0
    %1038 = vmatpush1.xpose.msra.mxu0 0.0
    %1039 = vmatprep.subr.mxu0 0.0
    %1040 = vmatpush1.xpose.msra.mxu0 0.0
    %1041 = vmatprep.subr.mxu0 0.0
    %1042 = vmatpush1.xpose.msra.mxu0 0.0
    %1043 = vmatprep.subr.mxu0 0.0
    %1044 = vmatpush1.xpose.msra.mxu0 0.0
    %1045 = vmatprep.subr.mxu0 0.0
    %1046 = vmatpush1.xpose.msra.mxu0 0.0
    %1047 = vmatprep.subr.mxu0 0.0
    %1048 = vmatpush1.xpose.msra.mxu0 0.0
    %1049 = vmatprep.subr.mxu0 0.0
    %1050 = vmatpush1.xpose.msra.mxu0 0.0
    %1051 = vmatprep.subr.mxu0 0.0
    %1052 = vmatpush1.xpose.msra.mxu0 0.0
    %1053 = vmatprep.subr.mxu0 0.0
    %1054 = vmatpush1.xpose.msra.mxu0 0.0
    %1055 = vmatprep.subr.mxu0 0.0
    %1056 = vmatpush1.xpose.msra.mxu0 0.0
    %1057 = vmatprep.subr.mxu0 0.0
    %1058 = vmatpush1.xpose.msra.mxu0 0.0
    %1059 = vmatprep.subr.mxu0 0.0
    %1060 = vmatpush1.xpose.msra.mxu0 0.0
    %1061 = vmatprep.subr.mxu0 0.0
    %1062 = vmatpush1.xpose.msra.mxu0 0.0
    %1063 = vmatprep.subr.mxu0 0.0
    %1064 = vmatpush1.xpose.msra.mxu0 0.0
    %1065 = vmatprep.subr.mxu0 0.0
    %1066 = vmatpush1.xpose.msra.mxu0 0.0
    %1067 = vmatprep.subr.mxu0 0.0
    %1068 = vmatpush1.xpose.msra.mxu0 0.0
    %1069 = vmatprep.subr.mxu0 0.0
    %1070 = vmatpush1.xpose.msra.mxu0 0.0
    %1071 = vmatprep.subr.mxu0 0.0
    %1072 = vmatpush1.xpose.msra.mxu0 0.0
    %1073 = vmatprep.subr.mxu0 0.0
    %1074 = vmatpush1.xpose.msra.mxu0 0.0
    %1075 = vmatprep.mubr.f32.mxu0 0.0
    %1076 = vmatmul.mubr.f32.gmra.mrb[0].mxu0 %v1006
    %v1077 = vpop.f32.mrb[0].mxu0
    %v1078 = vadd.f32 0.0, %v1077
    %v1079 = vpop.f32.mrb[0].mxu0
    %1080 = vdwg.mxu0
    %v1082 = vsel %vm206, %v907, 0
    %v1085 = vsel %vm206, %v915, 0
    %1087 = vmatprep.subr.mxu0 0.0
    %1088 = vmatpush1.xpose.msra.mxu0 %v1085
    %1089 = vmatprep.subr.mxu0 0.0
    %1090 = vmatpush1.xpose.msra.mxu0 0.0
    %1091 = vmatprep.subr.mxu0 0.0
    %1092 = vmatpush1.xpose.msra.mxu0 0.0
    %1093 = vmatprep.subr.mxu0 0.0
    %1094 = vmatpush1.xpose.msra.mxu0 0.0
    %1095 = vmatprep.subr.mxu0 0.0
    %1096 = vmatpush1.xpose.msra.mxu0 0.0
    %1097 = vmatprep.subr.mxu0 0.0
    %1098 = vmatpush1.xpose.msra.mxu0 0.0
    %1099 = vmatprep.subr.mxu0 0.0
    %1100 = vmatpush1.xpose.msra.mxu0 0.0
    %1101 = vmatprep.subr.mxu0 0.0
    %1102 = vmatpush1.xpose.msra.mxu0 0.0
    %1103 = vmatprep.subr.mxu0 0.0
    %1104 = vmatpush1.xpose.msra.mxu0 0.0
    %1105 = vmatprep.subr.mxu0 0.0
    %1106 = vmatpush1.xpose.msra.mxu0 0.0
    %1107 = vmatprep.subr.mxu0 0.0
    %1108 = vmatpush1.xpose.msra.mxu0 0.0
    %1109 = vmatprep.subr.mxu0 0.0
    %1110 = vmatpush1.xpose.msra.mxu0 0.0
    %1111 = vmatprep.subr.mxu0 0.0
    %1112 = vmatpush1.xpose.msra.mxu0 0.0
    %1113 = vmatprep.subr.mxu0 0.0
    %1114 = vmatpush1.xpose.msra.mxu0 0.0
    %1115 = vmatprep.subr.mxu0 0.0
    %1116 = vmatpush1.xpose.msra.mxu0 0.0
    %1117 = vmatprep.subr.mxu0 0.0
    %1118 = vmatpush1.xpose.msra.mxu0 0.0
    %1119 = vmatprep.subr.mxu0 0.0
    %1120 = vmatpush1.xpose.msra.mxu0 0.0
    %1121 = vmatprep.subr.mxu0 0.0
    %1122 = vmatpush1.xpose.msra.mxu0 0.0
    %1123 = vmatprep.subr.mxu0 0.0
    %1124 = vmatpush1.xpose.msra.mxu0 0.0
    %1125 = vmatprep.subr.mxu0 0.0
    %1126 = vmatpush1.xpose.msra.mxu0 0.0
    %1127 = vmatprep.subr.mxu0 0.0
    %1128 = vmatpush1.xpose.msra.mxu0 0.0
    %1129 = vmatprep.subr.mxu0 0.0
    %1130 = vmatpush1.xpose.msra.mxu0 0.0
    %1131 = vmatprep.subr.mxu0 0.0
    %1132 = vmatpush1.xpose.msra.mxu0 0.0
    %1133 = vmatprep.subr.mxu0 0.0
    %1134 = vmatpush1.xpose.msra.mxu0 0.0
    %1135 = vmatprep.subr.mxu0 0.0
    %1136 = vmatpush1.xpose.msra.mxu0 0.0
    %1137 = vmatprep.subr.mxu0 0.0
    %1138 = vmatpush1.xpose.msra.mxu0 0.0
    %1139 = vmatprep.subr.mxu0 0.0
    %1140 = vmatpush1.xpose.msra.mxu0 0.0
    %1141 = vmatprep.subr.mxu0 0.0
    %1142 = vmatpush1.xpose.msra.mxu0 0.0
    %1143 = vmatprep.subr.mxu0 0.0
    %1144 = vmatpush1.xpose.msra.mxu0 0.0
    %1145 = vmatprep.subr.mxu0 0.0
    %1146 = vmatpush1.xpose.msra.mxu0 0.0
    %1147 = vmatprep.subr.mxu0 0.0
    %1148 = vmatpush1.xpose.msra.mxu0 0.0
    %1149 = vmatprep.subr.mxu0 0.0
    %1150 = vmatpush1.xpose.msra.mxu0 0.0
    %1151 = vmatprep.mubr.f32.mxu0 0.0
    %1152 = vmatmul.mubr.f32.gmra.mrb[0].mxu0 %v1082
    %v1153 = vpop.f32.mrb[0].mxu0
    %v1154 = vadd.f32 0.0, %v1153
    %v1155 = vpop.f32.mrb[0].mxu0
    %1156 = vdwg.mxu0
    %v1158 = vsel %vm206, %v908, 0
    %v1161 = vsel %vm206, %v916, 0
    %1163 = vmatprep.subr.mxu0 0.0
    %1164 = vmatpush1.xpose.msra.mxu0 %v1161
    %1165 = vmatprep.subr.mxu0 0.0
    %1166 = vmatpush1.xpose.msra.mxu0 0.0
    %1167 = vmatprep.subr.mxu0 0.0
    %1168 = vmatpush1.xpose.msra.mxu0 0.0
    %1169 = vmatprep.subr.mxu0 0.0
    %1170 = vmatpush1.xpose.msra.mxu0 0.0
    %1171 = vmatprep.subr.mxu0 0.0
    %1172 = vmatpush1.xpose.msra.mxu0 0.0
    %1173 = vmatprep.subr.mxu0 0.0
    %1174 = vmatpush1.xpose.msra.mxu0 0.0
    %1175 = vmatprep.subr.mxu0 0.0
    %1176 = vmatpush1.xpose.msra.mxu0 0.0
    %1177 = vmatprep.subr.mxu0 0.0
    %1178 = vmatpush1.xpose.msra.mxu0 0.0
    %1179 = vmatprep.subr.mxu0 0.0
    %1180 = vmatpush1.xpose.msra.mxu0 0.0
    %1181 = vmatprep.subr.mxu0 0.0
    %1182 = vmatpush1.xpose.msra.mxu0 0.0
    %1183 = vmatprep.subr.mxu0 0.0
    %1184 = vmatpush1.xpose.msra.mxu0 0.0
    %1185 = vmatprep.subr.mxu0 0.0
    %1186 = vmatpush1.xpose.msra.mxu0 0.0
    %1187 = vmatprep.subr.mxu0 0.0
    %1188 = vmatpush1.xpose.msra.mxu0 0.0
    %1189 = vmatprep.subr.mxu0 0.0
    %1190 = vmatpush1.xpose.msra.mxu0 0.0
    %1191 = vmatprep.subr.mxu0 0.0
    %1192 = vmatpush1.xpose.msra.mxu0 0.0
    %1193 = vmatprep.subr.mxu0 0.0
    %1194 = vmatpush1.xpose.msra.mxu0 0.0
    %1195 = vmatprep.subr.mxu0 0.0
    %1196 = vmatpush1.xpose.msra.mxu0 0.0
    %1197 = vmatprep.subr.mxu0 0.0
    %1198 = vmatpush1.xpose.msra.mxu0 0.0
    %1199 = vmatprep.subr.mxu0 0.0
    %1200 = vmatpush1.xpose.msra.mxu0 0.0
    %1201 = vmatprep.subr.mxu0 0.0
    %1202 = vmatpush1.xpose.msra.mxu0 0.0
    %1203 = vmatprep.subr.mxu0 0.0
    %1204 = vmatpush1.xpose.msra.mxu0 0.0
    %1205 = vmatprep.subr.mxu0 0.0
    %1206 = vmatpush1.xpose.msra.mxu0 0.0
    %1207 = vmatprep.subr.mxu0 0.0
    %1208 = vmatpush1.xpose.msra.mxu0 0.0
    %1209 = vmatprep.subr.mxu0 0.0
    %1210 = vmatpush1.xpose.msra.mxu0 0.0
    %1211 = vmatprep.subr.mxu0 0.0
    %1212 = vmatpush1.xpose.msra.mxu0 0.0
    %1213 = vmatprep.subr.mxu0 0.0
    %1214 = vmatpush1.xpose.msra.mxu0 0.0
    %1215 = vmatprep.subr.mxu0 0.0
    %1216 = vmatpush1.xpose.msra.mxu0 0.0
    %1217 = vmatprep.subr.mxu0 0.0
    %1218 = vmatpush1.xpose.msra.mxu0 0.0
    %1219 = vmatprep.subr.mxu0 0.0
    %1220 = vmatpush1.xpose.msra.mxu0 0.0
    %1221 = vmatprep.subr.mxu0 0.0
    %1222 = vmatpush1.xpose.msra.mxu0 0.0
    %1223 = vmatprep.subr.mxu0 0.0
    %1224 = vmatpush1.xpose.msra.mxu0 0.0
    %1225 = vmatprep.subr.mxu0 0.0
    %1226 = vmatpush1.xpose.msra.mxu0 0.0
    %1227 = vmatprep.mubr.f32.mxu0 0.0
    %1228 = vmatmul.mubr.f32.gmra.mrb[0].mxu0 %v1158
    %v1229 = vpop.f32.mrb[0].mxu0
    %v1230 = vadd.f32 0.0, %v1229
    %v1231 = vpop.f32.mrb[0].mxu0
    %1232 = vdwg.mxu0
    %v1234 = vsel %vm206, %v909, 0
    %v1237 = vsel %vm206, %v917, 0
    %1239 = vmatprep.subr.mxu0 0.0
    %1240 = vmatpush1.xpose.msra.mxu0 %v1237
    %1241 = vmatprep.subr.mxu0 0.0
    %1242 = vmatpush1.xpose.msra.mxu0 0.0
    %1243 = vmatprep.subr.mxu0 0.0
    %1244 = vmatpush1.xpose.msra.mxu0 0.0
    %1245 = vmatprep.subr.mxu0 0.0
    %1246 = vmatpush1.xpose.msra.mxu0 0.0
    %1247 = vmatprep.subr.mxu0 0.0
    %1248 = vmatpush1.xpose.msra.mxu0 0.0
    %1249 = vmatprep.subr.mxu0 0.0
    %1250 = vmatpush1.xpose.msra.mxu0 0.0
    %1251 = vmatprep.subr.mxu0 0.0
    %1252 = vmatpush1.xpose.msra.mxu0 0.0
    %1253 = vmatprep.subr.mxu0 0.0
    %1254 = vmatpush1.xpose.msra.mxu0 0.0
    %1255 = vmatprep.subr.mxu0 0.0
    %1256 = vmatpush1.xpose.msra.mxu0 0.0
    %1257 = vmatprep.subr.mxu0 0.0
    %1258 = vmatpush1.xpose.msra.mxu0 0.0
    %1259 = vmatprep.subr.mxu0 0.0
    %1260 = vmatpush1.xpose.msra.mxu0 0.0
    %1261 = vmatprep.subr.mxu0 0.0
    %1262 = vmatpush1.xpose.msra.mxu0 0.0
    %1263 = vmatprep.subr.mxu0 0.0
    %1264 = vmatpush1.xpose.msra.mxu0 0.0
    %1265 = vmatprep.subr.mxu0 0.0
    %1266 = vmatpush1.xpose.msra.mxu0 0.0
    %1267 = vmatprep.subr.mxu0 0.0
    %1268 = vmatpush1.xpose.msra.mxu0 0.0
    %1269 = vmatprep.subr.mxu0 0.0
    %1270 = vmatpush1.xpose.msra.mxu0 0.0
    %1271 = vmatprep.subr.mxu0 0.0
    %1272 = vmatpush1.xpose.msra.mxu0 0.0
    %1273 = vmatprep.subr.mxu0 0.0
    %1274 = vmatpush1.xpose.msra.mxu0 0.0
    %1275 = vmatprep.subr.mxu0 0.0
    %1276 = vmatpush1.xpose.msra.mxu0 0.0
    %1277 = vmatprep.subr.mxu0 0.0
    %1278 = vmatpush1.xpose.msra.mxu0 0.0
    %1279 = vmatprep.subr.mxu0 0.0
    %1280 = vmatpush1.xpose.msra.mxu0 0.0
    %1281 = vmatprep.subr.mxu0 0.0
    %1282 = vmatpush1.xpose.msra.mxu0 0.0
    %1283 = vmatprep.subr.mxu0 0.0
    %1284 = vmatpush1.xpose.msra.mxu0 0.0
    %1285 = vmatprep.subr.mxu0 0.0
    %1286 = vmatpush1.xpose.msra.mxu0 0.0
    %1287 = vmatprep.subr.mxu0 0.0
    %1288 = vmatpush1.xpose.msra.mxu0 0.0
    %1289 = vmatprep.subr.mxu0 0.0
    %1290 = vmatpush1.xpose.msra.mxu0 0.0
    %1291 = vmatprep.subr.mxu0 0.0
    %1292 = vmatpush1.xpose.msra.mxu0 0.0
    %1293 = vmatprep.subr.mxu0 0.0
    %1294 = vmatpush1.xpose.msra.mxu0 0.0
    %1295 = vmatprep.subr.mxu0 0.0
    %1296 = vmatpush1.xpose.msra.mxu0 0.0
    %1297 = vmatprep.subr.mxu0 0.0
    %1298 = vmatpush1.xpose.msra.mxu0 0.0
    %1299 = vmatprep.subr.mxu0 0.0
    %1300 = vmatpush1.xpose.msra.mxu0 0.0
    %1301 = vmatprep.subr.mxu0 0.0
    %1302 = vmatpush1.xpose.msra.mxu0 0.0
    %1303 = vmatprep.mubr.f32.mxu0 0.0
    %1304 = vmatmul.mubr.f32.gmra.mrb[0].mxu0 %v1234
    %v1305 = vpop.f32.mrb[0].mxu0
    %v1306 = vadd.f32 0.0, %v1305
    %v1307 = vpop.f32.mrb[0].mxu0
    %1308 = vdwg.mxu0
    %v1310 = vsel %vm206, %v910, 0
    %v1313 = vsel %vm206, %v918, 0
    %1315 = vmatprep.subr.mxu0 0.0
    %1316 = vmatpush1.xpose.msra.mxu0 %v1313
    %1317 = vmatprep.subr.mxu0 0.0
    %1318 = vmatpush1.xpose.msra.mxu0 0.0
    %1319 = vmatprep.subr.mxu0 0.0
    %1320 = vmatpush1.xpose.msra.mxu0 0.0
    %1321 = vmatprep.subr.mxu0 0.0
    %1322 = vmatpush1.xpose.msra.mxu0 0.0
    %1323 = vmatprep.subr.mxu0 0.0
    %1324 = vmatpush1.xpose.msra.mxu0 0.0
    %1325 = vmatprep.subr.mxu0 0.0
    %1326 = vmatpush1.xpose.msra.mxu0 0.0
    %1327 = vmatprep.subr.mxu0 0.0
    %1328 = vmatpush1.xpose.msra.mxu0 0.0
    %1329 = vmatprep.subr.mxu0 0.0
    %1330 = vmatpush1.xpose.msra.mxu0 0.0
    %1331 = vmatprep.subr.mxu0 0.0
    %1332 = vmatpush1.xpose.msra.mxu0 0.0
    %1333 = vmatprep.subr.mxu0 0.0
    %1334 = vmatpush1.xpose.msra.mxu0 0.0
    %1335 = vmatprep.subr.mxu0 0.0
    %1336 = vmatpush1.xpose.msra.mxu0 0.0
    %1337 = vmatprep.subr.mxu0 0.0
    %1338 = vmatpush1.xpose.msra.mxu0 0.0
    %1339 = vmatprep.subr.mxu0 0.0
    %1340 = vmatpush1.xpose.msra.mxu0 0.0
    %1341 = vmatprep.subr.mxu0 0.0
    %1342 = vmatpush1.xpose.msra.mxu0 0.0
    %1343 = vmatprep.subr.mxu0 0.0
    %1344 = vmatpush1.xpose.msra.mxu0 0.0
    %1345 = vmatprep.subr.mxu0 0.0
    %1346 = vmatpush1.xpose.msra.mxu0 0.0
    %1347 = vmatprep.subr.mxu0 0.0
    %1348 = vmatpush1.xpose.msra.mxu0 0.0
    %1349 = vmatprep.subr.mxu0 0.0
    %1350 = vmatpush1.xpose.msra.mxu0 0.0
    %1351 = vmatprep.subr.mxu0 0.0
    %1352 = vmatpush1.xpose.msra.mxu0 0.0
    %1353 = vmatprep.subr.mxu0 0.0
    %1354 = vmatpush1.xpose.msra.mxu0 0.0
    %1355 = vmatprep.subr.mxu0 0.0
    %1356 = vmatpush1.xpose.msra.mxu0 0.0
    %1357 = vmatprep.subr.mxu0 0.0
    %1358 = vmatpush1.xpose.msra.mxu0 0.0
    %1359 = vmatprep.subr.mxu0 0.0
    %1360 = vmatpush1.xpose.msra.mxu0 0.0
    %1361 = vmatprep.subr.mxu0 0.0
    %1362 = vmatpush1.xpose.msra.mxu0 0.0
    %1363 = vmatprep.subr.mxu0 0.0
    %1364 = vmatpush1.xpose.msra.mxu0 0.0
    %1365 = vmatprep.subr.mxu0 0.0
    %1366 = vmatpush1.xpose.msra.mxu0 0.0
    %1367 = vmatprep.subr.mxu0 0.0
    %1368 = vmatpush1.xpose.msra.mxu0 0.0
    %1369 = vmatprep.subr.mxu0 0.0
    %1370 = vmatpush1.xpose.msra.mxu0 0.0
    %1371 = vmatprep.subr.mxu0 0.0
    %1372 = vmatpush1.xpose.msra.mxu0 0.0
    %1373 = vmatprep.subr.mxu0 0.0
    %1374 = vmatpush1.xpose.msra.mxu0 0.0
    %1375 = vmatprep.subr.mxu0 0.0
    %1376 = vmatpush1.xpose.msra.mxu0 0.0
    %1377 = vmatprep.subr.mxu0 0.0
    %1378 = vmatpush1.xpose.msra.mxu0 0.0
    %1379 = vmatprep.mubr.f32.mxu0 0.0
    %1380 = vmatmul.mubr.f32.gmra.mrb[0].mxu0 %v1310
    %v1381 = vpop.f32.mrb[0].mxu0
    %v1382 = vadd.f32 0.0, %v1381
    %v1383 = vpop.f32.mrb[0].mxu0
    %1384 = vdwg.mxu0
    %v1386 = vsel %vm206, %v911, 0
    %v1389 = vsel %vm206, %v919, 0
    %1391 = vmatprep.subr.mxu0 0.0
    %1392 = vmatpush1.xpose.msra.mxu0 %v1389
    %1393 = vmatprep.subr.mxu0 0.0
    %1394 = vmatpush1.xpose.msra.mxu0 0.0
    %1395 = vmatprep.subr.mxu0 0.0
    %1396 = vmatpush1.xpose.msra.mxu0 0.0
    %1397 = vmatprep.subr.mxu0 0.0
    %1398 = vmatpush1.xpose.msra.mxu0 0.0
    %1399 = vmatprep.subr.mxu0 0.0
    %1400 = vmatpush1.xpose.msra.mxu0 0.0
    %1401 = vmatprep.subr.mxu0 0.0
    %1402 = vmatpush1.xpose.msra.mxu0 0.0
    %1403 = vmatprep.subr.mxu0 0.0
    %1404 = vmatpush1.xpose.msra.mxu0 0.0
    %1405 = vmatprep.subr.mxu0 0.0
    %1406 = vmatpush1.xpose.msra.mxu0 0.0
    %1407 = vmatprep.subr.mxu0 0.0
    %1408 = vmatpush1.xpose.msra.mxu0 0.0
    %1409 = vmatprep.subr.mxu0 0.0
    %1410 = vmatpush1.xpose.msra.mxu0 0.0
    %1411 = vmatprep.subr.mxu0 0.0
    %1412 = vmatpush1.xpose.msra.mxu0 0.0
    %1413 = vmatprep.subr.mxu0 0.0
    %1414 = vmatpush1.xpose.msra.mxu0 0.0
    %1415 = vmatprep.subr.mxu0 0.0
    %1416 = vmatpush1.xpose.msra.mxu0 0.0
    %1417 = vmatprep.subr.mxu0 0.0
    %1418 = vmatpush1.xpose.msra.mxu0 0.0
    %1419 = vmatprep.subr.mxu0 0.0
    %1420 = vmatpush1.xpose.msra.mxu0 0.0
    %1421 = vmatprep.subr.mxu0 0.0
    %1422 = vmatpush1.xpose.msra.mxu0 0.0
    %1423 = vmatprep.subr.mxu0 0.0
    %1424 = vmatpush1.xpose.msra.mxu0 0.0
    %1425 = vmatprep.subr.mxu0 0.0
    %1426 = vmatpush1.xpose.msra.mxu0 0.0
    %1427 = vmatprep.subr.mxu0 0.0
    %1428 = vmatpush1.xpose.msra.mxu0 0.0
    %1429 = vmatprep.subr.mxu0 0.0
    %1430 = vmatpush1.xpose.msra.mxu0 0.0
    %1431 = vmatprep.subr.mxu0 0.0
    %1432 = vmatpush1.xpose.msra.mxu0 0.0
    %1433 = vmatprep.subr.mxu0 0.0
    %1434 = vmatpush1.xpose.msra.mxu0 0.0
    %1435 = vmatprep.subr.mxu0 0.0
    %1436 = vmatpush1.xpose.msra.mxu0 0.0
    %1437 = vmatprep.subr.mxu0 0.0
    %1438 = vmatpush1.xpose.msra.mxu0 0.0
    %1439 = vmatprep.subr.mxu0 0.0
    %1440 = vmatpush1.xpose.msra.mxu0 0.0
    %1441 = vmatprep.subr.mxu0 0.0
    %1442 = vmatpush1.xpose.msra.mxu0 0.0
    %1443 = vmatprep.subr.mxu0 0.0
    %1444 = vmatpush1.xpose.msra.mxu0 0.0
    %1445 = vmatprep.subr.mxu0 0.0
    %1446 = vmatpush1.xpose.msra.mxu0 0.0
    %1447 = vmatprep.subr.mxu0 0.0
    %1448 = vmatpush1.xpose.msra.mxu0 0.0
    %1449 = vmatprep.subr.mxu0 0.0
    %1450 = vmatpush1.xpose.msra.mxu0 0.0
    %1451 = vmatprep.subr.mxu0 0.0
    %1452 = vmatpush1.xpose.msra.mxu0 0.0
    %1453 = vmatprep.subr.mxu0 0.0
    %1454 = vmatpush1.xpose.msra.mxu0 0.0
    %1455 = vmatprep.mubr.f32.mxu0 0.0
    %1456 = vmatmul.mubr.f32.gmra.mrb[0].mxu0 %v1386
    %v1457 = vpop.f32.mrb[0].mxu0
    %v1458 = vadd.f32 0.0, %v1457
    %v1459 = vpop.f32.mrb[0].mxu0
    %1460 = vdwg.mxu0
    %v1462 = vsel %vm206, %v912, 0
    %v1465 = vsel %vm206, %v920, 0
    %1467 = vmatprep.subr.mxu0 0.0
    %1468 = vmatpush1.xpose.msra.mxu0 %v1465
    %1469 = vmatprep.subr.mxu0 0.0
    %1470 = vmatpush1.xpose.msra.mxu0 0.0
    %1471 = vmatprep.subr.mxu0 0.0
    %1472 = vmatpush1.xpose.msra.mxu0 0.0
    %1473 = vmatprep.subr.mxu0 0.0
    %1474 = vmatpush1.xpose.msra.mxu0 0.0
    %1475 = vmatprep.subr.mxu0 0.0
    %1476 = vmatpush1.xpose.msra.mxu0 0.0
    %1477 = vmatprep.subr.mxu0 0.0
    %1478 = vmatpush1.xpose.msra.mxu0 0.0
    %1479 = vmatprep.subr.mxu0 0.0
    %1480 = vmatpush1.xpose.msra.mxu0 0.0
    %1481 = vmatprep.subr.mxu0 0.0
    %1482 = vmatpush1.xpose.msra.mxu0 0.0
    %1483 = vmatprep.subr.mxu0 0.0
    %1484 = vmatpush1.xpose.msra.mxu0 0.0
    %1485 = vmatprep.subr.mxu0 0.0
    %1486 = vmatpush1.xpose.msra.mxu0 0.0
    %1487 = vmatprep.subr.mxu0 0.0
    %1488 = vmatpush1.xpose.msra.mxu0 0.0
    %1489 = vmatprep.subr.mxu0 0.0
    %1490 = vmatpush1.xpose.msra.mxu0 0.0
    %1491 = vmatprep.subr.mxu0 0.0
    %1492 = vmatpush1.xpose.msra.mxu0 0.0
    %1493 = vmatprep.subr.mxu0 0.0
    %1494 = vmatpush1.xpose.msra.mxu0 0.0
    %1495 = vmatprep.subr.mxu0 0.0
    %1496 = vmatpush1.xpose.msra.mxu0 0.0
    %1497 = vmatprep.subr.mxu0 0.0
    %1498 = vmatpush1.xpose.msra.mxu0 0.0
    %1499 = vmatprep.subr.mxu0 0.0
    %1500 = vmatpush1.xpose.msra.mxu0 0.0
    %1501 = vmatprep.subr.mxu0 0.0
    %1502 = vmatpush1.xpose.msra.mxu0 0.0
    %1503 = vmatprep.subr.mxu0 0.0
    %1504 = vmatpush1.xpose.msra.mxu0 0.0
    %1505 = vmatprep.subr.mxu0 0.0
    %1506 = vmatpush1.xpose.msra.mxu0 0.0
    %1507 = vmatprep.subr.mxu0 0.0
    %1508 = vmatpush1.xpose.msra.mxu0 0.0
    %1509 = vmatprep.subr.mxu0 0.0
    %1510 = vmatpush1.xpose.msra.mxu0 0.0
    %1511 = vmatprep.subr.mxu0 0.0
    %1512 = vmatpush1.xpose.msra.mxu0 0.0
    %1513 = vmatprep.subr.mxu0 0.0
    %1514 = vmatpush1.xpose.msra.mxu0 0.0
    %1515 = vmatprep.subr.mxu0 0.0
    %1516 = vmatpush1.xpose.msra.mxu0 0.0
    %1517 = vmatprep.subr.mxu0 0.0
    %1518 = vmatpush1.xpose.msra.mxu0 0.0
    %1519 = vmatprep.subr.mxu0 0.0
    %1520 = vmatpush1.xpose.msra.mxu0 0.0
    %1521 = vmatprep.subr.mxu0 0.0
    %1522 = vmatpush1.xpose.msra.mxu0 0.0
    %1523 = vmatprep.subr.mxu0 0.0
    %1524 = vmatpush1.xpose.msra.mxu0 0.0
    %1525 = vmatprep.subr.mxu0 0.0
    %1526 = vmatpush1.xpose.msra.mxu0 0.0
    %1527 = vmatprep.subr.mxu0 0.0
    %1528 = vmatpush1.xpose.msra.mxu0 0.0
    %1529 = vmatprep.subr.mxu0 0.0
    %1530 = vmatpush1.xpose.msra.mxu0 0.0
    %1531 = vmatprep.mubr.f32.mxu0 0.0
    %1532 = vmatmul.mubr.f32.gmra.mrb[0].mxu0 %v1462
    %v1533 = vpop.f32.mrb[0].mxu0
    %v1534 = vadd.f32 0.0, %v1533
    %v1535 = vpop.f32.mrb[0].mxu0
    %1536 = vdwg.mxu0
    %v1537 = vsel %vm206, %v1002, -inf
    %1538 = vmax.xlane.f32.xlu0 %v1537
    %v1539 = vpop.xlane.xlu0 %1538
    %v1540 = vsel %vm206, %v1078, -inf
    %1541 = vmax.xlane.f32.xlu0 %v1540
    %v1542 = vpop.xlane.xlu0 %1541
    %v1543 = vsel %vm206, %v1154, -inf
    %1544 = vmax.xlane.f32.xlu0 %v1543
    %v1545 = vpop.xlane.xlu0 %1544
    %v1546 = vsel %vm206, %v1230, -inf
    %1547 = vmax.xlane.f32.xlu0 %v1546
    %v1548 = vpop.xlane.xlu0 %1547
    %v1549 = vsel %vm206, %v1306, -inf
    %1550 = vmax.xlane.f32.xlu0 %v1549
    %v1551 = vpop.xlane.xlu0 %1550
    %v1552 = vsel %vm206, %v1382, -inf
    %1553 = vmax.xlane.f32.xlu0 %v1552
    %v1554 = vpop.xlane.xlu0 %1553
    %v1555 = vsel %vm206, %v1458, -inf
    %1556 = vmax.xlane.f32.xlu0 %v1555
    %v1557 = vpop.xlane.xlu0 %1556
    %v1558 = vsel %vm206, %v1534, -inf
    %1559 = vmax.xlane.f32.xlu0 %v1558
    %v1560 = vpop.xlane.xlu0 %1559
    %v1561 = vsub.f32 %v1002, %v1539
    %v1562 = vsub.f32 %v1078, %v1542
    %v1563 = vsub.f32 %v1154, %v1545
    %v1564 = vsub.f32 %v1230, %v1548
    %v1565 = vsub.f32 %v1306, %v1551
    %v1566 = vsub.f32 %v1382, %v1554
    %v1567 = vsub.f32 %v1458, %v1557
    %v1568 = vsub.f32 %v1534, %v1560
    %v1569 = vmul.f32 %v1561, 1.442695
    %v1570 = vpow.pop %v1569
    %v1571 = vmul.f32 %v1562, 1.442695
    %v1572 = vpow.pop %v1571
    %v1573 = vmul.f32 %v1563, 1.442695
    %v1574 = vpow.pop %v1573
    %v1575 = vmul.f32 %v1564, 1.442695
    %v1576 = vpow.pop %v1575
    %v1577 = vmul.f32 %v1565, 1.442695
    %v1578 = vpow.pop %v1577
    %v1579 = vmul.f32 %v1566, 1.442695
    %v1580 = vpow.pop %v1579
    %v1581 = vmul.f32 %v1567, 1.442695
    %v1582 = vpow.pop %v1581
    %v1583 = vmul.f32 %v1568, 1.442695
    %v1584 = vpow.pop %v1583
    %v1585 = vsel %vm206, %v1570, 0.0
    %1586 = vadd.xlane.f32.xlu0 %v1585
    %v1587 = vpop.xlane.xlu0 %1586
    %v1588 = vsel %vm206, %v1572, 0.0
    %1589 = vadd.xlane.f32.xlu0 %v1588
    %v1590 = vpop.xlane.xlu0 %1589
    %v1591 = vsel %vm206, %v1574, 0.0
    %1592 = vadd.xlane.f32.xlu0 %v1591
    %v1593 = vpop.xlane.xlu0 %1592
    %v1594 = vsel %vm206, %v1576, 0.0
    %1595 = vadd.xlane.f32.xlu0 %v1594
    %v1596 = vpop.xlane.xlu0 %1595
    %v1597 = vsel %vm206, %v1578, 0.0
    %1598 = vadd.xlane.f32.xlu0 %v1597
    %v1599 = vpop.xlane.xlu0 %1598
    %v1600 = vsel %vm206, %v1580, 0.0
    %1601 = vadd.xlane.f32.xlu0 %v1600
    %v1602 = vpop.xlane.xlu0 %1601
    %v1603 = vsel %vm206, %v1582, 0.0
    %1604 = vadd.xlane.f32.xlu0 %v1603
    %v1605 = vpop.xlane.xlu0 %1604
    %v1606 = vsel %vm206, %v1584, 0.0
    %1607 = vadd.xlane.f32.xlu0 %v1606
    %v1608 = vpop.xlane.xlu0 %1607
    %v1609 = vrcp.pop %v1587
    %v1610 = vrcp.pop %v1590
    %v1611 = vrcp.pop %v1593
    %v1612 = vrcp.pop %v1596
    %v1613 = vrcp.pop %v1599
    %v1614 = vrcp.pop %v1602
    %v1615 = vrcp.pop %v1605
    %v1616 = vrcp.pop %v1608
    %v1617 = vmul.f32 %v1570, %v1609
    %v1618 = vmul.f32 %v1572, %v1610
    %v1619 = vmul.f32 %v1574, %v1611
    %v1620 = vmul.f32 %v1576, %v1612
    %v1621 = vmul.f32 %v1578, %v1613
    %v1622 = vmul.f32 %v1580, %v1614
    %v1623 = vmul.f32 %v1582, %v1615
    %v1624 = vmul.f32 %v1584, %v1616
    %v1626 = vsel %vm206, %v1617, 0
    %1628 = vmatprep.subr.mxu0 0.0
    %1629 = vmatpush1.msra.mxu0 %v921
    %1630 = vmatprep.subr.mxu0 0.0
    %1631 = vmatpush1.msra.mxu0 0.0
    %1632 = vmatprep.subr.mxu0 0.0
    %1633 = vmatpush1.msra.mxu0 0.0
    %1634 = vmatprep.subr.mxu0 0.0
    %1635 = vmatpush1.msra.mxu0 0.0
    %1636 = vmatprep.subr.mxu0 0.0
    %1637 = vmatpush1.msra.mxu0 0.0
    %1638 = vmatprep.subr.mxu0 0.0
    %1639 = vmatpush1.msra.mxu0 0.0
    %1640 = vmatprep.subr.mxu0 0.0
    %1641 = vmatpush1.msra.mxu0 0.0
    %1642 = vmatprep.subr.mxu0 0.0
    %1643 = vmatpush1.msra.mxu0 0.0
    %1644 = vmatprep.subr.mxu0 0.0
    %1645 = vmatpush1.msra.mxu0 0.0
    %1646 = vmatprep.subr.mxu0 0.0
    %1647 = vmatpush1.msra.mxu0 0.0
    %1648 = vmatprep.subr.mxu0 0.0
    %1649 = vmatpush1.msra.mxu0 0.0
    %1650 = vmatprep.subr.mxu0 0.0
    %1651 = vmatpush1.msra.mxu0 0.0
    %1652 = vmatprep.subr.mxu0 0.0
    %1653 = vmatpush1.msra.mxu0 0.0
    %1654 = vmatprep.subr.mxu0 0.0
    %1655 = vmatpush1.msra.mxu0 0.0
    %1656 = vmatprep.subr.mxu0 0.0
    %1657 = vmatpush1.msra.mxu0 0.0
    %1658 = vmatprep.subr.mxu0 0.0
    %1659 = vmatpush1.msra.mxu0 0.0
    %1660 = vmatprep.subr.mxu0 0.0
    %1661 = vmatpush1.msra.mxu0 0.0
    %1662 = vmatprep.subr.mxu0 0.0
    %1663 = vmatpush1.msra.mxu0 0.0
    %1664 = vmatprep.subr.mxu0 0.0
    %1665 = vmatpush1.msra.mxu0 0.0
    %1666 = vmatprep.subr.mxu0 0.0
    %1667 = vmatpush1.msra.mxu0 0.0
    %1668 = vmatprep.subr.mxu0 0.0
    %1669 = vmatpush1.msra.mxu0 0.0
    %1670 = vmatprep.subr.mxu0 0.0
    %1671 = vmatpush1.msra.mxu0 0.0
    %1672 = vmatprep.subr.mxu0 0.0
    %1673 = vmatpush1.msra.mxu0 0.0
    %1674 = vmatprep.subr.mxu0 0.0
    %1675 = vmatpush1.msra.mxu0 0.0
    %1676 = vmatprep.subr.mxu0 0.0
    %1677 = vmatpush1.msra.mxu0 0.0
    %1678 = vmatprep.subr.mxu0 0.0
    %1679 = vmatpush1.msra.mxu0 0.0
    %1680 = vmatprep.subr.mxu0 0.0
    %1681 = vmatpush1.msra.mxu0 0.0
    %1682 = vmatprep.subr.mxu0 0.0
    %1683 = vmatpush1.msra.mxu0 0.0
    %1684 = vmatprep.subr.mxu0 0.0
    %1685 = vmatpush1.msra.mxu0 0.0
    %1686 = vmatprep.subr.mxu0 0.0
    %1687 = vmatpush1.msra.mxu0 0.0
    %1688 = vmatprep.subr.mxu0 0.0
    %1689 = vmatpush1.msra.mxu0 0.0
    %1690 = vmatprep.subr.mxu0 0.0
    %1691 = vmatpush1.msra.mxu0 0.0
    %1692 = vmatprep.mubr.f32.mxu0 0.0
    %1693 = vmatmul.mubr.f32.gmra.mrb[0].mxu0 %v1626
    %v1694 = vpop.f32.mrb[0].mxu0
    %v1695 = vadd.f32 0.0, %v1694
    %v1696 = vpop.f32.mrb[0].mxu0
    %1697 = vdwg.mxu0
    %v1699 = vsel %vm206, %v1618, 0
    %1701 = vmatprep.subr.mxu0 0.0
    %1702 = vmatpush1.msra.mxu0 %v922
    %1703 = vmatprep.subr.mxu0 0.0
    %1704 = vmatpush1.msra.mxu0 0.0
    %1705 = vmatprep.subr.mxu0 0.0
    %1706 = vmatpush1.msra.mxu0 0.0
    %1707 = vmatprep.subr.mxu0 0.0
    %1708 = vmatpush1.msra.mxu0 0.0
    %1709 = vmatprep.subr.mxu0 0.0
    %1710 = vmatpush1.msra.mxu0 0.0
    %1711 = vmatprep.subr.mxu0 0.0
    %1712 = vmatpush1.msra.mxu0 0.0
    %1713 = vmatprep.subr.mxu0 0.0
    %1714 = vmatpush1.msra.mxu0 0.0
    %1715 = vmatprep.subr.mxu0 0.0
    %1716 = vmatpush1.msra.mxu0 0.0
    %1717 = vmatprep.subr.mxu0 0.0
    %1718 = vmatpush1.msra.mxu0 0.0
    %1719 = vmatprep.subr.mxu0 0.0
    %1720 = vmatpush1.msra.mxu0 0.0
    %1721 = vmatprep.subr.mxu0 0.0
    %1722 = vmatpush1.msra.mxu0 0.0
    %1723 = vmatprep.subr.mxu0 0.0
    %1724 = vmatpush1.msra.mxu0 0.0
    %1725 = vmatprep.subr.mxu0 0.0
    %1726 = vmatpush1.msra.mxu0 0.0
    %1727 = vmatprep.subr.mxu0 0.0
    %1728 = vmatpush1.msra.mxu0 0.0
    %1729 = vmatprep.subr.mxu0 0.0
    %1730 = vmatpush1.msra.mxu0 0.0
    %1731 = vmatprep.subr.mxu0 0.0
    %1732 = vmatpush1.msra.mxu0 0.0
    %1733 = vmatprep.subr.mxu0 0.0
    %1734 = vmatpush1.msra.mxu0 0.0
    %1735 = vmatprep.subr.mxu0 0.0
    %1736 = vmatpush1.msra.mxu0 0.0
    %1737 = vmatprep.subr.mxu0 0.0
    %1738 = vmatpush1.msra.mxu0 0.0
    %1739 = vmatprep.subr.mxu0 0.0
    %1740 = vmatpush1.msra.mxu0 0.0
    %1741 = vmatprep.subr.mxu0 0.0
    %1742 = vmatpush1.msra.mxu0 0.0
    %1743 = vmatprep.subr.mxu0 0.0
    %1744 = vmatpush1.msra.mxu0 0.0
    %1745 = vmatprep.subr.mxu0 0.0
    %1746 = vmatpush1.msra.mxu0 0.0
    %1747 = vmatprep.subr.mxu0 0.0
    %1748 = vmatpush1.msra.mxu0 0.0
    %1749 = vmatprep.subr.mxu0 0.0
    %1750 = vmatpush1.msra.mxu0 0.0
    %1751 = vmatprep.subr.mxu0 0.0
    %1752 = vmatpush1.msra.mxu0 0.0
    %1753 = vmatprep.subr.mxu0 0.0
    %1754 = vmatpush1.msra.mxu0 0.0
    %1755 = vmatprep.subr.mxu0 0.0
    %1756 = vmatpush1.msra.mxu0 0.0
    %1757 = vmatprep.subr.mxu0 0.0
    %1758 = vmatpush1.msra.mxu0 0.0
    %1759 = vmatprep.subr.mxu0 0.0
    %1760 = vmatpush1.msra.mxu0 0.0
    %1761 = vmatprep.subr.mxu0 0.0
    %1762 = vmatpush1.msra.mxu0 0.0
    %1763 = vmatprep.subr.mxu0 0.0
    %1764 = vmatpush1.msra.mxu0 0.0
    %1765 = vmatprep.mubr.f32.mxu0 0.0
    %1766 = vmatmul.mubr.f32.gmra.mrb[0].mxu0 %v1699
    %v1767 = vpop.f32.mrb[0].mxu0
    %v1768 = vadd.f32 0.0, %v1767
    %v1769 = vpop.f32.mrb[0].mxu0
    %1770 = vdwg.mxu0
    %v1772 = vsel %vm206, %v1619, 0
    %1774 = vmatprep.subr.mxu0 0.0
    %1775 = vmatpush1.msra.mxu0 %v923
    %1776 = vmatprep.subr.mxu0 0.0
    %1777 = vmatpush1.msra.mxu0 0.0
    %1778 = vmatprep.subr.mxu0 0.0
    %1779 = vmatpush1.msra.mxu0 0.0
    %1780 = vmatprep.subr.mxu0 0.0
    %1781 = vmatpush1.msra.mxu0 0.0
    %1782 = vmatprep.subr.mxu0 0.0
    %1783 = vmatpush1.msra.mxu0 0.0
    %1784 = vmatprep.subr.mxu0 0.0
    %1785 = vmatpush1.msra.mxu0 0.0
    %1786 = vmatprep.subr.mxu0 0.0
    %1787 = vmatpush1.msra.mxu0 0.0
    %1788 = vmatprep.subr.mxu0 0.0
    %1789 = vmatpush1.msra.mxu0 0.0
    %1790 = vmatprep.subr.mxu0 0.0
    %1791 = vmatpush1.msra.mxu0 0.0
    %1792 = vmatprep.subr.mxu0 0.0
    %1793 = vmatpush1.msra.mxu0 0.0
    %1794 = vmatprep.subr.mxu0 0.0
    %1795 = vmatpush1.msra.mxu0 0.0
    %1796 = vmatprep.subr.mxu0 0.0
    %1797 = vmatpush1.msra.mxu0 0.0
    %1798 = vmatprep.subr.mxu0 0.0
    %1799 = vmatpush1.msra.mxu0 0.0
    %1800 = vmatprep.subr.mxu0 0.0
    %1801 = vmatpush1.msra.mxu0 0.0
    %1802 = vmatprep.subr.mxu0 0.0
    %1803 = vmatpush1.msra.mxu0 0.0
    %1804 = vmatprep.subr.mxu0 0.0
    %1805 = vmatpush1.msra.mxu0 0.0
    %1806 = vmatprep.subr.mxu0 0.0
    %1807 = vmatpush1.msra.mxu0 0.0
    %1808 = vmatprep.subr.mxu0 0.0
    %1809 = vmatpush1.msra.mxu0 0.0
    %1810 = vmatprep.subr.mxu0 0.0
    %1811 = vmatpush1.msra.mxu0 0.0
    %1812 = vmatprep.subr.mxu0 0.0
    %1813 = vmatpush1.msra.mxu0 0.0
    %1814 = vmatprep.subr.mxu0 0.0
    %1815 = vmatpush1.msra.mxu0 0.0
    %1816 = vmatprep.subr.mxu0 0.0
    %1817 = vmatpush1.msra.mxu0 0.0
    %1818 = vmatprep.subr.mxu0 0.0
    %1819 = vmatpush1.msra.mxu0 0.0
    %1820 = vmatprep.subr.mxu0 0.0
    %1821 = vmatpush1.msra.mxu0 0.0
    %1822 = vmatprep.subr.mxu0 0.0
    %1823 = vmatpush1.msra.mxu0 0.0
    %1824 = vmatprep.subr.mxu0 0.0
    %1825 = vmatpush1.msra.mxu0 0.0
    %1826 = vmatprep.subr.mxu0 0.0
    %1827 = vmatpush1.msra.mxu0 0.0
    %1828 = vmatprep.subr.mxu0 0.0
    %1829 = vmatpush1.msra.mxu0 0.0
    %1830 = vmatprep.subr.mxu0 0.0
    %1831 = vmatpush1.msra.mxu0 0.0
    %1832 = vmatprep.subr.mxu0 0.0
    %1833 = vmatpush1.msra.mxu0 0.0
    %1834 = vmatprep.subr.mxu0 0.0
    %1835 = vmatpush1.msra.mxu0 0.0
    %1836 = vmatprep.subr.mxu0 0.0
    %1837 = vmatpush1.msra.mxu0 0.0
    %1838 = vmatprep.mubr.f32.mxu0 0.0
    %1839 = vmatmul.mubr.f32.gmra.mrb[0].mxu0 %v1772
    %v1840 = vpop.f32.mrb[0].mxu0
    %v1841 = vadd.f32 0.0, %v1840
    %v1842 = vpop.f32.mrb[0].mxu0
    %1843 = vdwg.mxu0
    %v1845 = vsel %vm206, %v1620, 0
    %1847 = vmatprep.subr.mxu0 0.0
    %1848 = vmatpush1.msra.mxu0 %v924
    %1849 = vmatprep.subr.mxu0 0.0
    %1850 = vmatpush1.msra.mxu0 0.0
    %1851 = vmatprep.subr.mxu0 0.0
    %1852 = vmatpush1.msra.mxu0 0.0
    %1853 = vmatprep.subr.mxu0 0.0
    %1854 = vmatpush1.msra.mxu0 0.0
    %1855 = vmatprep.subr.mxu0 0.0
    %1856 = vmatpush1.msra.mxu0 0.0
    %1857 = vmatprep.subr.mxu0 0.0
    %1858 = vmatpush1.msra.mxu0 0.0
    %1859 = vmatprep.subr.mxu0 0.0
    %1860 = vmatpush1.msra.mxu0 0.0
    %1861 = vmatprep.subr.mxu0 0.0
    %1862 = vmatpush1.msra.mxu0 0.0
    %1863 = vmatprep.subr.mxu0 0.0
    %1864 = vmatpush1.msra.mxu0 0.0
    %1865 = vmatprep.subr.mxu0 0.0
    %1866 = vmatpush1.msra.mxu0 0.0
    %1867 = vmatprep.subr.mxu0 0.0
    %1868 = vmatpush1.msra.mxu0 0.0
    %1869 = vmatprep.subr.mxu0 0.0
    %1870 = vmatpush1.msra.mxu0 0.0
    %1871 = vmatprep.subr.mxu0 0.0
    %1872 = vmatpush1.msra.mxu0 0.0
    %1873 = vmatprep.subr.mxu0 0.0
    %1874 = vmatpush1.msra.mxu0 0.0
    %1875 = vmatprep.subr.mxu0 0.0
    %1876 = vmatpush1.msra.mxu0 0.0
    %1877 = vmatprep.subr.mxu0 0.0
    %1878 = vmatpush1.msra.mxu0 0.0
    %1879 = vmatprep.subr.mxu0 0.0
    %1880 = vmatpush1.msra.mxu0 0.0
    %1881 = vmatprep.subr.mxu0 0.0
    %1882 = vmatpush1.msra.mxu0 0.0
    %1883 = vmatprep.subr.mxu0 0.0
    %1884 = vmatpush1.msra.mxu0 0.0
    %1885 = vmatprep.subr.mxu0 0.0
    %1886 = vmatpush1.msra.mxu0 0.0
    %1887 = vmatprep.subr.mxu0 0.0
    %1888 = vmatpush1.msra.mxu0 0.0
    %1889 = vmatprep.subr.mxu0 0.0
    %1890 = vmatpush1.msra.mxu0 0.0
    %1891 = vmatprep.subr.mxu0 0.0
    %1892 = vmatpush1.msra.mxu0 0.0
    %1893 = vmatprep.subr.mxu0 0.0
    %1894 = vmatpush1.msra.mxu0 0.0
    %1895 = vmatprep.subr.mxu0 0.0
    %1896 = vmatpush1.msra.mxu0 0.0
    %1897 = vmatprep.subr.mxu0 0.0
    %1898 = vmatpush1.msra.mxu0 0.0
    %1899 = vmatprep.subr.mxu0 0.0
    %1900 = vmatpush1.msra.mxu0 0.0
    %1901 = vmatprep.subr.mxu0 0.0
    %1902 = vmatpush1.msra.mxu0 0.0
    %1903 = vmatprep.subr.mxu0 0.0
    %1904 = vmatpush1.msra.mxu0 0.0
    %1905 = vmatprep.subr.mxu0 0.0
    %1906 = vmatpush1.msra.mxu0 0.0
    %1907 = vmatprep.subr.mxu0 0.0
    %1908 = vmatpush1.msra.mxu0 0.0
    %1909 = vmatprep.subr.mxu0 0.0
    %1910 = vmatpush1.msra.mxu0 0.0
    %1911 = vmatprep.mubr.f32.mxu0 0.0
    %1912 = vmatmul.mubr.f32.gmra.mrb[0].mxu0 %v1845
    %v1913 = vpop.f32.mrb[0].mxu0
    %v1914 = vadd.f32 0.0, %v1913
    %v1915 = vpop.f32.mrb[0].mxu0
    %1916 = vdwg.mxu0
    %v1918 = vsel %vm206, %v1621, 0
    %1920 = vmatprep.subr.mxu0 0.0
    %1921 = vmatpush1.msra.mxu0 %v925
    %1922 = vmatprep.subr.mxu0 0.0
    %1923 = vmatpush1.msra.mxu0 0.0
    %1924 = vmatprep.subr.mxu0 0.0
    %1925 = vmatpush1.msra.mxu0 0.0
    %1926 = vmatprep.subr.mxu0 0.0
    %1927 = vmatpush1.msra.mxu0 0.0
    %1928 = vmatprep.subr.mxu0 0.0
    %1929 = vmatpush1.msra.mxu0 0.0
    %1930 = vmatprep.subr.mxu0 0.0
    %1931 = vmatpush1.msra.mxu0 0.0
    %1932 = vmatprep.subr.mxu0 0.0
    %1933 = vmatpush1.msra.mxu0 0.0
    %1934 = vmatprep.subr.mxu0 0.0
    %1935 = vmatpush1.msra.mxu0 0.0
    %1936 = vmatprep.subr.mxu0 0.0
    %1937 = vmatpush1.msra.mxu0 0.0
    %1938 = vmatprep.subr.mxu0 0.0
    %1939 = vmatpush1.msra.mxu0 0.0
    %1940 = vmatprep.subr.mxu0 0.0
    %1941 = vmatpush1.msra.mxu0 0.0
    %1942 = vmatprep.subr.mxu0 0.0
    %1943 = vmatpush1.msra.mxu0 0.0
    %1944 = vmatprep.subr.mxu0 0.0
    %1945 = vmatpush1.msra.mxu0 0.0
    %1946 = vmatprep.subr.mxu0 0.0
    %1947 = vmatpush1.msra.mxu0 0.0
    %1948 = vmatprep.subr.mxu0 0.0
    %1949 = vmatpush1.msra.mxu0 0.0
    %1950 = vmatprep.subr.mxu0 0.0
    %1951 = vmatpush1.msra.mxu0 0.0
    %1952 = vmatprep.subr.mxu0 0.0
    %1953 = vmatpush1.msra.mxu0 0.0
    %1954 = vmatprep.subr.mxu0 0.0
    %1955 = vmatpush1.msra.mxu0 0.0
    %1956 = vmatprep.subr.mxu0 0.0
    %1957 = vmatpush1.msra.mxu0 0.0
    %1958 = vmatprep.subr.mxu0 0.0
    %1959 = vmatpush1.msra.mxu0 0.0
    %1960 = vmatprep.subr.mxu0 0.0
    %1961 = vmatpush1.msra.mxu0 0.0
    %1962 = vmatprep.subr.mxu0 0.0
    %1963 = vmatpush1.msra.mxu0 0.0
    %1964 = vmatprep.subr.mxu0 0.0
    %1965 = vmatpush1.msra.mxu0 0.0
    %1966 = vmatprep.subr.mxu0 0.0
    %1967 = vmatpush1.msra.mxu0 0.0
    %1968 = vmatprep.subr.mxu0 0.0
    %1969 = vmatpush1.msra.mxu0 0.0
    %1970 = vmatprep.subr.mxu0 0.0
    %1971 = vmatpush1.msra.mxu0 0.0
    %1972 = vmatprep.subr.mxu0 0.0
    %1973 = vmatpush1.msra.mxu0 0.0
    %1974 = vmatprep.subr.mxu0 0.0
    %1975 = vmatpush1.msra.mxu0 0.0
    %1976 = vmatprep.subr.mxu0 0.0
    %1977 = vmatpush1.msra.mxu0 0.0
    %1978 = vmatprep.subr.mxu0 0.0
    %1979 = vmatpush1.msra.mxu0 0.0
    %1980 = vmatprep.subr.mxu0 0.0
    %1981 = vmatpush1.msra.mxu0 0.0
    %1982 = vmatprep.subr.mxu0 0.0
    %1983 = vmatpush1.msra.mxu0 0.0
    %1984 = vmatprep.mubr.f32.mxu0 0.0
    %1985 = vmatmul.mubr.f32.gmra.mrb[0].mxu0 %v1918
    %v1986 = vpop.f32.mrb[0].mxu0
    %v1987 = vadd.f32 0.0, %v1986
    %v1988 = vpop.f32.mrb[0].mxu0
    %1989 = vdwg.mxu0
    %v1991 = vsel %vm206, %v1622, 0
    %1993 = vmatprep.subr.mxu0 0.0
    %1994 = vmatpush1.msra.mxu0 %v926
    %1995 = vmatprep.subr.mxu0 0.0
    %1996 = vmatpush1.msra.mxu0 0.0
    %1997 = vmatprep.subr.mxu0 0.0
    %1998 = vmatpush1.msra.mxu0 0.0
    %1999 = vmatprep.subr.mxu0 0.0
    %2000 = vmatpush1.msra.mxu0 0.0
    %2001 = vmatprep.subr.mxu0 0.0
    %2002 = vmatpush1.msra.mxu0 0.0
    %2003 = vmatprep.subr.mxu0 0.0
    %2004 = vmatpush1.msra.mxu0 0.0
    %2005 = vmatprep.subr.mxu0 0.0
    %2006 = vmatpush1.msra.mxu0 0.0
    %2007 = vmatprep.subr.mxu0 0.0
    %2008 = vmatpush1.msra.mxu0 0.0
    %2009 = vmatprep.subr.mxu0 0.0
    %2010 = vmatpush1.msra.mxu0 0.0
    %2011 = vmatprep.subr.mxu0 0.0
    %2012 = vmatpush1.msra.mxu0 0.0
    %2013 = vmatprep.subr.mxu0 0.0
    %2014 = vmatpush1.msra.mxu0 0.0
    %2015 = vmatprep.subr.mxu0 0.0
    %2016 = vmatpush1.msra.mxu0 0.0
    %2017 = vmatprep.subr.mxu0 0.0
    %2018 = vmatpush1.msra.mxu0 0.0
    %2019 = vmatprep.subr.mxu0 0.0
    %2020 = vmatpush1.msra.mxu0 0.0
    %2021 = vmatprep.subr.mxu0 0.0
    %2022 = vmatpush1.msra.mxu0 0.0
    %2023 = vmatprep.subr.mxu0 0.0
    %2024 = vmatpush1.msra.mxu0 0.0
    %2025 = vmatprep.subr.mxu0 0.0
    %2026 = vmatpush1.msra.mxu0 0.0
    %2027 = vmatprep.subr.mxu0 0.0
    %2028 = vmatpush1.msra.mxu0 0.0
    %2029 = vmatprep.subr.mxu0 0.0
    %2030 = vmatpush1.msra.mxu0 0.0
    %2031 = vmatprep.subr.mxu0 0.0
    %2032 = vmatpush1.msra.mxu0 0.0
    %2033 = vmatprep.subr.mxu0 0.0
    %2034 = vmatpush1.msra.mxu0 0.0
    %2035 = vmatprep.subr.mxu0 0.0
    %2036 = vmatpush1.msra.mxu0 0.0
    %2037 = vmatprep.subr.mxu0 0.0
    %2038 = vmatpush1.msra.mxu0 0.0
    %2039 = vmatprep.subr.mxu0 0.0
    %2040 = vmatpush1.msra.mxu0 0.0
    %2041 = vmatprep.subr.mxu0 0.0
    %2042 = vmatpush1.msra.mxu0 0.0
    %2043 = vmatprep.subr.mxu0 0.0
    %2044 = vmatpush1.msra.mxu0 0.0
    %2045 = vmatprep.subr.mxu0 0.0
    %2046 = vmatpush1.msra.mxu0 0.0
    %2047 = vmatprep.subr.mxu0 0.0
    %2048 = vmatpush1.msra.mxu0 0.0
    %2049 = vmatprep.subr.mxu0 0.0
    %2050 = vmatpush1.msra.mxu0 0.0
    %2051 = vmatprep.subr.mxu0 0.0
    %2052 = vmatpush1.msra.mxu0 0.0
    %2053 = vmatprep.subr.mxu0 0.0
    %2054 = vmatpush1.msra.mxu0 0.0
    %2055 = vmatprep.subr.mxu0 0.0
    %2056 = vmatpush1.msra.mxu0 0.0
    %2057 = vmatprep.mubr.f32.mxu0 0.0
    %2058 = vmatmul.mubr.f32.gmra.mrb[0].mxu0 %v1991
    %v2059 = vpop.f32.mrb[0].mxu0
    %v2060 = vadd.f32 0.0, %v2059
    %v2061 = vpop.f32.mrb[0].mxu0
    %2062 = vdwg.mxu0
    %v2064 = vsel %vm206, %v1623, 0
    %2066 = vmatprep.subr.mxu0 0.0
    %2067 = vmatpush1.msra.mxu0 %v927
    %2068 = vmatprep.subr.mxu0 0.0
    %2069 = vmatpush1.msra.mxu0 0.0
    %2070 = vmatprep.subr.mxu0 0.0
    %2071 = vmatpush1.msra.mxu0 0.0
    %2072 = vmatprep.subr.mxu0 0.0
    %2073 = vmatpush1.msra.mxu0 0.0
    %2074 = vmatprep.subr.mxu0 0.0
    %2075 = vmatpush1.msra.mxu0 0.0
    %2076 = vmatprep.subr.mxu0 0.0
    %2077 = vmatpush1.msra.mxu0 0.0
    %2078 = vmatprep.subr.mxu0 0.0
    %2079 = vmatpush1.msra.mxu0 0.0
    %2080 = vmatprep.subr.mxu0 0.0
    %2081 = vmatpush1.msra.mxu0 0.0
    %2082 = vmatprep.subr.mxu0 0.0
    %2083 = vmatpush1.msra.mxu0 0.0
    %2084 = vmatprep.subr.mxu0 0.0
    %2085 = vmatpush1.msra.mxu0 0.0
    %2086 = vmatprep.subr.mxu0 0.0
    %2087 = vmatpush1.msra.mxu0 0.0
    %2088 = vmatprep.subr.mxu0 0.0
    %2089 = vmatpush1.msra.mxu0 0.0
    %2090 = vmatprep.subr.mxu0 0.0
    %2091 = vmatpush1.msra.mxu0 0.0
    %2092 = vmatprep.subr.mxu0 0.0
    %2093 = vmatpush1.msra.mxu0 0.0
    %2094 = vmatprep.subr.mxu0 0.0
    %2095 = vmatpush1.msra.mxu0 0.0
    %2096 = vmatprep.subr.mxu0 0.0
    %2097 = vmatpush1.msra.mxu0 0.0
    %2098 = vmatprep.subr.mxu0 0.0
    %2099 = vmatpush1.msra.mxu0 0.0
    %2100 = vmatprep.subr.mxu0 0.0
    %2101 = vmatpush1.msra.mxu0 0.0
    %2102 = vmatprep.subr.mxu0 0.0
    %2103 = vmatpush1.msra.mxu0 0.0
    %2104 = vmatprep.subr.mxu0 0.0
    %2105 = vmatpush1.msra.mxu0 0.0
    %2106 = vmatprep.subr.mxu0 0.0
    %2107 = vmatpush1.msra.mxu0 0.0
    %2108 = vmatprep.subr.mxu0 0.0
    %2109 = vmatpush1.msra.mxu0 0.0
    %2110 = vmatprep.subr.mxu0 0.0
    %2111 = vmatpush1.msra.mxu0 0.0
    %2112 = vmatprep.subr.mxu0 0.0
    %2113 = vmatpush1.msra.mxu0 0.0
    %2114 = vmatprep.subr.mxu0 0.0
    %2115 = vmatpush1.msra.mxu0 0.0
    %2116 = vmatprep.subr.mxu0 0.0
    %2117 = vmatpush1.msra.mxu0 0.0
    %2118 = vmatprep.subr.mxu0 0.0
    %2119 = vmatpush1.msra.mxu0 0.0
    %2120 = vmatprep.subr.mxu0 0.0
    %2121 = vmatpush1.msra.mxu0 0.0
    %2122 = vmatprep.subr.mxu0 0.0
    %2123 = vmatpush1.msra.mxu0 0.0
    %2124 = vmatprep.subr.mxu0 0.0
    %2125 = vmatpush1.msra.mxu0 0.0
    %2126 = vmatprep.subr.mxu0 0.0
    %2127 = vmatpush1.msra.mxu0 0.0
    %2128 = vmatprep.subr.mxu0 0.0
    %2129 = vmatpush1.msra.mxu0 0.0
    %2130 = vmatprep.mubr.f32.mxu0 0.0
    %2131 = vmatmul.mubr.f32.gmra.mrb[0].mxu0 %v2064
    %v2132 = vpop.f32.mrb[0].mxu0
    %v2133 = vadd.f32 0.0, %v2132
    %v2134 = vpop.f32.mrb[0].mxu0
    %2135 = vdwg.mxu0
    %v2137 = vsel %vm206, %v1624, 0
    %2139 = vmatprep.subr.mxu0 0.0
    %2140 = vmatpush1.msra.mxu0 %v928
    %2141 = vmatprep.subr.mxu0 0.0
    %2142 = vmatpush1.msra.mxu0 0.0
    %2143 = vmatprep.subr.mxu0 0.0
    %2144 = vmatpush1.msra.mxu0 0.0
    %2145 = vmatprep.subr.mxu0 0.0
    %2146 = vmatpush1.msra.mxu0 0.0
    %2147 = vmatprep.subr.mxu0 0.0
    %2148 = vmatpush1.msra.mxu0 0.0
    %2149 = vmatprep.subr.mxu0 0.0
    %2150 = vmatpush1.msra.mxu0 0.0
    %2151 = vmatprep.subr.mxu0 0.0
    %2152 = vmatpush1.msra.mxu0 0.0
    %2153 = vmatprep.subr.mxu0 0.0
    %2154 = vmatpush1.msra.mxu0 0.0
    %2155 = vmatprep.subr.mxu0 0.0
    %2156 = vmatpush1.msra.mxu0 0.0
    %2157 = vmatprep.subr.mxu0 0.0
    %2158 = vmatpush1.msra.mxu0 0.0
    %2159 = vmatprep.subr.mxu0 0.0
    %2160 = vmatpush1.msra.mxu0 0.0
    %2161 = vmatprep.subr.mxu0 0.0
    %2162 = vmatpush1.msra.mxu0 0.0
    %2163 = vmatprep.subr.mxu0 0.0
    %2164 = vmatpush1.msra.mxu0 0.0
    %2165 = vmatprep.subr.mxu0 0.0
    %2166 = vmatpush1.msra.mxu0 0.0
    %2167 = vmatprep.subr.mxu0 0.0
    %2168 = vmatpush1.msra.mxu0 0.0
    %2169 = vmatprep.subr.mxu0 0.0
    %2170 = vmatpush1.msra.mxu0 0.0
    %2171 = vmatprep.subr.mxu0 0.0
    %2172 = vmatpush1.msra.mxu0 0.0
    %2173 = vmatprep.subr.mxu0 0.0
    %2174 = vmatpush1.msra.mxu0 0.0
    %2175 = vmatprep.subr.mxu0 0.0
    %2176 = vmatpush1.msra.mxu0 0.0
    %2177 = vmatprep.subr.mxu0 0.0
    %2178 = vmatpush1.msra.mxu0 0.0
    %2179 = vmatprep.subr.mxu0 0.0
    %2180 = vmatpush1.msra.mxu0 0.0
    %2181 = vmatprep.subr.mxu0 0.0
    %2182 = vmatpush1.msra.mxu0 0.0
    %2183 = vmatprep.subr.mxu0 0.0
    %2184 = vmatpush1.msra.mxu0 0.0
    %2185 = vmatprep.subr.mxu0 0.0
    %2186 = vmatpush1.msra.mxu0 0.0
    %2187 = vmatprep.subr.mxu0 0.0
    %2188 = vmatpush1.msra.mxu0 0.0
    %2189 = vmatprep.subr.mxu0 0.0
    %2190 = vmatpush1.msra.mxu0 0.0
    %2191 = vmatprep.subr.mxu0 0.0
    %2192 = vmatpush1.msra.mxu0 0.0
    %2193 = vmatprep.subr.mxu0 0.0
    %2194 = vmatpush1.msra.mxu0 0.0
    %2195 = vmatprep.subr.mxu0 0.0
    %2196 = vmatpush1.msra.mxu0 0.0
    %2197 = vmatprep.subr.mxu0 0.0
    %2198 = vmatpush1.msra.mxu0 0.0
    %2199 = vmatprep.subr.mxu0 0.0
    %2200 = vmatpush1.msra.mxu0 0.0
    %2201 = vmatprep.subr.mxu0 0.0
    %2202 = vmatpush1.msra.mxu0 0.0
    %2203 = vmatprep.mubr.f32.mxu0 0.0
    %2204 = vmatmul.mubr.f32.gmra.mrb[0].mxu0 %v2137
    %v2205 = vpop.f32.mrb[0].mxu0
    %v2206 = vadd.f32 0.0, %v2205
    %v2207 = vpop.f32.mrb[0].mxu0
    %2208 = vdwg.mxu0
    %2209 = vst.msk [vmem:[#allocation2] sm:$0xff] %vm206, %v1695
    %2211 = vrot.lane.b32.xlu0 %v1768, 8
    %v2212 = vpop.permute.xlu0 %2211
    %vm2214 = vcmask 130112
    %2215 = vst.msk [vmem:[#allocation2] sm:$0xff] %vm2214, %v2212
    %2217 = vrot.lane.b32.xlu0 %v1841, 16
    %v2218 = vpop.permute.xlu0 %2217
    %vm2220 = vcmask 195712
    %2221 = vst.msk [vmem:[#allocation2] sm:$0xff] %vm2220, %v2218
    %2223 = vrot.lane.b32.xlu0 %v1914, 24
    %v2224 = vpop.permute.xlu0 %2223
    %vm2226 = vcmask 261312
    %2227 = vst.msk [vmem:[#allocation2] sm:$0xff] %vm2226, %v2224
    %2229 = vrot.lane.b32.xlu0 %v1987, 32
    %v2230 = vpop.permute.xlu0 %2229
    %vm2232 = vcmask 326912
    %2233 = vst.msk [vmem:[#allocation2] sm:$0xff] %vm2232, %v2230
    %2235 = vrot.lane.b32.xlu0 %v2060, 40
    %v2236 = vpop.permute.xlu0 %2235
    %vm2238 = vcmask 392512
    %2239 = vst.msk [vmem:[#allocation2] sm:$0xff] %vm2238, %v2236
    %2241 = vrot.lane.b32.xlu0 %v2133, 48
    %v2242 = vpop.permute.xlu0 %2241
    %vm2244 = vcmask 458112
    %2245 = vst.msk [vmem:[#allocation2] sm:$0xff] %vm2244, %v2242
    %2247 = vrot.lane.b32.xlu0 %v2206, 56
    %v2248 = vpop.permute.xlu0 %2247
    %vm2250 = vcmask 523712
    %2251 = vst.msk [vmem:[#allocation2] sm:$0xff] %vm2250, %v2248
    %2252 = vst.msk [vmem:[#allocation3] sm:$0xff] %vm206, %v205
    %v2254 = vcombine.high %v200, %v200
    %v2256 = vunpack.c.l.s4 1966171168
    %v2257 = vunpack.c.0.s8 %v2256
    %v2258 = vlaneseq
    %v2259 = vshrl.u32 %v2258, 7
    %v2260 = vsub.s32 %v2257, %v2259
    %v2261 = vrot.slane %v200, %v2260
    %v2263 = vunpack.c.l.s4 1966171168
    %v2264 = vunpack.c.0.s8 %v2263
    %v2265 = vlaneseq
    %v2266 = vshrl.u32 %v2265, 7
    %v2267 = vsub.s32 %v2264, %v2266
    %v2268 = vrot.slane %v2254, %v2267
    %v2269 = vcombine.high %v2261, %v2261
    %v2270 = vcombine.high %v2268, %v2268
    %v2272 = vunpack.c.l.s4 1966171168
    %v2273 = vunpack.c.0.s8 %v2272
    %v2274 = vlaneseq
    %v2275 = vshrl.u32 %v2274, 7
    %v2276 = vsub.s32 %v2273, %v2275
    %v2277 = vrot.slane %v2261, %v2276
    %v2279 = vunpack.c.l.s4 1966171168
    %v2280 = vunpack.c.0.s8 %v2279
    %v2281 = vlaneseq
    %v2282 = vshrl.u32 %v2281, 7
    %v2283 = vsub.s32 %v2280, %v2282
    %v2284 = vrot.slane %v2268, %v2283
    %v2286 = vunpack.c.l.s4 1966171168
    %v2287 = vunpack.c.0.s8 %v2286
    %v2288 = vlaneseq
    %v2289 = vshrl.u32 %v2288, 7
    %v2290 = vsub.s32 %v2287, %v2289
    %v2291 = vrot.slane %v2269, %v2290
    %v2293 = vunpack.c.l.s4 1966171168
    %v2294 = vunpack.c.0.s8 %v2293
    %v2295 = vlaneseq
    %v2296 = vshrl.u32 %v2295, 7
    %v2297 = vsub.s32 %v2294, %v2296
    %v2298 = vrot.slane %v2270, %v2297
    %v2299 = vcombine.high %v2277, %v2277
    %v2300 = vcombine.high %v2284, %v2284
    %v2301 = vcombine.high %v2291, %v2291
    %v2302 = vcombine.high %v2298, %v2298
    %v2303 = vlaneseq
    %v2304 = vshrl.u32 %v2303, 7
    %v2305 = vsub.s32 0, %v2304
    %v2306 = vrot.slane %v2277, %v2305
    %v2307 = vlaneseq
    %v2308 = vshrl.u32 %v2307, 7
    %v2309 = vsub.s32 0, %v2308
    %v2310 = vrot.slane %v2291, %v2309
    %v2311 = vlaneseq
    %v2312 = vshrl.u32 %v2311, 7
    %v2313 = vsub.s32 0, %v2312
    %v2314 = vrot.slane %v2299, %v2313
    %v2315 = vlaneseq
    %v2316 = vshrl.u32 %v2315, 7
    %v2317 = vsub.s32 0, %v2316
    %v2318 = vrot.slane %v2301, %v2317
    %v2319 = vlaneseq
    %v2320 = vshrl.u32 %v2319, 7
    %v2321 = vsub.s32 0, %v2320
    %v2322 = vrot.slane %v2284, %v2321
    %v2323 = vlaneseq
    %v2324 = vshrl.u32 %v2323, 7
    %v2325 = vsub.s32 0, %v2324
    %v2326 = vrot.slane %v2298, %v2325
    %v2327 = vlaneseq
    %v2328 = vshrl.u32 %v2327, 7
    %v2329 = vsub.s32 0, %v2328
    %v2330 = vrot.slane %v2300, %v2329
    %v2331 = vlaneseq
    %v2332 = vshrl.u32 %v2331, 7
    %v2333 = vsub.s32 0, %v2332
    %v2334 = vrot.slane %v2302, %v2333
    %2335 = vrot.lane.b32.xlu0 %v2306, 64
    %v2336 = vpop.permute.xlu0 %2335
    %2337 = vrot.lane.b32.xlu0 %v2310, 64
    %v2338 = vpop.permute.xlu0 %2337
    %2339 = vrot.lane.b32.xlu0 %v2314, 64
    %v2340 = vpop.permute.xlu0 %2339
    %2341 = vrot.lane.b32.xlu0 %v2318, 64
    %v2342 = vpop.permute.xlu0 %2341
    %2343 = vrot.lane.b32.xlu0 %v2322, 64
    %v2344 = vpop.permute.xlu0 %2343
    %2345 = vrot.lane.b32.xlu0 %v2326, 64
    %v2346 = vpop.permute.xlu0 %2345
    %2347 = vrot.lane.b32.xlu0 %v2330, 64
    %v2348 = vpop.permute.xlu0 %2347
    %2349 = vrot.lane.b32.xlu0 %v2334, 64
    %v2350 = vpop.permute.xlu0 %2349
    %2359 = vst.msk [vmem:[#allocation4] sm:$0x1] %vm314, %v2336
    %2360 = vst.msk [vmem:[#allocation4 + $0x8] sm:$0x1] %vm314, %v2338
    %2361 = vst.msk [vmem:[#allocation4 + $0x10] sm:$0x1] %vm314, %v2340
    %2362 = vst.msk [vmem:[#allocation4 + $0x18] sm:$0x1] %vm314, %v2342
    %2363 = vst.msk [vmem:[#allocation4 + $0x20] sm:$0x1] %vm314, %v2344
    %2364 = vst.msk [vmem:[#allocation4 + $0x28] sm:$0x1] %vm314, %v2346
    %2365 = vst.msk [vmem:[#allocation4 + $0x30] sm:$0x1] %vm314, %v2348
    %2366 = vst.msk [vmem:[#allocation4 + $0x38] sm:$0x1] %vm314, %v2350
    %v2368 = vcombine.high %v202, %v202
    %v2370 = vunpack.c.l.s4 1966171168
    %v2371 = vunpack.c.0.s8 %v2370
    %v2372 = vlaneseq
    %v2373 = vshrl.u32 %v2372, 7
    %v2374 = vsub.s32 %v2371, %v2373
    %v2375 = vrot.slane %v202, %v2374
    %v2377 = vunpack.c.l.s4 1966171168
    %v2378 = vunpack.c.0.s8 %v2377
    %v2379 = vlaneseq
    %v2380 = vshrl.u32 %v2379, 7
    %v2381 = vsub.s32 %v2378, %v2380
    %v2382 = vrot.slane %v2368, %v2381
    %v2383 = vcombine.high %v2375, %v2375
    %v2384 = vcombine.high %v2382, %v2382
    %v2386 = vunpack.c.l.s4 1966171168
    %v2387 = vunpack.c.0.s8 %v2386
    %v2388 = vlaneseq
    %v2389 = vshrl.u32 %v2388, 7
    %v2390 = vsub.s32 %v2387, %v2389
    %v2391 = vrot.slane %v2375, %v2390
    %v2393 = vunpack.c.l.s4 1966171168
    %v2394 = vunpack.c.0.s8 %v2393
    %v2395 = vlaneseq
    %v2396 = vshrl.u32 %v2395, 7
    %v2397 = vsub.s32 %v2394, %v2396
    %v2398 = vrot.slane %v2382, %v2397
    %v2400 = vunpack.c.l.s4 1966171168
    %v2401 = vunpack.c.0.s8 %v2400
    %v2402 = vlaneseq
    %v2403 = vshrl.u32 %v2402, 7
    %v2404 = vsub.s32 %v2401, %v2403
    %v2405 = vrot.slane %v2383, %v2404
    %v2407 = vunpack.c.l.s4 1966171168
    %v2408 = vunpack.c.0.s8 %v2407
    %v2409 = vlaneseq
    %v2410 = vshrl.u32 %v2409, 7
    %v2411 = vsub.s32 %v2408, %v2410
    %v2412 = vrot.slane %v2384, %v2411
    %v2413 = vcombine.high %v2391, %v2391
    %v2414 = vcombine.high %v2398, %v2398
    %v2415 = vcombine.high %v2405, %v2405
    %v2416 = vcombine.high %v2412, %v2412
    %2425 = vst.msk [vmem:[#allocation5] sm:$0x1] %vm314, %v2391
    %2426 = vst.msk [vmem:[#allocation5 + $0x8] sm:$0x1] %vm314, %v2405
    %2427 = vst.msk [vmem:[#allocation5 + $0x10] sm:$0x1] %vm314, %v2413
    %2428 = vst.msk [vmem:[#allocation5 + $0x18] sm:$0x1] %vm314, %v2415
    %2429 = vst.msk [vmem:[#allocation5 + $0x20] sm:$0x1] %vm314, %v2398
    %2430 = vst.msk [vmem:[#allocation5 + $0x28] sm:$0x1] %vm314, %v2412
    %2431 = vst.msk [vmem:[#allocation5 + $0x30] sm:$0x1] %vm314, %v2414
    %2432 = vst.msk [vmem:[#allocation5 + $0x38] sm:$0x1] %vm314, %v2416
    %2434 = vrot.lane.b32.xlu0 %v205, 120
    %v2435 = vpop.permute.xlu0 %2434
    %2437 = vst.msk [vmem:[%s393] sm:$0xff] %vm206, %v2435
    %2438 = vrot.lane.b32.xlu0 %v2306, 56
    %v2439 = vpop.permute.xlu0 %2438
    %2440 = vrot.lane.b32.xlu0 %v2310, 56
    %v2441 = vpop.permute.xlu0 %2440
    %2442 = vrot.lane.b32.xlu0 %v2314, 56
    %v2443 = vpop.permute.xlu0 %2442
    %2444 = vrot.lane.b32.xlu0 %v2318, 56
    %v2445 = vpop.permute.xlu0 %2444
    %2446 = vrot.lane.b32.xlu0 %v2322, 56
    %v2447 = vpop.permute.xlu0 %2446
    %2448 = vrot.lane.b32.xlu0 %v2326, 56
    %v2449 = vpop.permute.xlu0 %2448
    %2450 = vrot.lane.b32.xlu0 %v2330, 56
    %v2451 = vpop.permute.xlu0 %2450
    %2452 = vrot.lane.b32.xlu0 %v2334, 56
    %v2453 = vpop.permute.xlu0 %2452
    %2462 = vst.msk [vmem:[#allocation4 + $0x1] sm:$0x1] %vm314, %v2439
    %2463 = vst.msk [vmem:[#allocation4 + $0x9] sm:$0x1] %vm314, %v2441
    %2464 = vst.msk [vmem:[#allocation4 + $0x11] sm:$0x1] %vm314, %v2443
    %2465 = vst.msk [vmem:[#allocation4 + $0x19] sm:$0x1] %vm314, %v2445
    %2466 = vst.msk [vmem:[#allocation4 + $0x21] sm:$0x1] %vm314, %v2447
    %2467 = vst.msk [vmem:[#allocation4 + $0x29] sm:$0x1] %vm314, %v2449
    %2468 = vst.msk [vmem:[#allocation4 + $0x31] sm:$0x1] %vm314, %v2451
    %2469 = vst.msk [vmem:[#allocation4 + $0x39] sm:$0x1] %vm314, %v2453
    %v2470 = vlaneseq
    %v2471 = vshrl.u32 %v2470, 7
    %v2472 = vsub.s32 0, %v2471
    %v2473 = vrot.slane %v2391, %v2472
    %v2474 = vlaneseq
    %v2475 = vshrl.u32 %v2474, 7
    %v2476 = vsub.s32 0, %v2475
    %v2477 = vrot.slane %v2405, %v2476
    %v2478 = vlaneseq
    %v2479 = vshrl.u32 %v2478, 7
    %v2480 = vsub.s32 0, %v2479
    %v2481 = vrot.slane %v2413, %v2480
    %v2482 = vlaneseq
    %v2483 = vshrl.u32 %v2482, 7
    %v2484 = vsub.s32 0, %v2483
    %v2485 = vrot.slane %v2415, %v2484
    %v2486 = vlaneseq
    %v2487 = vshrl.u32 %v2486, 7
    %v2488 = vsub.s32 0, %v2487
    %v2489 = vrot.slane %v2398, %v2488
    %v2490 = vlaneseq
    %v2491 = vshrl.u32 %v2490, 7
    %v2492 = vsub.s32 0, %v2491
    %v2493 = vrot.slane %v2412, %v2492
    %v2494 = vlaneseq
    %v2495 = vshrl.u32 %v2494, 7
    %v2496 = vsub.s32 0, %v2495
    %v2497 = vrot.slane %v2414, %v2496
    %v2498 = vlaneseq
    %v2499 = vshrl.u32 %v2498, 7
    %v2500 = vsub.s32 0, %v2499
    %v2501 = vrot.slane %v2416, %v2500
    %2502 = vrot.lane.b32.xlu0 %v2473, 120
    %v2503 = vpop.permute.xlu0 %2502
    %2504 = vrot.lane.b32.xlu0 %v2477, 120
    %v2505 = vpop.permute.xlu0 %2504
    %2506 = vrot.lane.b32.xlu0 %v2481, 120
    %v2507 = vpop.permute.xlu0 %2506
    %2508 = vrot.lane.b32.xlu0 %v2485, 120
    %v2509 = vpop.permute.xlu0 %2508
    %2510 = vrot.lane.b32.xlu0 %v2489, 120
    %v2511 = vpop.permute.xlu0 %2510
    %2512 = vrot.lane.b32.xlu0 %v2493, 120
    %v2513 = vpop.permute.xlu0 %2512
    %2514 = vrot.lane.b32.xlu0 %v2497, 120
    %v2515 = vpop.permute.xlu0 %2514
    %2516 = vrot.lane.b32.xlu0 %v2501, 120
    %v2517 = vpop.permute.xlu0 %2516
    %2526 = vst.msk [vmem:[#allocation5 + $0x1] sm:$0x1] %vm314, %v2503
    %2527 = vst.msk [vmem:[#allocation5 + $0x9] sm:$0x1] %vm314, %v2505
    %2528 = vst.msk [vmem:[#allocation5 + $0x11] sm:$0x1] %vm314, %v2507
    %2529 = vst.msk [vmem:[#allocation5 + $0x19] sm:$0x1] %vm314, %v2509
    %2530 = vst.msk [vmem:[#allocation5 + $0x21] sm:$0x1] %vm314, %v2511
    %2531 = vst.msk [vmem:[#allocation5 + $0x29] sm:$0x1] %vm314, %v2513
    %2532 = vst.msk [vmem:[#allocation5 + $0x31] sm:$0x1] %vm314, %v2515
    %2533 = vst.msk [vmem:[#allocation5 + $0x39] sm:$0x1] %vm314, %v2517
    %2534 = vrot.lane.b32.xlu0 %v205, 112
    %v2535 = vpop.permute.xlu0 %2534
    %2537 = vst.msk [vmem:[%s494] sm:$0xff] %vm206, %v2535
    %2538 = vrot.lane.b32.xlu0 %v2306, 48
    %v2539 = vpop.permute.xlu0 %2538
    %2540 = vrot.lane.b32.xlu0 %v2310, 48
    %v2541 = vpop.permute.xlu0 %2540
    %2542 = vrot.lane.b32.xlu0 %v2314, 48
    %v2543 = vpop.permute.xlu0 %2542
    %2544 = vrot.lane.b32.xlu0 %v2318, 48
    %v2545 = vpop.permute.xlu0 %2544
    %2546 = vrot.lane.b32.xlu0 %v2322, 48
    %v2547 = vpop.permute.xlu0 %2546
    %2548 = vrot.lane.b32.xlu0 %v2326, 48
    %v2549 = vpop.permute.xlu0 %2548
    %2550 = vrot.lane.b32.xlu0 %v2330, 48
    %v2551 = vpop.permute.xlu0 %2550
    %2552 = vrot.lane.b32.xlu0 %v2334, 48
    %v2553 = vpop.permute.xlu0 %2552
    %2562 = vst.msk [vmem:[#allocation4 + $0x2] sm:$0x1] %vm314, %v2539
    %2563 = vst.msk [vmem:[#allocation4 + $0xa] sm:$0x1] %vm314, %v2541
    %2564 = vst.msk [vmem:[#allocation4 + $0x12] sm:$0x1] %vm314, %v2543
    %2565 = vst.msk [vmem:[#allocation4 + $0x1a] sm:$0x1] %vm314, %v2545
    %2566 = vst.msk [vmem:[#allocation4 + $0x22] sm:$0x1] %vm314, %v2547
    %2567 = vst.msk [vmem:[#allocation4 + $0x2a] sm:$0x1] %vm314, %v2549
    %2568 = vst.msk [vmem:[#allocation4 + $0x32] sm:$0x1] %vm314, %v2551
    %2569 = vst.msk [vmem:[#allocation4 + $0x3a] sm:$0x1] %vm314, %v2553
    %2570 = vrot.lane.b32.xlu0 %v2473, 112
    %v2571 = vpop.permute.xlu0 %2570
    %2572 = vrot.lane.b32.xlu0 %v2477, 112
    %v2573 = vpop.permute.xlu0 %2572
    %2574 = vrot.lane.b32.xlu0 %v2481, 112
    %v2575 = vpop.permute.xlu0 %2574
    %2576 = vrot.lane.b32.xlu0 %v2485, 112
    %v2577 = vpop.permute.xlu0 %2576
    %2578 = vrot.lane.b32.xlu0 %v2489, 112
    %v2579 = vpop.permute.xlu0 %2578
    %2580 = vrot.lane.b32.xlu0 %v2493, 112
    %v2581 = vpop.permute.xlu0 %2580
    %2582 = vrot.lane.b32.xlu0 %v2497, 112
    %v2583 = vpop.permute.xlu0 %2582
    %2584 = vrot.lane.b32.xlu0 %v2501, 112
    %v2585 = vpop.permute.xlu0 %2584
    %2594 = vst.msk [vmem:[#allocation5 + $0x2] sm:$0x1] %vm314, %v2571
    %2595 = vst.msk [vmem:[#allocation5 + $0xa] sm:$0x1] %vm314, %v2573
    %2596 = vst.msk [vmem:[#allocation5 + $0x12] sm:$0x1] %vm314, %v2575
    %2597 = vst.msk [vmem:[#allocation5 + $0x1a] sm:$0x1] %vm314, %v2577
    %2598 = vst.msk [vmem:[#allocation5 + $0x22] sm:$0x1] %vm314, %v2579
    %2599 = vst.msk [vmem:[#allocation5 + $0x2a] sm:$0x1] %vm314, %v2581
    %2600 = vst.msk [vmem:[#allocation5 + $0x32] sm:$0x1] %vm314, %v2583
    %2601 = vst.msk [vmem:[#allocation5 + $0x3a] sm:$0x1] %vm314, %v2585
    %2602 = vrot.lane.b32.xlu0 %v205, 104
    %v2603 = vpop.permute.xlu0 %2602
    %2605 = vst.msk [vmem:[%s563] sm:$0xff] %vm206, %v2603
    %2606 = vrot.lane.b32.xlu0 %v2306, 40
    %v2607 = vpop.permute.xlu0 %2606
    %2608 = vrot.lane.b32.xlu0 %v2310, 40
    %v2609 = vpop.permute.xlu0 %2608
    %2610 = vrot.lane.b32.xlu0 %v2314, 40
    %v2611 = vpop.permute.xlu0 %2610
    %2612 = vrot.lane.b32.xlu0 %v2318, 40
    %v2613 = vpop.permute.xlu0 %2612
    %2614 = vrot.lane.b32.xlu0 %v2322, 40
    %v2615 = vpop.permute.xlu0 %2614
    %2616 = vrot.lane.b32.xlu0 %v2326, 40
    %v2617 = vpop.permute.xlu0 %2616
    %2618 = vrot.lane.b32.xlu0 %v2330, 40
    %v2619 = vpop.permute.xlu0 %2618
    %2620 = vrot.lane.b32.xlu0 %v2334, 40
    %v2621 = vpop.permute.xlu0 %2620
    %2630 = vst.msk [vmem:[#allocation4 + $0x3] sm:$0x1] %vm314, %v2607
    %2631 = vst.msk [vmem:[#allocation4 + $0xb] sm:$0x1] %vm314, %v2609
    %2632 = vst.msk [vmem:[#allocation4 + $0x13] sm:$0x1] %vm314, %v2611
    %2633 = vst.msk [vmem:[#allocation4 + $0x1b] sm:$0x1] %vm314, %v2613
    %2634 = vst.msk [vmem:[#allocation4 + $0x23] sm:$0x1] %vm314, %v2615
    %2635 = vst.msk [vmem:[#allocation4 + $0x2b] sm:$0x1] %vm314, %v2617
    %2636 = vst.msk [vmem:[#allocation4 + $0x33] sm:$0x1] %vm314, %v2619
    %2637 = vst.msk [vmem:[#allocation4 + $0x3b] sm:$0x1] %vm314, %v2621
    %2638 = vrot.lane.b32.xlu0 %v2473, 104
    %v2639 = vpop.permute.xlu0 %2638
    %2640 = vrot.lane.b32.xlu0 %v2477, 104
    %v2641 = vpop.permute.xlu0 %2640
    %2642 = vrot.lane.b32.xlu0 %v2481, 104
    %v2643 = vpop.permute.xlu0 %2642
    %2644 = vrot.lane.b32.xlu0 %v2485, 104
    %v2645 = vpop.permute.xlu0 %2644
    %2646 = vrot.lane.b32.xlu0 %v2489, 104
    %v2647 = vpop.permute.xlu0 %2646
    %2648 = vrot.lane.b32.xlu0 %v2493, 104
    %v2649 = vpop.permute.xlu0 %2648
    %2650 = vrot.lane.b32.xlu0 %v2497, 104
    %v2651 = vpop.permute.xlu0 %2650
    %2652 = vrot.lane.b32.xlu0 %v2501, 104
    %v2653 = vpop.permute.xlu0 %2652
    %2662 = vst.msk [vmem:[#allocation5 + $0x3] sm:$0x1] %vm314, %v2639
    %2663 = vst.msk [vmem:[#allocation5 + $0xb] sm:$0x1] %vm314, %v2641
    %2664 = vst.msk [vmem:[#allocation5 + $0x13] sm:$0x1] %vm314, %v2643
    %2665 = vst.msk [vmem:[#allocation5 + $0x1b] sm:$0x1] %vm314, %v2645
    %2666 = vst.msk [vmem:[#allocation5 + $0x23] sm:$0x1] %vm314, %v2647
    %2667 = vst.msk [vmem:[#allocation5 + $0x2b] sm:$0x1] %vm314, %v2649
    %2668 = vst.msk [vmem:[#allocation5 + $0x33] sm:$0x1] %vm314, %v2651
    %2669 = vst.msk [vmem:[#allocation5 + $0x3b] sm:$0x1] %vm314, %v2653
    %2670 = vrot.lane.b32.xlu0 %v205, 96
    %v2671 = vpop.permute.xlu0 %2670
    %2673 = vst.msk [vmem:[%s632] sm:$0xff] %vm206, %v2671
    %2674 = vrot.lane.b32.xlu0 %v2306, 32
    %v2675 = vpop.permute.xlu0 %2674
    %2676 = vrot.lane.b32.xlu0 %v2310, 32
    %v2677 = vpop.permute.xlu0 %2676
    %2678 = vrot.lane.b32.xlu0 %v2314, 32
    %v2679 = vpop.permute.xlu0 %2678
    %2680 = vrot.lane.b32.xlu0 %v2318, 32
    %v2681 = vpop.permute.xlu0 %2680
    %2682 = vrot.lane.b32.xlu0 %v2322, 32
    %v2683 = vpop.permute.xlu0 %2682
    %2684 = vrot.lane.b32.xlu0 %v2326, 32
    %v2685 = vpop.permute.xlu0 %2684
    %2686 = vrot.lane.b32.xlu0 %v2330, 32
    %v2687 = vpop.permute.xlu0 %2686
    %2688 = vrot.lane.b32.xlu0 %v2334, 32
    %v2689 = vpop.permute.xlu0 %2688
    %2698 = vst.msk [vmem:[#allocation4 + $0x4] sm:$0x1] %vm314, %v2675
    %2699 = vst.msk [vmem:[#allocation4 + $0xc] sm:$0x1] %vm314, %v2677
    %2700 = vst.msk [vmem:[#allocation4 + $0x14] sm:$0x1] %vm314, %v2679
    %2701 = vst.msk [vmem:[#allocation4 + $0x1c] sm:$0x1] %vm314, %v2681
    %2702 = vst.msk [vmem:[#allocation4 + $0x24] sm:$0x1] %vm314, %v2683
    %2703 = vst.msk [vmem:[#allocation4 + $0x2c] sm:$0x1] %vm314, %v2685
    %2704 = vst.msk [vmem:[#allocation4 + $0x34] sm:$0x1] %vm314, %v2687
    %2705 = vst.msk [vmem:[#allocation4 + $0x3c] sm:$0x1] %vm314, %v2689
    %2706 = vrot.lane.b32.xlu0 %v2473, 96
    %v2707 = vpop.permute.xlu0 %2706
    %2708 = vrot.lane.b32.xlu0 %v2477, 96
    %v2709 = vpop.permute.xlu0 %2708
    %2710 = vrot.lane.b32.xlu0 %v2481, 96
    %v2711 = vpop.permute.xlu0 %2710
    %2712 = vrot.lane.b32.xlu0 %v2485, 96
    %v2713 = vpop.permute.xlu0 %2712
    %2714 = vrot.lane.b32.xlu0 %v2489, 96
    %v2715 = vpop.permute.xlu0 %2714
    %2716 = vrot.lane.b32.xlu0 %v2493, 96
    %v2717 = vpop.permute.xlu0 %2716
    %2718 = vrot.lane.b32.xlu0 %v2497, 96
    %v2719 = vpop.permute.xlu0 %2718
    %2720 = vrot.lane.b32.xlu0 %v2501, 96
    %v2721 = vpop.permute.xlu0 %2720
    %2730 = vst.msk [vmem:[#allocation5 + $0x4] sm:$0x1] %vm314, %v2707
    %2731 = vst.msk [vmem:[#allocation5 + $0xc] sm:$0x1] %vm314, %v2709
    %2732 = vst.msk [vmem:[#allocation5 + $0x14] sm:$0x1] %vm314, %v2711
    %2733 = vst.msk [vmem:[#allocation5 + $0x1c] sm:$0x1] %vm314, %v2713
    %2734 = vst.msk [vmem:[#allocation5 + $0x24] sm:$0x1] %vm314, %v2715
    %2735 = vst.msk [vmem:[#allocation5 + $0x2c] sm:$0x1] %vm314, %v2717
    %2736 = vst.msk [vmem:[#allocation5 + $0x34] sm:$0x1] %vm314, %v2719
    %2737 = vst.msk [vmem:[#allocation5 + $0x3c] sm:$0x1] %vm314, %v2721
    %2738 = vrot.lane.b32.xlu0 %v205, 88
    %v2739 = vpop.permute.xlu0 %2738
    %2741 = vst.msk [vmem:[%s701] sm:$0xff] %vm206, %v2739
    %2742 = vrot.lane.b32.xlu0 %v2306, 24
    %v2743 = vpop.permute.xlu0 %2742
    %2744 = vrot.lane.b32.xlu0 %v2310, 24
    %v2745 = vpop.permute.xlu0 %2744
    %2746 = vrot.lane.b32.xlu0 %v2314, 24
    %v2747 = vpop.permute.xlu0 %2746
    %2748 = vrot.lane.b32.xlu0 %v2318, 24
    %v2749 = vpop.permute.xlu0 %2748
    %2750 = vrot.lane.b32.xlu0 %v2322, 24
    %v2751 = vpop.permute.xlu0 %2750
    %2752 = vrot.lane.b32.xlu0 %v2326, 24
    %v2753 = vpop.permute.xlu0 %2752
    %2754 = vrot.lane.b32.xlu0 %v2330, 24
    %v2755 = vpop.permute.xlu0 %2754
    %2756 = vrot.lane.b32.xlu0 %v2334, 24
    %v2757 = vpop.permute.xlu0 %2756
    %2766 = vst.msk [vmem:[#allocation4 + $0x5] sm:$0x1] %vm314, %v2743
    %2767 = vst.msk [vmem:[#allocation4 + $0xd] sm:$0x1] %vm314, %v2745
    %2768 = vst.msk [vmem:[#allocation4 + $0x15] sm:$0x1] %vm314, %v2747
    %2769 = vst.msk [vmem:[#allocation4 + $0x1d] sm:$0x1] %vm314, %v2749
    %2770 = vst.msk [vmem:[#allocation4 + $0x25] sm:$0x1] %vm314, %v2751
    %2771 = vst.msk [vmem:[#allocation4 + $0x2d] sm:$0x1] %vm314, %v2753
    %2772 = vst.msk [vmem:[#allocation4 + $0x35] sm:$0x1] %vm314, %v2755
    %2773 = vst.msk [vmem:[#allocation4 + $0x3d] sm:$0x1] %vm314, %v2757
    %2774 = vrot.lane.b32.xlu0 %v2473, 88
    %v2775 = vpop.permute.xlu0 %2774
    %2776 = vrot.lane.b32.xlu0 %v2477, 88
    %v2777 = vpop.permute.xlu0 %2776
    %2778 = vrot.lane.b32.xlu0 %v2481, 88
    %v2779 = vpop.permute.xlu0 %2778
    %2780 = vrot.lane.b32.xlu0 %v2485, 88
    %v2781 = vpop.permute.xlu0 %2780
    %2782 = vrot.lane.b32.xlu0 %v2489, 88
    %v2783 = vpop.permute.xlu0 %2782
    %2784 = vrot.lane.b32.xlu0 %v2493, 88
    %v2785 = vpop.permute.xlu0 %2784
    %2786 = vrot.lane.b32.xlu0 %v2497, 88
    %v2787 = vpop.permute.xlu0 %2786
    %2788 = vrot.lane.b32.xlu0 %v2501, 88
    %v2789 = vpop.permute.xlu0 %2788
    %2798 = vst.msk [vmem:[#allocation5 + $0x5] sm:$0x1] %vm314, %v2775
    %2799 = vst.msk [vmem:[#allocation5 + $0xd] sm:$0x1] %vm314, %v2777
    %2800 = vst.msk [vmem:[#allocation5 + $0x15] sm:$0x1] %vm314, %v2779
    %2801 = vst.msk [vmem:[#allocation5 + $0x1d] sm:$0x1] %vm314, %v2781
    %2802 = vst.msk [vmem:[#allocation5 + $0x25] sm:$0x1] %vm314, %v2783
    %2803 = vst.msk [vmem:[#allocation5 + $0x2d] sm:$0x1] %vm314, %v2785
    %2804 = vst.msk [vmem:[#allocation5 + $0x35] sm:$0x1] %vm314, %v2787
    %2805 = vst.msk [vmem:[#allocation5 + $0x3d] sm:$0x1] %vm314, %v2789
    %2806 = vrot.lane.b32.xlu0 %v205, 80
    %v2807 = vpop.permute.xlu0 %2806
    %2809 = vst.msk [vmem:[%s770] sm:$0xff] %vm206, %v2807
    %2810 = vrot.lane.b32.xlu0 %v2306, 16
    %v2811 = vpop.permute.xlu0 %2810
    %2812 = vrot.lane.b32.xlu0 %v2310, 16
    %v2813 = vpop.permute.xlu0 %2812
    %2814 = vrot.lane.b32.xlu0 %v2314, 16
    %v2815 = vpop.permute.xlu0 %2814
    %2816 = vrot.lane.b32.xlu0 %v2318, 16
    %v2817 = vpop.permute.xlu0 %2816
    %2818 = vrot.lane.b32.xlu0 %v2322, 16
    %v2819 = vpop.permute.xlu0 %2818
    %2820 = vrot.lane.b32.xlu0 %v2326, 16
    %v2821 = vpop.permute.xlu0 %2820
    %2822 = vrot.lane.b32.xlu0 %v2330, 16
    %v2823 = vpop.permute.xlu0 %2822
    %2824 = vrot.lane.b32.xlu0 %v2334, 16
    %v2825 = vpop.permute.xlu0 %2824
    %2834 = vst.msk [vmem:[#allocation4 + $0x6] sm:$0x1] %vm314, %v2811
    %2835 = vst.msk [vmem:[#allocation4 + $0xe] sm:$0x1] %vm314, %v2813
    %2836 = vst.msk [vmem:[#allocation4 + $0x16] sm:$0x1] %vm314, %v2815
    %2837 = vst.msk [vmem:[#allocation4 + $0x1e] sm:$0x1] %vm314, %v2817
    %2838 = vst.msk [vmem:[#allocation4 + $0x26] sm:$0x1] %vm314, %v2819
    %2839 = vst.msk [vmem:[#allocation4 + $0x2e] sm:$0x1] %vm314, %v2821
    %2840 = vst.msk [vmem:[#allocation4 + $0x36] sm:$0x1] %vm314, %v2823
    %2841 = vst.msk [vmem:[#allocation4 + $0x3e] sm:$0x1] %vm314, %v2825
    %2842 = vrot.lane.b32.xlu0 %v2473, 80
    %v2843 = vpop.permute.xlu0 %2842
    %2844 = vrot.lane.b32.xlu0 %v2477, 80
    %v2845 = vpop.permute.xlu0 %2844
    %2846 = vrot.lane.b32.xlu0 %v2481, 80
    %v2847 = vpop.permute.xlu0 %2846
    %2848 = vrot.lane.b32.xlu0 %v2485, 80
    %v2849 = vpop.permute.xlu0 %2848
    %2850 = vrot.lane.b32.xlu0 %v2489, 80
    %v2851 = vpop.permute.xlu0 %2850
    %2852 = vrot.lane.b32.xlu0 %v2493, 80
    %v2853 = vpop.permute.xlu0 %2852
    %2854 = vrot.lane.b32.xlu0 %v2497, 80
    %v2855 = vpop.permute.xlu0 %2854
    %2856 = vrot.lane.b32.xlu0 %v2501, 80
    %v2857 = vpop.permute.xlu0 %2856
    %2866 = vst.msk [vmem:[#allocation5 + $0x6] sm:$0x1] %vm314, %v2843
    %2867 = vst.msk [vmem:[#allocation5 + $0xe] sm:$0x1] %vm314, %v2845
    %2868 = vst.msk [vmem:[#allocation5 + $0x16] sm:$0x1] %vm314, %v2847
    %2869 = vst.msk [vmem:[#allocation5 + $0x1e] sm:$0x1] %vm314, %v2849
    %2870 = vst.msk [vmem:[#allocation5 + $0x26] sm:$0x1] %vm314, %v2851
    %2871 = vst.msk [vmem:[#allocation5 + $0x2e] sm:$0x1] %vm314, %v2853
    %2872 = vst.msk [vmem:[#allocation5 + $0x36] sm:$0x1] %vm314, %v2855
    %2873 = vst.msk [vmem:[#allocation5 + $0x3e] sm:$0x1] %vm314, %v2857
    %2874 = vrot.lane.b32.xlu0 %v205, 72
    %v2875 = vpop.permute.xlu0 %2874
    %2877 = vst.msk [vmem:[%s839] sm:$0xff] %vm206, %v2875
    %2878 = vrot.lane.b32.xlu0 %v2306, 8
    %v2879 = vpop.permute.xlu0 %2878
    %2880 = vrot.lane.b32.xlu0 %v2310, 8
    %v2881 = vpop.permute.xlu0 %2880
    %2882 = vrot.lane.b32.xlu0 %v2314, 8
    %v2883 = vpop.permute.xlu0 %2882
    %2884 = vrot.lane.b32.xlu0 %v2318, 8
    %v2885 = vpop.permute.xlu0 %2884
    %2886 = vrot.lane.b32.xlu0 %v2322, 8
    %v2887 = vpop.permute.xlu0 %2886
    %2888 = vrot.lane.b32.xlu0 %v2326, 8
    %v2889 = vpop.permute.xlu0 %2888
    %2890 = vrot.lane.b32.xlu0 %v2330, 8
    %v2891 = vpop.permute.xlu0 %2890
    %2892 = vrot.lane.b32.xlu0 %v2334, 8
    %v2893 = vpop.permute.xlu0 %2892
    %2902 = vst.msk [vmem:[#allocation4 + $0x7] sm:$0x1] %vm314, %v2879
    %2903 = vst.msk [vmem:[#allocation4 + $0xf] sm:$0x1] %vm314, %v2881
    %2904 = vst.msk [vmem:[#allocation4 + $0x17] sm:$0x1] %vm314, %v2883
    %2905 = vst.msk [vmem:[#allocation4 + $0x1f] sm:$0x1] %vm314, %v2885
    %2906 = vst.msk [vmem:[#allocation4 + $0x27] sm:$0x1] %vm314, %v2887
    %2907 = vst.msk [vmem:[#allocation4 + $0x2f] sm:$0x1] %vm314, %v2889
    %2908 = vst.msk [vmem:[#allocation4 + $0x37] sm:$0x1] %vm314, %v2891
    %2909 = vst.msk [vmem:[#allocation4 + $0x3f] sm:$0x1] %vm314, %v2893
    %2910 = vrot.lane.b32.xlu0 %v2473, 72
    %v2911 = vpop.permute.xlu0 %2910
    %2912 = vrot.lane.b32.xlu0 %v2477, 72
    %v2913 = vpop.permute.xlu0 %2912
    %2914 = vrot.lane.b32.xlu0 %v2481, 72
    %v2915 = vpop.permute.xlu0 %2914
    %2916 = vrot.lane.b32.xlu0 %v2485, 72
    %v2917 = vpop.permute.xlu0 %2916
    %2918 = vrot.lane.b32.xlu0 %v2489, 72
    %v2919 = vpop.permute.xlu0 %2918
    %2920 = vrot.lane.b32.xlu0 %v2493, 72
    %v2921 = vpop.permute.xlu0 %2920
    %2922 = vrot.lane.b32.xlu0 %v2497, 72
    %v2923 = vpop.permute.xlu0 %2922
    %2924 = vrot.lane.b32.xlu0 %v2501, 72
    %v2925 = vpop.permute.xlu0 %2924
    %2934 = vst.msk [vmem:[#allocation5 + $0x7] sm:$0x1] %vm314, %v2911
    %2935 = vst.msk [vmem:[#allocation5 + $0xf] sm:$0x1] %vm314, %v2913
    %2936 = vst.msk [vmem:[#allocation5 + $0x17] sm:$0x1] %vm314, %v2915
    %2937 = vst.msk [vmem:[#allocation5 + $0x1f] sm:$0x1] %vm314, %v2917
    %2938 = vst.msk [vmem:[#allocation5 + $0x27] sm:$0x1] %vm314, %v2919
    %2939 = vst.msk [vmem:[#allocation5 + $0x2f] sm:$0x1] %vm314, %v2921
    %2940 = vst.msk [vmem:[#allocation5 + $0x37] sm:$0x1] %vm314, %v2923
    %2941 = vst.msk [vmem:[#allocation5 + $0x3f] sm:$0x1] %vm314, %v2925
    %v2942 = vld [vmem:[#allocation3] sm:$0xff]
    %v2943 = vld [vmem:[#allocation3 + $0x8] sm:$0xff]
    %v2944 = vld [vmem:[#allocation3 + $0x10] sm:$0xff]
    %v2945 = vld [vmem:[#allocation3 + $0x18] sm:$0xff]
    %v2946 = vld [vmem:[#allocation3 + $0x20] sm:$0xff]
    %v2947 = vld [vmem:[#allocation3 + $0x28] sm:$0xff]
    %v2948 = vld [vmem:[#allocation3 + $0x30] sm:$0xff]
    %v2949 = vld [vmem:[#allocation3 + $0x38] sm:$0xff]
    %v2950 = vld [vmem:[#allocation4] sm:$0xff]
    %v2951 = vld [vmem:[#allocation4 + $0x8] sm:$0xff]
    %v2952 = vld [vmem:[#allocation4 + $0x10] sm:$0xff]
    %v2953 = vld [vmem:[#allocation4 + $0x18] sm:$0xff]
    %v2954 = vld [vmem:[#allocation4 + $0x20] sm:$0xff]
    %v2955 = vld [vmem:[#allocation4 + $0x28] sm:$0xff]
    %v2956 = vld [vmem:[#allocation4 + $0x30] sm:$0xff]
    %v2957 = vld [vmem:[#allocation4 + $0x38] sm:$0xff]
    %v2958 = vld [vmem:[#allocation5] sm:$0xff]
    %v2959 = vld [vmem:[#allocation5 + $0x8] sm:$0xff]
    %v2960 = vld [vmem:[#allocation5 + $0x10] sm:$0xff]
    %v2961 = vld [vmem:[#allocation5 + $0x18] sm:$0xff]
    %v2962 = vld [vmem:[#allocation5 + $0x20] sm:$0xff]
    %v2963 = vld [vmem:[#allocation5 + $0x28] sm:$0xff]
    %v2964 = vld [vmem:[#allocation5 + $0x30] sm:$0xff]
    %v2965 = vld [vmem:[#allocation5 + $0x38] sm:$0xff]
    %v2967 = vsel %vm206, %v2942, 0
    %v2970 = vsel %vm206, %v2950, 0
    %2972 = vmatprep.subr.mxu0 0.0
    %2973 = vmatpush1.xpose.msra.mxu0 %v2970
    %2974 = vmatprep.subr.mxu0 0.0
    %2975 = vmatpush1.xpose.msra.mxu0 0.0
    %2976 = vmatprep.subr.mxu0 0.0
    %2977 = vmatpush1.xpose.msra.mxu0 0.0
    %2978 = vmatprep.subr.mxu0 0.0
    %2979 = vmatpush1.xpose.msra.mxu0 0.0
    %2980 = vmatprep.subr.mxu0 0.0
    %2981 = vmatpush1.xpose.msra.mxu0 0.0
    %2982 = vmatprep.subr.mxu0 0.0
    %2983 = vmatpush1.xpose.msra.mxu0 0.0
    %2984 = vmatprep.subr.mxu0 0.0
    %2985 = vmatpush1.xpose.msra.mxu0 0.0
    %2986 = vmatprep.subr.mxu0 0.0
    %2987 = vmatpush1.xpose.msra.mxu0 0.0
    %2988 = vmatprep.subr.mxu0 0.0
    %2989 = vmatpush1.xpose.msra.mxu0 0.0
    %2990 = vmatprep.subr.mxu0 0.0
    %2991 = vmatpush1.xpose.msra.mxu0 0.0
    %2992 = vmatprep.subr.mxu0 0.0
    %2993 = vmatpush1.xpose.msra.mxu0 0.0
    %2994 = vmatprep.subr.mxu0 0.0
    %2995 = vmatpush1.xpose.msra.mxu0 0.0
    %2996 = vmatprep.subr.mxu0 0.0
    %2997 = vmatpush1.xpose.msra.mxu0 0.0
    %2998 = vmatprep.subr.mxu0 0.0
    %2999 = vmatpush1.xpose.msra.mxu0 0.0
    %3000 = vmatprep.subr.mxu0 0.0
    %3001 = vmatpush1.xpose.msra.mxu0 0.0
    %3002 = vmatprep.subr.mxu0 0.0
    %3003 = vmatpush1.xpose.msra.mxu0 0.0
    %3004 = vmatprep.subr.mxu0 0.0
    %3005 = vmatpush1.xpose.msra.mxu0 0.0
    %3006 = vmatprep.subr.mxu0 0.0
    %3007 = vmatpush1.xpose.msra.mxu0 0.0
    %3008 = vmatprep.subr.mxu0 0.0
    %3009 = vmatpush1.xpose.msra.mxu0 0.0
    %3010 = vmatprep.subr.mxu0 0.0
    %3011 = vmatpush1.xpose.msra.mxu0 0.0
    %3012 = vmatprep.subr.mxu0 0.0
    %3013 = vmatpush1.xpose.msra.mxu0 0.0
    %3014 = vmatprep.subr.mxu0 0.0
    %3015 = vmatpush1.xpose.msra.mxu0 0.0
    %3016 = vmatprep.subr.mxu0 0.0
    %3017 = vmatpush1.xpose.msra.mxu0 0.0
    %3018 = vmatprep.subr.mxu0 0.0
    %3019 = vmatpush1.xpose.msra.mxu0 0.0
    %3020 = vmatprep.subr.mxu0 0.0
    %3021 = vmatpush1.xpose.msra.mxu0 0.0
    %3022 = vmatprep.subr.mxu0 0.0
    %3023 = vmatpush1.xpose.msra.mxu0 0.0
    %3024 = vmatprep.subr.mxu0 0.0
    %3025 = vmatpush1.xpose.msra.mxu0 0.0
    %3026 = vmatprep.subr.mxu0 0.0
    %3027 = vmatpush1.xpose.msra.mxu0 0.0
    %3028 = vmatprep.subr.mxu0 0.0
    %3029 = vmatpush1.xpose.msra.mxu0 0.0
    %3030 = vmatprep.subr.mxu0 0.0
    %3031 = vmatpush1.xpose.msra.mxu0 0.0
    %3032 = vmatprep.subr.mxu0 0.0
    %3033 = vmatpush1.xpose.msra.mxu0 0.0
    %3034 = vmatprep.subr.mxu0 0.0
    %3035 = vmatpush1.xpose.msra.mxu0 0.0
    %3036 = vmatprep.mubr.f32.mxu0 0.0
    %3037 = vmatmul.mubr.f32.gmra.mrb[0].mxu0 %v2967
    %v3038 = vpop.f32.mrb[0].mxu0
    %v3039 = vadd.f32 0.0, %v3038
    %v3040 = vpop.f32.mrb[0].mxu0
    %3041 = vdwg.mxu0
    %v3043 = vsel %vm206, %v2943, 0
    %v3046 = vsel %vm206, %v2951, 0
    %3048 = vmatprep.subr.mxu0 0.0
    %3049 = vmatpush1.xpose.msra.mxu0 %v3046
    %3050 = vmatprep.subr.mxu0 0.0
    %3051 = vmatpush1.xpose.msra.mxu0 0.0
    %3052 = vmatprep.subr.mxu0 0.0
    %3053 = vmatpush1.xpose.msra.mxu0 0.0
    %3054 = vmatprep.subr.mxu0 0.0
    %3055 = vmatpush1.xpose.msra.mxu0 0.0
    %3056 = vmatprep.subr.mxu0 0.0
    %3057 = vmatpush1.xpose.msra.mxu0 0.0
    %3058 = vmatprep.subr.mxu0 0.0
    %3059 = vmatpush1.xpose.msra.mxu0 0.0
    %3060 = vmatprep.subr.mxu0 0.0
    %3061 = vmatpush1.xpose.msra.mxu0 0.0
    %3062 = vmatprep.subr.mxu0 0.0
    %3063 = vmatpush1.xpose.msra.mxu0 0.0
    %3064 = vmatprep.subr.mxu0 0.0
    %3065 = vmatpush1.xpose.msra.mxu0 0.0
    %3066 = vmatprep.subr.mxu0 0.0
    %3067 = vmatpush1.xpose.msra.mxu0 0.0
    %3068 = vmatprep.subr.mxu0 0.0
    %3069 = vmatpush1.xpose.msra.mxu0 0.0
    %3070 = vmatprep.subr.mxu0 0.0
    %3071 = vmatpush1.xpose.msra.mxu0 0.0
    %3072 = vmatprep.subr.mxu0 0.0
    %3073 = vmatpush1.xpose.msra.mxu0 0.0
    %3074 = vmatprep.subr.mxu0 0.0
    %3075 = vmatpush1.xpose.msra.mxu0 0.0
    %3076 = vmatprep.subr.mxu0 0.0
    %3077 = vmatpush1.xpose.msra.mxu0 0.0
    %3078 = vmatprep.subr.mxu0 0.0
    %3079 = vmatpush1.xpose.msra.mxu0 0.0
    %3080 = vmatprep.subr.mxu0 0.0
    %3081 = vmatpush1.xpose.msra.mxu0 0.0
    %3082 = vmatprep.subr.mxu0 0.0
    %3083 = vmatpush1.xpose.msra.mxu0 0.0
    %3084 = vmatprep.subr.mxu0 0.0
    %3085 = vmatpush1.xpose.msra.mxu0 0.0
    %3086 = vmatprep.subr.mxu0 0.0
    %3087 = vmatpush1.xpose.msra.mxu0 0.0
    %3088 = vmatprep.subr.mxu0 0.0
    %3089 = vmatpush1.xpose.msra.mxu0 0.0
    %3090 = vmatprep.subr.mxu0 0.0
    %3091 = vmatpush1.xpose.msra.mxu0 0.0
    %3092 = vmatprep.subr.mxu0 0.0
    %3093 = vmatpush1.xpose.msra.mxu0 0.0
    %3094 = vmatprep.subr.mxu0 0.0
    %3095 = vmatpush1.xpose.msra.mxu0 0.0
    %3096 = vmatprep.subr.mxu0 0.0
    %3097 = vmatpush1.xpose.msra.mxu0 0.0
    %3098 = vmatprep.subr.mxu0 0.0
    %3099 = vmatpush1.xpose.msra.mxu0 0.0
    %3100 = vmatprep.subr.mxu0 0.0
    %3101 = vmatpush1.xpose.msra.mxu0 0.0
    %3102 = vmatprep.subr.mxu0 0.0
    %3103 = vmatpush1.xpose.msra.mxu0 0.0
    %3104 = vmatprep.subr.mxu0 0.0
    %3105 = vmatpush1.xpose.msra.mxu0 0.0
    %3106 = vmatprep.subr.mxu0 0.0
    %3107 = vmatpush1.xpose.msra.mxu0 0.0
    %3108 = vmatprep.subr.mxu0 0.0
    %3109 = vmatpush1.xpose.msra.mxu0 0.0
    %3110 = vmatprep.subr.mxu0 0.0
    %3111 = vmatpush1.xpose.msra.mxu0 0.0
    %3112 = vmatprep.mubr.f32.mxu0 0.0
    %3113 = vmatmul.mubr.f32.gmra.mrb[0].mxu0 %v3043
    %v3114 = vpop.f32.mrb[0].mxu0
    %v3115 = vadd.f32 0.0, %v3114
    %v3116 = vpop.f32.mrb[0].mxu0
    %3117 = vdwg.mxu0
    %v3119 = vsel %vm206, %v2944, 0
    %v3122 = vsel %vm206, %v2952, 0
    %3124 = vmatprep.subr.mxu0 0.0
    %3125 = vmatpush1.xpose.msra.mxu0 %v3122
    %3126 = vmatprep.subr.mxu0 0.0
    %3127 = vmatpush1.xpose.msra.mxu0 0.0
    %3128 = vmatprep.subr.mxu0 0.0
    %3129 = vmatpush1.xpose.msra.mxu0 0.0
    %3130 = vmatprep.subr.mxu0 0.0
    %3131 = vmatpush1.xpose.msra.mxu0 0.0
    %3132 = vmatprep.subr.mxu0 0.0
    %3133 = vmatpush1.xpose.msra.mxu0 0.0
    %3134 = vmatprep.subr.mxu0 0.0
    %3135 = vmatpush1.xpose.msra.mxu0 0.0
    %3136 = vmatprep.subr.mxu0 0.0
    %3137 = vmatpush1.xpose.msra.mxu0 0.0
    %3138 = vmatprep.subr.mxu0 0.0
    %3139 = vmatpush1.xpose.msra.mxu0 0.0
    %3140 = vmatprep.subr.mxu0 0.0
    %3141 = vmatpush1.xpose.msra.mxu0 0.0
    %3142 = vmatprep.subr.mxu0 0.0
    %3143 = vmatpush1.xpose.msra.mxu0 0.0
    %3144 = vmatprep.subr.mxu0 0.0
    %3145 = vmatpush1.xpose.msra.mxu0 0.0
    %3146 = vmatprep.subr.mxu0 0.0
    %3147 = vmatpush1.xpose.msra.mxu0 0.0
    %3148 = vmatprep.subr.mxu0 0.0
    %3149 = vmatpush1.xpose.msra.mxu0 0.0
    %3150 = vmatprep.subr.mxu0 0.0
    %3151 = vmatpush1.xpose.msra.mxu0 0.0
    %3152 = vmatprep.subr.mxu0 0.0
    %3153 = vmatpush1.xpose.msra.mxu0 0.0
    %3154 = vmatprep.subr.mxu0 0.0
    %3155 = vmatpush1.xpose.msra.mxu0 0.0
    %3156 = vmatprep.subr.mxu0 0.0
    %3157 = vmatpush1.xpose.msra.mxu0 0.0
    %3158 = vmatprep.subr.mxu0 0.0
    %3159 = vmatpush1.xpose.msra.mxu0 0.0
    %3160 = vmatprep.subr.mxu0 0.0
    %3161 = vmatpush1.xpose.msra.mxu0 0.0
    %3162 = vmatprep.subr.mxu0 0.0
    %3163 = vmatpush1.xpose.msra.mxu0 0.0
    %3164 = vmatprep.subr.mxu0 0.0
    %3165 = vmatpush1.xpose.msra.mxu0 0.0
    %3166 = vmatprep.subr.mxu0 0.0
    %3167 = vmatpush1.xpose.msra.mxu0 0.0
    %3168 = vmatprep.subr.mxu0 0.0
    %3169 = vmatpush1.xpose.msra.mxu0 0.0
    %3170 = vmatprep.subr.mxu0 0.0
    %3171 = vmatpush1.xpose.msra.mxu0 0.0
    %3172 = vmatprep.subr.mxu0 0.0
    %3173 = vmatpush1.xpose.msra.mxu0 0.0
    %3174 = vmatprep.subr.mxu0 0.0
    %3175 = vmatpush1.xpose.msra.mxu0 0.0
    %3176 = vmatprep.subr.mxu0 0.0
    %3177 = vmatpush1.xpose.msra.mxu0 0.0
    %3178 = vmatprep.subr.mxu0 0.0
    %3179 = vmatpush1.xpose.msra.mxu0 0.0
    %3180 = vmatprep.subr.mxu0 0.0
    %3181 = vmatpush1.xpose.msra.mxu0 0.0
    %3182 = vmatprep.subr.mxu0 0.0
    %3183 = vmatpush1.xpose.msra.mxu0 0.0
    %3184 = vmatprep.subr.mxu0 0.0
    %3185 = vmatpush1.xpose.msra.mxu0 0.0
    %3186 = vmatprep.subr.mxu0 0.0
    %3187 = vmatpush1.xpose.msra.mxu0 0.0
    %3188 = vmatprep.mubr.f32.mxu0 0.0
    %3189 = vmatmul.mubr.f32.gmra.mrb[0].mxu0 %v3119
    %v3190 = vpop.f32.mrb[0].mxu0
    %v3191 = vadd.f32 0.0, %v3190
    %v3192 = vpop.f32.mrb[0].mxu0
    %3193 = vdwg.mxu0
    %v3195 = vsel %vm206, %v2945, 0
    %v3198 = vsel %vm206, %v2953, 0
    %3200 = vmatprep.subr.mxu0 0.0
    %3201 = vmatpush1.xpose.msra.mxu0 %v3198
    %3202 = vmatprep.subr.mxu0 0.0
    %3203 = vmatpush1.xpose.msra.mxu0 0.0
    %3204 = vmatprep.subr.mxu0 0.0
    %3205 = vmatpush1.xpose.msra.mxu0 0.0
    %3206 = vmatprep.subr.mxu0 0.0
    %3207 = vmatpush1.xpose.msra.mxu0 0.0
    %3208 = vmatprep.subr.mxu0 0.0
    %3209 = vmatpush1.xpose.msra.mxu0 0.0
    %3210 = vmatprep.subr.mxu0 0.0
    %3211 = vmatpush1.xpose.msra.mxu0 0.0
    %3212 = vmatprep.subr.mxu0 0.0
    %3213 = vmatpush1.xpose.msra.mxu0 0.0
    %3214 = vmatprep.subr.mxu0 0.0
    %3215 = vmatpush1.xpose.msra.mxu0 0.0
    %3216 = vmatprep.subr.mxu0 0.0
    %3217 = vmatpush1.xpose.msra.mxu0 0.0
    %3218 = vmatprep.subr.mxu0 0.0
    %3219 = vmatpush1.xpose.msra.mxu0 0.0
    %3220 = vmatprep.subr.mxu0 0.0
    %3221 = vmatpush1.xpose.msra.mxu0 0.0
    %3222 = vmatprep.subr.mxu0 0.0
    %3223 = vmatpush1.xpose.msra.mxu0 0.0
    %3224 = vmatprep.subr.mxu0 0.0
    %3225 = vmatpush1.xpose.msra.mxu0 0.0
    %3226 = vmatprep.subr.mxu0 0.0
    %3227 = vmatpush1.xpose.msra.mxu0 0.0
    %3228 = vmatprep.subr.mxu0 0.0
    %3229 = vmatpush1.xpose.msra.mxu0 0.0
    %3230 = vmatprep.subr.mxu0 0.0
    %3231 = vmatpush1.xpose.msra.mxu0 0.0
    %3232 = vmatprep.subr.mxu0 0.0
    %3233 = vmatpush1.xpose.msra.mxu0 0.0
    %3234 = vmatprep.subr.mxu0 0.0
    %3235 = vmatpush1.xpose.msra.mxu0 0.0
    %3236 = vmatprep.subr.mxu0 0.0
    %3237 = vmatpush1.xpose.msra.mxu0 0.0
    %3238 = vmatprep.subr.mxu0 0.0
    %3239 = vmatpush1.xpose.msra.mxu0 0.0
    %3240 = vmatprep.subr.mxu0 0.0
    %3241 = vmatpush1.xpose.msra.mxu0 0.0
    %3242 = vmatprep.subr.mxu0 0.0
    %3243 = vmatpush1.xpose.msra.mxu0 0.0
    %3244 = vmatprep.subr.mxu0 0.0
    %3245 = vmatpush1.xpose.msra.mxu0 0.0
    %3246 = vmatprep.subr.mxu0 0.0
    %3247 = vmatpush1.xpose.msra.mxu0 0.0
    %3248 = vmatprep.subr.mxu0 0.0
    %3249 = vmatpush1.xpose.msra.mxu0 0.0
    %3250 = vmatprep.subr.mxu0 0.0
    %3251 = vmatpush1.xpose.msra.mxu0 0.0
    %3252 = vmatprep.subr.mxu0 0.0
    %3253 = vmatpush1.xpose.msra.mxu0 0.0
    %3254 = vmatprep.subr.mxu0 0.0
    %3255 = vmatpush1.xpose.msra.mxu0 0.0
    %3256 = vmatprep.subr.mxu0 0.0
    %3257 = vmatpush1.xpose.msra.mxu0 0.0
    %3258 = vmatprep.subr.mxu0 0.0
    %3259 = vmatpush1.xpose.msra.mxu0 0.0
    %3260 = vmatprep.subr.mxu0 0.0
    %3261 = vmatpush1.xpose.msra.mxu0 0.0
    %3262 = vmatprep.subr.mxu0 0.0
    %3263 = vmatpush1.xpose.msra.mxu0 0.0
    %3264 = vmatprep.mubr.f32.mxu0 0.0
    %3265 = vmatmul.mubr.f32.gmra.mrb[0].mxu0 %v3195
    %v3266 = vpop.f32.mrb[0].mxu0
    %v3267 = vadd.f32 0.0, %v3266
    %v3268 = vpop.f32.mrb[0].mxu0
    %3269 = vdwg.mxu0
    %v3271 = vsel %vm206, %v2946, 0
    %v3274 = vsel %vm206, %v2954, 0
    %3276 = vmatprep.subr.mxu0 0.0
    %3277 = vmatpush1.xpose.msra.mxu0 %v3274
    %3278 = vmatprep.subr.mxu0 0.0
    %3279 = vmatpush1.xpose.msra.mxu0 0.0
    %3280 = vmatprep.subr.mxu0 0.0
    %3281 = vmatpush1.xpose.msra.mxu0 0.0
    %3282 = vmatprep.subr.mxu0 0.0
    %3283 = vmatpush1.xpose.msra.mxu0 0.0
    %3284 = vmatprep.subr.mxu0 0.0
    %3285 = vmatpush1.xpose.msra.mxu0 0.0
    %3286 = vmatprep.subr.mxu0 0.0
    %3287 = vmatpush1.xpose.msra.mxu0 0.0
    %3288 = vmatprep.subr.mxu0 0.0
    %3289 = vmatpush1.xpose.msra.mxu0 0.0
    %3290 = vmatprep.subr.mxu0 0.0
    %3291 = vmatpush1.xpose.msra.mxu0 0.0
    %3292 = vmatprep.subr.mxu0 0.0
    %3293 = vmatpush1.xpose.msra.mxu0 0.0
    %3294 = vmatprep.subr.mxu0 0.0
    %3295 = vmatpush1.xpose.msra.mxu0 0.0
    %3296 = vmatprep.subr.mxu0 0.0
    %3297 = vmatpush1.xpose.msra.mxu0 0.0
    %3298 = vmatprep.subr.mxu0 0.0
    %3299 = vmatpush1.xpose.msra.mxu0 0.0
    %3300 = vmatprep.subr.mxu0 0.0
    %3301 = vmatpush1.xpose.msra.mxu0 0.0
    %3302 = vmatprep.subr.mxu0 0.0
    %3303 = vmatpush1.xpose.msra.mxu0 0.0
    %3304 = vmatprep.subr.mxu0 0.0
    %3305 = vmatpush1.xpose.msra.mxu0 0.0
    %3306 = vmatprep.subr.mxu0 0.0
    %3307 = vmatpush1.xpose.msra.mxu0 0.0
    %3308 = vmatprep.subr.mxu0 0.0
    %3309 = vmatpush1.xpose.msra.mxu0 0.0
    %3310 = vmatprep.subr.mxu0 0.0
    %3311 = vmatpush1.xpose.msra.mxu0 0.0
    %3312 = vmatprep.subr.mxu0 0.0
    %3313 = vmatpush1.xpose.msra.mxu0 0.0
    %3314 = vmatprep.subr.mxu0 0.0
    %3315 = vmatpush1.xpose.msra.mxu0 0.0
    %3316 = vmatprep.subr.mxu0 0.0
    %3317 = vmatpush1.xpose.msra.mxu0 0.0
    %3318 = vmatprep.subr.mxu0 0.0
    %3319 = vmatpush1.xpose.msra.mxu0 0.0
    %3320 = vmatprep.subr.mxu0 0.0
    %3321 = vmatpush1.xpose.msra.mxu0 0.0
    %3322 = vmatprep.subr.mxu0 0.0
    %3323 = vmatpush1.xpose.msra.mxu0 0.0
    %3324 = vmatprep.subr.mxu0 0.0
    %3325 = vmatpush1.xpose.msra.mxu0 0.0
    %3326 = vmatprep.subr.mxu0 0.0
    %3327 = vmatpush1.xpose.msra.mxu0 0.0
    %3328 = vmatprep.subr.mxu0 0.0
    %3329 = vmatpush1.xpose.msra.mxu0 0.0
    %3330 = vmatprep.subr.mxu0 0.0
    %3331 = vmatpush1.xpose.msra.mxu0 0.0
    %3332 = vmatprep.subr.mxu0 0.0
    %3333 = vmatpush1.xpose.msra.mxu0 0.0
    %3334 = vmatprep.subr.mxu0 0.0
    %3335 = vmatpush1.xpose.msra.mxu0 0.0
    %3336 = vmatprep.subr.mxu0 0.0
    %3337 = vmatpush1.xpose.msra.mxu0 0.0
    %3338 = vmatprep.subr.mxu0 0.0
    %3339 = vmatpush1.xpose.msra.mxu0 0.0
    %3340 = vmatprep.mubr.f32.mxu0 0.0
    %3341 = vmatmul.mubr.f32.gmra.mrb[0].mxu0 %v3271
    %v3342 = vpop.f32.mrb[0].mxu0
    %v3343 = vadd.f32 0.0, %v3342
    %v3344 = vpop.f32.mrb[0].mxu0
    %3345 = vdwg.mxu0
    %v3347 = vsel %vm206, %v2947, 0
    %v3350 = vsel %vm206, %v2955, 0
    %3352 = vmatprep.subr.mxu0 0.0
    %3353 = vmatpush1.xpose.msra.mxu0 %v3350
    %3354 = vmatprep.subr.mxu0 0.0
    %3355 = vmatpush1.xpose.msra.mxu0 0.0
    %3356 = vmatprep.subr.mxu0 0.0
    %3357 = vmatpush1.xpose.msra.mxu0 0.0
    %3358 = vmatprep.subr.mxu0 0.0
    %3359 = vmatpush1.xpose.msra.mxu0 0.0
    %3360 = vmatprep.subr.mxu0 0.0
    %3361 = vmatpush1.xpose.msra.mxu0 0.0
    %3362 = vmatprep.subr.mxu0 0.0
    %3363 = vmatpush1.xpose.msra.mxu0 0.0
    %3364 = vmatprep.subr.mxu0 0.0
    %3365 = vmatpush1.xpose.msra.mxu0 0.0
    %3366 = vmatprep.subr.mxu0 0.0
    %3367 = vmatpush1.xpose.msra.mxu0 0.0
    %3368 = vmatprep.subr.mxu0 0.0
    %3369 = vmatpush1.xpose.msra.mxu0 0.0
    %3370 = vmatprep.subr.mxu0 0.0
    %3371 = vmatpush1.xpose.msra.mxu0 0.0
    %3372 = vmatprep.subr.mxu0 0.0
    %3373 = vmatpush1.xpose.msra.mxu0 0.0
    %3374 = vmatprep.subr.mxu0 0.0
    %3375 = vmatpush1.xpose.msra.mxu0 0.0
    %3376 = vmatprep.subr.mxu0 0.0
    %3377 = vmatpush1.xpose.msra.mxu0 0.0
    %3378 = vmatprep.subr.mxu0 0.0
    %3379 = vmatpush1.xpose.msra.mxu0 0.0
    %3380 = vmatprep.subr.mxu0 0.0
    %3381 = vmatpush1.xpose.msra.mxu0 0.0
    %3382 = vmatprep.subr.mxu0 0.0
    %3383 = vmatpush1.xpose.msra.mxu0 0.0
    %3384 = vmatprep.subr.mxu0 0.0
    %3385 = vmatpush1.xpose.msra.mxu0 0.0
    %3386 = vmatprep.subr.mxu0 0.0
    %3387 = vmatpush1.xpose.msra.mxu0 0.0
    %3388 = vmatprep.subr.mxu0 0.0
    %3389 = vmatpush1.xpose.msra.mxu0 0.0
    %3390 = vmatprep.subr.mxu0 0.0
    %3391 = vmatpush1.xpose.msra.mxu0 0.0
    %3392 = vmatprep.subr.mxu0 0.0
    %3393 = vmatpush1.xpose.msra.mxu0 0.0
    %3394 = vmatprep.subr.mxu0 0.0
    %3395 = vmatpush1.xpose.msra.mxu0 0.0
    %3396 = vmatprep.subr.mxu0 0.0
    %3397 = vmatpush1.xpose.msra.mxu0 0.0
    %3398 = vmatprep.subr.mxu0 0.0
    %3399 = vmatpush1.xpose.msra.mxu0 0.0
    %3400 = vmatprep.subr.mxu0 0.0
    %3401 = vmatpush1.xpose.msra.mxu0 0.0
    %3402 = vmatprep.subr.mxu0 0.0
    %3403 = vmatpush1.xpose.msra.mxu0 0.0
    %3404 = vmatprep.subr.mxu0 0.0
    %3405 = vmatpush1.xpose.msra.mxu0 0.0
    %3406 = vmatprep.subr.mxu0 0.0
    %3407 = vmatpush1.xpose.msra.mxu0 0.0
    %3408 = vmatprep.subr.mxu0 0.0
    %3409 = vmatpush1.xpose.msra.mxu0 0.0
    %3410 = vmatprep.subr.mxu0 0.0
    %3411 = vmatpush1.xpose.msra.mxu0 0.0
    %3412 = vmatprep.subr.mxu0 0.0
    %3413 = vmatpush1.xpose.msra.mxu0 0.0
    %3414 = vmatprep.subr.mxu0 0.0
    %3415 = vmatpush1.xpose.msra.mxu0 0.0
    %3416 = vmatprep.mubr.f32.mxu0 0.0
    %3417 = vmatmul.mubr.f32.gmra.mrb[0].mxu0 %v3347
    %v3418 = vpop.f32.mrb[0].mxu0
    %v3419 = vadd.f32 0.0, %v3418
    %v3420 = vpop.f32.mrb[0].mxu0
    %3421 = vdwg.mxu0
    %v3423 = vsel %vm206, %v2948, 0
    %v3426 = vsel %vm206, %v2956, 0
    %3428 = vmatprep.subr.mxu0 0.0
    %3429 = vmatpush1.xpose.msra.mxu0 %v3426
    %3430 = vmatprep.subr.mxu0 0.0
    %3431 = vmatpush1.xpose.msra.mxu0 0.0
    %3432 = vmatprep.subr.mxu0 0.0
    %3433 = vmatpush1.xpose.msra.mxu0 0.0
    %3434 = vmatprep.subr.mxu0 0.0
    %3435 = vmatpush1.xpose.msra.mxu0 0.0
    %3436 = vmatprep.subr.mxu0 0.0
    %3437 = vmatpush1.xpose.msra.mxu0 0.0
    %3438 = vmatprep.subr.mxu0 0.0
    %3439 = vmatpush1.xpose.msra.mxu0 0.0
    %3440 = vmatprep.subr.mxu0 0.0
    %3441 = vmatpush1.xpose.msra.mxu0 0.0
    %3442 = vmatprep.subr.mxu0 0.0
    %3443 = vmatpush1.xpose.msra.mxu0 0.0
    %3444 = vmatprep.subr.mxu0 0.0
    %3445 = vmatpush1.xpose.msra.mxu0 0.0
    %3446 = vmatprep.subr.mxu0 0.0
    %3447 = vmatpush1.xpose.msra.mxu0 0.0
    %3448 = vmatprep.subr.mxu0 0.0
    %3449 = vmatpush1.xpose.msra.mxu0 0.0
    %3450 = vmatprep.subr.mxu0 0.0
    %3451 = vmatpush1.xpose.msra.mxu0 0.0
    %3452 = vmatprep.subr.mxu0 0.0
    %3453 = vmatpush1.xpose.msra.mxu0 0.0
    %3454 = vmatprep.subr.mxu0 0.0
    %3455 = vmatpush1.xpose.msra.mxu0 0.0
    %3456 = vmatprep.subr.mxu0 0.0
    %3457 = vmatpush1.xpose.msra.mxu0 0.0
    %3458 = vmatprep.subr.mxu0 0.0
    %3459 = vmatpush1.xpose.msra.mxu0 0.0
    %3460 = vmatprep.subr.mxu0 0.0
    %3461 = vmatpush1.xpose.msra.mxu0 0.0
    %3462 = vmatprep.subr.mxu0 0.0
    %3463 = vmatpush1.xpose.msra.mxu0 0.0
    %3464 = vmatprep.subr.mxu0 0.0
    %3465 = vmatpush1.xpose.msra.mxu0 0.0
    %3466 = vmatprep.subr.mxu0 0.0
    %3467 = vmatpush1.xpose.msra.mxu0 0.0
    %3468 = vmatprep.subr.mxu0 0.0
    %3469 = vmatpush1.xpose.msra.mxu0 0.0
    %3470 = vmatprep.subr.mxu0 0.0
    %3471 = vmatpush1.xpose.msra.mxu0 0.0
    %3472 = vmatprep.subr.mxu0 0.0
    %3473 = vmatpush1.xpose.msra.mxu0 0.0
    %3474 = vmatprep.subr.mxu0 0.0
    %3475 = vmatpush1.xpose.msra.mxu0 0.0
    %3476 = vmatprep.subr.mxu0 0.0
    %3477 = vmatpush1.xpose.msra.mxu0 0.0
    %3478 = vmatprep.subr.mxu0 0.0
    %3479 = vmatpush1.xpose.msra.mxu0 0.0
    %3480 = vmatprep.subr.mxu0 0.0
    %3481 = vmatpush1.xpose.msra.mxu0 0.0
    %3482 = vmatprep.subr.mxu0 0.0
    %3483 = vmatpush1.xpose.msra.mxu0 0.0
    %3484 = vmatprep.subr.mxu0 0.0
    %3485 = vmatpush1.xpose.msra.mxu0 0.0
    %3486 = vmatprep.subr.mxu0 0.0
    %3487 = vmatpush1.xpose.msra.mxu0 0.0
    %3488 = vmatprep.subr.mxu0 0.0
    %3489 = vmatpush1.xpose.msra.mxu0 0.0
    %3490 = vmatprep.subr.mxu0 0.0
    %3491 = vmatpush1.xpose.msra.mxu0 0.0
    %3492 = vmatprep.mubr.f32.mxu0 0.0
    %3493 = vmatmul.mubr.f32.gmra.mrb[0].mxu0 %v3423
    %v3494 = vpop.f32.mrb[0].mxu0
    %v3495 = vadd.f32 0.0, %v3494
    %v3496 = vpop.f32.mrb[0].mxu0
    %3497 = vdwg.mxu0
    %v3499 = vsel %vm206, %v2949, 0
    %v3502 = vsel %vm206, %v2957, 0
    %3504 = vmatprep.subr.mxu0 0.0
    %3505 = vmatpush1.xpose.msra.mxu0 %v3502
    %3506 = vmatprep.subr.mxu0 0.0
    %3507 = vmatpush1.xpose.msra.mxu0 0.0
    %3508 = vmatprep.subr.mxu0 0.0
    %3509 = vmatpush1.xpose.msra.mxu0 0.0
    %3510 = vmatprep.subr.mxu0 0.0
    %3511 = vmatpush1.xpose.msra.mxu0 0.0
    %3512 = vmatprep.subr.mxu0 0.0
    %3513 = vmatpush1.xpose.msra.mxu0 0.0
    %3514 = vmatprep.subr.mxu0 0.0
    %3515 = vmatpush1.xpose.msra.mxu0 0.0
    %3516 = vmatprep.subr.mxu0 0.0
    %3517 = vmatpush1.xpose.msra.mxu0 0.0
    %3518 = vmatprep.subr.mxu0 0.0
    %3519 = vmatpush1.xpose.msra.mxu0 0.0
    %3520 = vmatprep.subr.mxu0 0.0
    %3521 = vmatpush1.xpose.msra.mxu0 0.0
    %3522 = vmatprep.subr.mxu0 0.0
    %3523 = vmatpush1.xpose.msra.mxu0 0.0
    %3524 = vmatprep.subr.mxu0 0.0
    %3525 = vmatpush1.xpose.msra.mxu0 0.0
    %3526 = vmatprep.subr.mxu0 0.0
    %3527 = vmatpush1.xpose.msra.mxu0 0.0
    %3528 = vmatprep.subr.mxu0 0.0
    %3529 = vmatpush1.xpose.msra.mxu0 0.0
    %3530 = vmatprep.subr.mxu0 0.0
    %3531 = vmatpush1.xpose.msra.mxu0 0.0
    %3532 = vmatprep.subr.mxu0 0.0
    %3533 = vmatpush1.xpose.msra.mxu0 0.0
    %3534 = vmatprep.subr.mxu0 0.0
    %3535 = vmatpush1.xpose.msra.mxu0 0.0
    %3536 = vmatprep.subr.mxu0 0.0
    %3537 = vmatpush1.xpose.msra.mxu0 0.0
    %3538 = vmatprep.subr.mxu0 0.0
    %3539 = vmatpush1.xpose.msra.mxu0 0.0
    %3540 = vmatprep.subr.mxu0 0.0
    %3541 = vmatpush1.xpose.msra.mxu0 0.0
    %3542 = vmatprep.subr.mxu0 0.0
    %3543 = vmatpush1.xpose.msra.mxu0 0.0
    %3544 = vmatprep.subr.mxu0 0.0
    %3545 = vmatpush1.xpose.msra.mxu0 0.0
    %3546 = vmatprep.subr.mxu0 0.0
    %3547 = vmatpush1.xpose.msra.mxu0 0.0
    %3548 = vmatprep.subr.mxu0 0.0
    %3549 = vmatpush1.xpose.msra.mxu0 0.0
    %3550 = vmatprep.subr.mxu0 0.0
    %3551 = vmatpush1.xpose.msra.mxu0 0.0
    %3552 = vmatprep.subr.mxu0 0.0
    %3553 = vmatpush1.xpose.msra.mxu0 0.0
    %3554 = vmatprep.subr.mxu0 0.0
    %3555 = vmatpush1.xpose.msra.mxu0 0.0
    %3556 = vmatprep.subr.mxu0 0.0
    %3557 = vmatpush1.xpose.msra.mxu0 0.0
    %3558 = vmatprep.subr.mxu0 0.0
    %3559 = vmatpush1.xpose.msra.mxu0 0.0
    %3560 = vmatprep.subr.mxu0 0.0
    %3561 = vmatpush1.xpose.msra.mxu0 0.0
    %3562 = vmatprep.subr.mxu0 0.0
    %3563 = vmatpush1.xpose.msra.mxu0 0.0
    %3564 = vmatprep.subr.mxu0 0.0
    %3565 = vmatpush1.xpose.msra.mxu0 0.0
    %3566 = vmatprep.subr.mxu0 0.0
    %3567 = vmatpush1.xpose.msra.mxu0 0.0
    %3568 = vmatprep.mubr.f32.mxu0 0.0
    %3569 = vmatmul.mubr.f32.gmra.mrb[0].mxu0 %v3499
    %v3570 = vpop.f32.mrb[0].mxu0
    %v3571 = vadd.f32 0.0, %v3570
    %v3572 = vpop.f32.mrb[0].mxu0
    %3573 = vdwg.mxu0
    %v3574 = vsel %vm206, %v3039, -inf
    %3575 = vmax.xlane.f32.xlu0 %v3574
    %v3576 = vpop.xlane.xlu0 %3575
    %v3577 = vsel %vm206, %v3115, -inf
    %3578 = vmax.xlane.f32.xlu0 %v3577
    %v3579 = vpop.xlane.xlu0 %3578
    %v3580 = vsel %vm206, %v3191, -inf
    %3581 = vmax.xlane.f32.xlu0 %v3580
    %v3582 = vpop.xlane.xlu0 %3581
    %v3583 = vsel %vm206, %v3267, -inf
    %3584 = vmax.xlane.f32.xlu0 %v3583
    %v3585 = vpop.xlane.xlu0 %3584
    %v3586 = vsel %vm206, %v3343, -inf
    %3587 = vmax.xlane.f32.xlu0 %v3586
    %v3588 = vpop.xlane.xlu0 %3587
    %v3589 = vsel %vm206, %v3419, -inf
    %3590 = vmax.xlane.f32.xlu0 %v3589
    %v3591 = vpop.xlane.xlu0 %3590
    %v3592 = vsel %vm206, %v3495, -inf
    %3593 = vmax.xlane.f32.xlu0 %v3592
    %v3594 = vpop.xlane.xlu0 %3593
    %v3595 = vsel %vm206, %v3571, -inf
    %3596 = vmax.xlane.f32.xlu0 %v3595
    %v3597 = vpop.xlane.xlu0 %3596
    %v3598 = vsub.f32 %v3039, %v3576
    %v3599 = vsub.f32 %v3115, %v3579
    %v3600 = vsub.f32 %v3191, %v3582
    %v3601 = vsub.f32 %v3267, %v3585
    %v3602 = vsub.f32 %v3343, %v3588
    %v3603 = vsub.f32 %v3419, %v3591
    %v3604 = vsub.f32 %v3495, %v3594
    %v3605 = vsub.f32 %v3571, %v3597
    %v3606 = vmul.f32 %v3598, 1.442695
    %v3607 = vpow.pop %v3606
    %v3608 = vmul.f32 %v3599, 1.442695
    %v3609 = vpow.pop %v3608
    %v3610 = vmul.f32 %v3600, 1.442695
    %v3611 = vpow.pop %v3610
    %v3612 = vmul.f32 %v3601, 1.442695
    %v3613 = vpow.pop %v3612
    %v3614 = vmul.f32 %v3602, 1.442695
    %v3615 = vpow.pop %v3614
    %v3616 = vmul.f32 %v3603, 1.442695
    %v3617 = vpow.pop %v3616
    %v3618 = vmul.f32 %v3604, 1.442695
    %v3619 = vpow.pop %v3618
    %v3620 = vmul.f32 %v3605, 1.442695
    %v3621 = vpow.pop %v3620
    %v3622 = vsel %vm206, %v3607, 0.0
    %3623 = vadd.xlane.f32.xlu0 %v3622
    %v3624 = vpop.xlane.xlu0 %3623
    %v3625 = vsel %vm206, %v3609, 0.0
    %3626 = vadd.xlane.f32.xlu0 %v3625
    %v3627 = vpop.xlane.xlu0 %3626
    %v3628 = vsel %vm206, %v3611, 0.0
    %3629 = vadd.xlane.f32.xlu0 %v3628
    %v3630 = vpop.xlane.xlu0 %3629
    %v3631 = vsel %vm206, %v3613, 0.0
    %3632 = vadd.xlane.f32.xlu0 %v3631
    %v3633 = vpop.xlane.xlu0 %3632
    %v3634 = vsel %vm206, %v3615, 0.0
    %3635 = vadd.xlane.f32.xlu0 %v3634
    %v3636 = vpop.xlane.xlu0 %3635
    %v3637 = vsel %vm206, %v3617, 0.0
    %3638 = vadd.xlane.f32.xlu0 %v3637
    %v3639 = vpop.xlane.xlu0 %3638
    %v3640 = vsel %vm206, %v3619, 0.0
    %3641 = vadd.xlane.f32.xlu0 %v3640
    %v3642 = vpop.xlane.xlu0 %3641
    %v3643 = vsel %vm206, %v3621, 0.0
    %3644 = vadd.xlane.f32.xlu0 %v3643
    %v3645 = vpop.xlane.xlu0 %3644
    %v3646 = vrcp.pop %v3624
    %v3647 = vrcp.pop %v3627
    %v3648 = vrcp.pop %v3630
    %v3649 = vrcp.pop %v3633
    %v3650 = vrcp.pop %v3636
    %v3651 = vrcp.pop %v3639
    %v3652 = vrcp.pop %v3642
    %v3653 = vrcp.pop %v3645
    %v3654 = vmul.f32 %v3607, %v3646
    %v3655 = vmul.f32 %v3609, %v3647
    %v3656 = vmul.f32 %v3611, %v3648
    %v3657 = vmul.f32 %v3613, %v3649
    %v3658 = vmul.f32 %v3615, %v3650
    %v3659 = vmul.f32 %v3617, %v3651
    %v3660 = vmul.f32 %v3619, %v3652
    %v3661 = vmul.f32 %v3621, %v3653
    %v3663 = vsel %vm206, %v3654, 0
    %3665 = vmatprep.subr.mxu0 0.0
    %3666 = vmatpush1.msra.mxu0 %v2958
    %3667 = vmatprep.subr.mxu0 0.0
    %3668 = vmatpush1.msra.mxu0 0.0
    %3669 = vmatprep.subr.mxu0 0.0
    %3670 = vmatpush1.msra.mxu0 0.0
    %3671 = vmatprep.subr.mxu0 0.0
    %3672 = vmatpush1.msra.mxu0 0.0
    %3673 = vmatprep.subr.mxu0 0.0
    %3674 = vmatpush1.msra.mxu0 0.0
    %3675 = vmatprep.subr.mxu0 0.0
    %3676 = vmatpush1.msra.mxu0 0.0
    %3677 = vmatprep.subr.mxu0 0.0
    %3678 = vmatpush1.msra.mxu0 0.0
    %3679 = vmatprep.subr.mxu0 0.0
    %3680 = vmatpush1.msra.mxu0 0.0
    %3681 = vmatprep.subr.mxu0 0.0
    %3682 = vmatpush1.msra.mxu0 0.0
    %3683 = vmatprep.subr.mxu0 0.0
    %3684 = vmatpush1.msra.mxu0 0.0
    %3685 = vmatprep.subr.mxu0 0.0
    %3686 = vmatpush1.msra.mxu0 0.0
    %3687 = vmatprep.subr.mxu0 0.0
    %3688 = vmatpush1.msra.mxu0 0.0
    %3689 = vmatprep.subr.mxu0 0.0
    %3690 = vmatpush1.msra.mxu0 0.0
    %3691 = vmatprep.subr.mxu0 0.0
    %3692 = vmatpush1.msra.mxu0 0.0
    %3693 = vmatprep.subr.mxu0 0.0
    %3694 = vmatpush1.msra.mxu0 0.0
    %3695 = vmatprep.subr.mxu0 0.0
    %3696 = vmatpush1.msra.mxu0 0.0
    %3697 = vmatprep.subr.mxu0 0.0
    %3698 = vmatpush1.msra.mxu0 0.0
    %3699 = vmatprep.subr.mxu0 0.0
    %3700 = vmatpush1.msra.mxu0 0.0
    %3701 = vmatprep.subr.mxu0 0.0
    %3702 = vmatpush1.msra.mxu0 0.0
    %3703 = vmatprep.subr.mxu0 0.0
    %3704 = vmatpush1.msra.mxu0 0.0
    %3705 = vmatprep.subr.mxu0 0.0
    %3706 = vmatpush1.msra.mxu0 0.0
    %3707 = vmatprep.subr.mxu0 0.0
    %3708 = vmatpush1.msra.mxu0 0.0
    %3709 = vmatprep.subr.mxu0 0.0
    %3710 = vmatpush1.msra.mxu0 0.0
    %3711 = vmatprep.subr.mxu0 0.0
    %3712 = vmatpush1.msra.mxu0 0.0
    %3713 = vmatprep.subr.mxu0 0.0
    %3714 = vmatpush1.msra.mxu0 0.0
    %3715 = vmatprep.subr.mxu0 0.0
    %3716 = vmatpush1.msra.mxu0 0.0
    %3717 = vmatprep.subr.mxu0 0.0
    %3718 = vmatpush1.msra.mxu0 0.0
    %3719 = vmatprep.subr.mxu0 0.0
    %3720 = vmatpush1.msra.mxu0 0.0
    %3721 = vmatprep.subr.mxu0 0.0
    %3722 = vmatpush1.msra.mxu0 0.0
    %3723 = vmatprep.subr.mxu0 0.0
    %3724 = vmatpush1.msra.mxu0 0.0
    %3725 = vmatprep.subr.mxu0 0.0
    %3726 = vmatpush1.msra.mxu0 0.0
    %3727 = vmatprep.subr.mxu0 0.0
    %3728 = vmatpush1.msra.mxu0 0.0
    %3729 = vmatprep.mubr.f32.mxu0 0.0
    %3730 = vmatmul.mubr.f32.gmra.mrb[0].mxu0 %v3663
    %v3731 = vpop.f32.mrb[0].mxu0
    %v3732 = vadd.f32 0.0, %v3731
    %v3733 = vpop.f32.mrb[0].mxu0
    %3734 = vdwg.mxu0
    %v3736 = vsel %vm206, %v3655, 0
    %3738 = vmatprep.subr.mxu0 0.0
    %3739 = vmatpush1.msra.mxu0 %v2959
    %3740 = vmatprep.subr.mxu0 0.0
    %3741 = vmatpush1.msra.mxu0 0.0
    %3742 = vmatprep.subr.mxu0 0.0
    %3743 = vmatpush1.msra.mxu0 0.0
    %3744 = vmatprep.subr.mxu0 0.0
    %3745 = vmatpush1.msra.mxu0 0.0
    %3746 = vmatprep.subr.mxu0 0.0
    %3747 = vmatpush1.msra.mxu0 0.0
    %3748 = vmatprep.subr.mxu0 0.0
    %3749 = vmatpush1.msra.mxu0 0.0
    %3750 = vmatprep.subr.mxu0 0.0
    %3751 = vmatpush1.msra.mxu0 0.0
    %3752 = vmatprep.subr.mxu0 0.0
    %3753 = vmatpush1.msra.mxu0 0.0
    %3754 = vmatprep.subr.mxu0 0.0
    %3755 = vmatpush1.msra.mxu0 0.0
    %3756 = vmatprep.subr.mxu0 0.0
    %3757 = vmatpush1.msra.mxu0 0.0
    %3758 = vmatprep.subr.mxu0 0.0
    %3759 = vmatpush1.msra.mxu0 0.0
    %3760 = vmatprep.subr.mxu0 0.0
    %3761 = vmatpush1.msra.mxu0 0.0
    %3762 = vmatprep.subr.mxu0 0.0
    %3763 = vmatpush1.msra.mxu0 0.0
    %3764 = vmatprep.subr.mxu0 0.0
    %3765 = vmatpush1.msra.mxu0 0.0
    %3766 = vmatprep.subr.mxu0 0.0
    %3767 = vmatpush1.msra.mxu0 0.0
    %3768 = vmatprep.subr.mxu0 0.0
    %3769 = vmatpush1.msra.mxu0 0.0
    %3770 = vmatprep.subr.mxu0 0.0
    %3771 = vmatpush1.msra.mxu0 0.0
    %3772 = vmatprep.subr.mxu0 0.0
    %3773 = vmatpush1.msra.mxu0 0.0
    %3774 = vmatprep.subr.mxu0 0.0
    %3775 = vmatpush1.msra.mxu0 0.0
    %3776 = vmatprep.subr.mxu0 0.0
    %3777 = vmatpush1.msra.mxu0 0.0
    %3778 = vmatprep.subr.mxu0 0.0
    %3779 = vmatpush1.msra.mxu0 0.0
    %3780 = vmatprep.subr.mxu0 0.0
    %3781 = vmatpush1.msra.mxu0 0.0
    %3782 = vmatprep.subr.mxu0 0.0
    %3783 = vmatpush1.msra.mxu0 0.0
    %3784 = vmatprep.subr.mxu0 0.0
    %3785 = vmatpush1.msra.mxu0 0.0
    %3786 = vmatprep.subr.mxu0 0.0
    %3787 = vmatpush1.msra.mxu0 0.0
    %3788 = vmatprep.subr.mxu0 0.0
    %3789 = vmatpush1.msra.mxu0 0.0
    %3790 = vmatprep.subr.mxu0 0.0
    %3791 = vmatpush1.msra.mxu0 0.0
    %3792 = vmatprep.subr.mxu0 0.0
    %3793 = vmatpush1.msra.mxu0 0.0
    %3794 = vmatprep.subr.mxu0 0.0
    %3795 = vmatpush1.msra.mxu0 0.0
    %3796 = vmatprep.subr.mxu0 0.0
    %3797 = vmatpush1.msra.mxu0 0.0
    %3798 = vmatprep.subr.mxu0 0.0
    %3799 = vmatpush1.msra.mxu0 0.0
    %3800 = vmatprep.subr.mxu0 0.0
    %3801 = vmatpush1.msra.mxu0 0.0
    %3802 = vmatprep.mubr.f32.mxu0 0.0
    %3803 = vmatmul.mubr.f32.gmra.mrb[0].mxu0 %v3736
    %v3804 = vpop.f32.mrb[0].mxu0
    %v3805 = vadd.f32 0.0, %v3804
    %v3806 = vpop.f32.mrb[0].mxu0
    %3807 = vdwg.mxu0
    %v3809 = vsel %vm206, %v3656, 0
    %3811 = vmatprep.subr.mxu0 0.0
    %3812 = vmatpush1.msra.mxu0 %v2960
    %3813 = vmatprep.subr.mxu0 0.0
    %3814 = vmatpush1.msra.mxu0 0.0
    %3815 = vmatprep.subr.mxu0 0.0
    %3816 = vmatpush1.msra.mxu0 0.0
    %3817 = vmatprep.subr.mxu0 0.0
    %3818 = vmatpush1.msra.mxu0 0.0
    %3819 = vmatprep.subr.mxu0 0.0
    %3820 = vmatpush1.msra.mxu0 0.0
    %3821 = vmatprep.subr.mxu0 0.0
    %3822 = vmatpush1.msra.mxu0 0.0
    %3823 = vmatprep.subr.mxu0 0.0
    %3824 = vmatpush1.msra.mxu0 0.0
    %3825 = vmatprep.subr.mxu0 0.0
    %3826 = vmatpush1.msra.mxu0 0.0
    %3827 = vmatprep.subr.mxu0 0.0
    %3828 = vmatpush1.msra.mxu0 0.0
    %3829 = vmatprep.subr.mxu0 0.0
    %3830 = vmatpush1.msra.mxu0 0.0
    %3831 = vmatprep.subr.mxu0 0.0
    %3832 = vmatpush1.msra.mxu0 0.0
    %3833 = vmatprep.subr.mxu0 0.0
    %3834 = vmatpush1.msra.mxu0 0.0
    %3835 = vmatprep.subr.mxu0 0.0
    %3836 = vmatpush1.msra.mxu0 0.0
    %3837 = vmatprep.subr.mxu0 0.0
    %3838 = vmatpush1.msra.mxu0 0.0
    %3839 = vmatprep.subr.mxu0 0.0
    %3840 = vmatpush1.msra.mxu0 0.0
    %3841 = vmatprep.subr.mxu0 0.0
    %3842 = vmatpush1.msra.mxu0 0.0
    %3843 = vmatprep.subr.mxu0 0.0
    %3844 = vmatpush1.msra.mxu0 0.0
    %3845 = vmatprep.subr.mxu0 0.0
    %3846 = vmatpush1.msra.mxu0 0.0
    %3847 = vmatprep.subr.mxu0 0.0
    %3848 = vmatpush1.msra.mxu0 0.0
    %3849 = vmatprep.subr.mxu0 0.0
    %3850 = vmatpush1.msra.mxu0 0.0
    %3851 = vmatprep.subr.mxu0 0.0
    %3852 = vmatpush1.msra.mxu0 0.0
    %3853 = vmatprep.subr.mxu0 0.0
    %3854 = vmatpush1.msra.mxu0 0.0
    %3855 = vmatprep.subr.mxu0 0.0
    %3856 = vmatpush1.msra.mxu0 0.0
    %3857 = vmatprep.subr.mxu0 0.0
    %3858 = vmatpush1.msra.mxu0 0.0
    %3859 = vmatprep.subr.mxu0 0.0
    %3860 = vmatpush1.msra.mxu0 0.0
    %3861 = vmatprep.subr.mxu0 0.0
    %3862 = vmatpush1.msra.mxu0 0.0
    %3863 = vmatprep.subr.mxu0 0.0
    %3864 = vmatpush1.msra.mxu0 0.0
    %3865 = vmatprep.subr.mxu0 0.0
    %3866 = vmatpush1.msra.mxu0 0.0
    %3867 = vmatprep.subr.mxu0 0.0
    %3868 = vmatpush1.msra.mxu0 0.0
    %3869 = vmatprep.subr.mxu0 0.0
    %3870 = vmatpush1.msra.mxu0 0.0
    %3871 = vmatprep.subr.mxu0 0.0
    %3872 = vmatpush1.msra.mxu0 0.0
    %3873 = vmatprep.subr.mxu0 0.0
    %3874 = vmatpush1.msra.mxu0 0.0
    %3875 = vmatprep.mubr.f32.mxu0 0.0
    %3876 = vmatmul.mubr.f32.gmra.mrb[0].mxu0 %v3809
    %v3877 = vpop.f32.mrb[0].mxu0
    %v3878 = vadd.f32 0.0, %v3877
    %v3879 = vpop.f32.mrb[0].mxu0
    %3880 = vdwg.mxu0
    %v3882 = vsel %vm206, %v3657, 0
    %3884 = vmatprep.subr.mxu0 0.0
    %3885 = vmatpush1.msra.mxu0 %v2961
    %3886 = vmatprep.subr.mxu0 0.0
    %3887 = vmatpush1.msra.mxu0 0.0
    %3888 = vmatprep.subr.mxu0 0.0
    %3889 = vmatpush1.msra.mxu0 0.0
    %3890 = vmatprep.subr.mxu0 0.0
    %3891 = vmatpush1.msra.mxu0 0.0
    %3892 = vmatprep.subr.mxu0 0.0
    %3893 = vmatpush1.msra.mxu0 0.0
    %3894 = vmatprep.subr.mxu0 0.0
    %3895 = vmatpush1.msra.mxu0 0.0
    %3896 = vmatprep.subr.mxu0 0.0
    %3897 = vmatpush1.msra.mxu0 0.0
    %3898 = vmatprep.subr.mxu0 0.0
    %3899 = vmatpush1.msra.mxu0 0.0
    %3900 = vmatprep.subr.mxu0 0.0
    %3901 = vmatpush1.msra.mxu0 0.0
    %3902 = vmatprep.subr.mxu0 0.0
    %3903 = vmatpush1.msra.mxu0 0.0
    %3904 = vmatprep.subr.mxu0 0.0
    %3905 = vmatpush1.msra.mxu0 0.0
    %3906 = vmatprep.subr.mxu0 0.0
    %3907 = vmatpush1.msra.mxu0 0.0
    %3908 = vmatprep.subr.mxu0 0.0
    %3909 = vmatpush1.msra.mxu0 0.0
    %3910 = vmatprep.subr.mxu0 0.0
    %3911 = vmatpush1.msra.mxu0 0.0
    %3912 = vmatprep.subr.mxu0 0.0
    %3913 = vmatpush1.msra.mxu0 0.0
    %3914 = vmatprep.subr.mxu0 0.0
    %3915 = vmatpush1.msra.mxu0 0.0
    %3916 = vmatprep.subr.mxu0 0.0
    %3917 = vmatpush1.msra.mxu0 0.0
    %3918 = vmatprep.subr.mxu0 0.0
    %3919 = vmatpush1.msra.mxu0 0.0
    %3920 = vmatprep.subr.mxu0 0.0
    %3921 = vmatpush1.msra.mxu0 0.0
    %3922 = vmatprep.subr.mxu0 0.0
    %3923 = vmatpush1.msra.mxu0 0.0
    %3924 = vmatprep.subr.mxu0 0.0
    %3925 = vmatpush1.msra.mxu0 0.0
    %3926 = vmatprep.subr.mxu0 0.0
    %3927 = vmatpush1.msra.mxu0 0.0
    %3928 = vmatprep.subr.mxu0 0.0
    %3929 = vmatpush1.msra.mxu0 0.0
    %3930 = vmatprep.subr.mxu0 0.0
    %3931 = vmatpush1.msra.mxu0 0.0
    %3932 = vmatprep.subr.mxu0 0.0
    %3933 = vmatpush1.msra.mxu0 0.0
    %3934 = vmatprep.subr.mxu0 0.0
    %3935 = vmatpush1.msra.mxu0 0.0
    %3936 = vmatprep.subr.mxu0 0.0
    %3937 = vmatpush1.msra.mxu0 0.0
    %3938 = vmatprep.subr.mxu0 0.0
    %3939 = vmatpush1.msra.mxu0 0.0
    %3940 = vmatprep.subr.mxu0 0.0
    %3941 = vmatpush1.msra.mxu0 0.0
    %3942 = vmatprep.subr.mxu0 0.0
    %3943 = vmatpush1.msra.mxu0 0.0
    %3944 = vmatprep.subr.mxu0 0.0
    %3945 = vmatpush1.msra.mxu0 0.0
    %3946 = vmatprep.subr.mxu0 0.0
    %3947 = vmatpush1.msra.mxu0 0.0
    %3948 = vmatprep.mubr.f32.mxu0 0.0
    %3949 = vmatmul.mubr.f32.gmra.mrb[0].mxu0 %v3882
    %v3950 = vpop.f32.mrb[0].mxu0
    %v3951 = vadd.f32 0.0, %v3950
    %v3952 = vpop.f32.mrb[0].mxu0
    %3953 = vdwg.mxu0
    %v3955 = vsel %vm206, %v3658, 0
    %3957 = vmatprep.subr.mxu0 0.0
    %3958 = vmatpush1.msra.mxu0 %v2962
    %3959 = vmatprep.subr.mxu0 0.0
    %3960 = vmatpush1.msra.mxu0 0.0
    %3961 = vmatprep.subr.mxu0 0.0
    %3962 = vmatpush1.msra.mxu0 0.0
    %3963 = vmatprep.subr.mxu0 0.0
    %3964 = vmatpush1.msra.mxu0 0.0
    %3965 = vmatprep.subr.mxu0 0.0
    %3966 = vmatpush1.msra.mxu0 0.0
    %3967 = vmatprep.subr.mxu0 0.0
    %3968 = vmatpush1.msra.mxu0 0.0
    %3969 = vmatprep.subr.mxu0 0.0
    %3970 = vmatpush1.msra.mxu0 0.0
    %3971 = vmatprep.subr.mxu0 0.0
    %3972 = vmatpush1.msra.mxu0 0.0
    %3973 = vmatprep.subr.mxu0 0.0
    %3974 = vmatpush1.msra.mxu0 0.0
    %3975 = vmatprep.subr.mxu0 0.0
    %3976 = vmatpush1.msra.mxu0 0.0
    %3977 = vmatprep.subr.mxu0 0.0
    %3978 = vmatpush1.msra.mxu0 0.0
    %3979 = vmatprep.subr.mxu0 0.0
    %3980 = vmatpush1.msra.mxu0 0.0
    %3981 = vmatprep.subr.mxu0 0.0
    %3982 = vmatpush1.msra.mxu0 0.0
    %3983 = vmatprep.subr.mxu0 0.0
    %3984 = vmatpush1.msra.mxu0 0.0
    %3985 = vmatprep.subr.mxu0 0.0
    %3986 = vmatpush1.msra.mxu0 0.0
    %3987 = vmatprep.subr.mxu0 0.0
    %3988 = vmatpush1.msra.mxu0 0.0
    %3989 = vmatprep.subr.mxu0 0.0
    %3990 = vmatpush1.msra.mxu0 0.0
    %3991 = vmatprep.subr.mxu0 0.0
    %3992 = vmatpush1.msra.mxu0 0.0
    %3993 = vmatprep.subr.mxu0 0.0
    %3994 = vmatpush1.msra.mxu0 0.0
    %3995 = vmatprep.subr.mxu0 0.0
    %3996 = vmatpush1.msra.mxu0 0.0
    %3997 = vmatprep.subr.mxu0 0.0
    %3998 = vmatpush1.msra.mxu0 0.0
    %3999 = vmatprep.subr.mxu0 0.0
    %4000 = vmatpush1.msra.mxu0 0.0
    %4001 = vmatprep.subr.mxu0 0.0
    %4002 = vmatpush1.msra.mxu0 0.0
    %4003 = vmatprep.subr.mxu0 0.0
    %4004 = vmatpush1.msra.mxu0 0.0
    %4005 = vmatprep.subr.mxu0 0.0
    %4006 = vmatpush1.msra.mxu0 0.0
    %4007 = vmatprep.subr.mxu0 0.0
    %4008 = vmatpush1.msra.mxu0 0.0
    %4009 = vmatprep.subr.mxu0 0.0
    %4010 = vmatpush1.msra.mxu0 0.0
    %4011 = vmatprep.subr.mxu0 0.0
    %4012 = vmatpush1.msra.mxu0 0.0
    %4013 = vmatprep.subr.mxu0 0.0
    %4014 = vmatpush1.msra.mxu0 0.0
    %4015 = vmatprep.subr.mxu0 0.0
    %4016 = vmatpush1.msra.mxu0 0.0
    %4017 = vmatprep.subr.mxu0 0.0
    %4018 = vmatpush1.msra.mxu0 0.0
    %4019 = vmatprep.subr.mxu0 0.0
    %4020 = vmatpush1.msra.mxu0 0.0
    %4021 = vmatprep.mubr.f32.mxu0 0.0
    %4022 = vmatmul.mubr.f32.gmra.mrb[0].mxu0 %v3955
    %v4023 = vpop.f32.mrb[0].mxu0
    %v4024 = vadd.f32 0.0, %v4023
    %v4025 = vpop.f32.mrb[0].mxu0
    %4026 = vdwg.mxu0
    %v4028 = vsel %vm206, %v3659, 0
    %4030 = vmatprep.subr.mxu0 0.0
    %4031 = vmatpush1.msra.mxu0 %v2963
    %4032 = vmatprep.subr.mxu0 0.0
    %4033 = vmatpush1.msra.mxu0 0.0
    %4034 = vmatprep.subr.mxu0 0.0
    %4035 = vmatpush1.msra.mxu0 0.0
    %4036 = vmatprep.subr.mxu0 0.0
    %4037 = vmatpush1.msra.mxu0 0.0
    %4038 = vmatprep.subr.mxu0 0.0
    %4039 = vmatpush1.msra.mxu0 0.0
    %4040 = vmatprep.subr.mxu0 0.0
    %4041 = vmatpush1.msra.mxu0 0.0
    %4042 = vmatprep.subr.mxu0 0.0
    %4043 = vmatpush1.msra.mxu0 0.0
    %4044 = vmatprep.subr.mxu0 0.0
    %4045 = vmatpush1.msra.mxu0 0.0
    %4046 = vmatprep.subr.mxu0 0.0
    %4047 = vmatpush1.msra.mxu0 0.0
    %4048 = vmatprep.subr.mxu0 0.0
    %4049 = vmatpush1.msra.mxu0 0.0
    %4050 = vmatprep.subr.mxu0 0.0
    %4051 = vmatpush1.msra.mxu0 0.0
    %4052 = vmatprep.subr.mxu0 0.0
    %4053 = vmatpush1.msra.mxu0 0.0
    %4054 = vmatprep.subr.mxu0 0.0
    %4055 = vmatpush1.msra.mxu0 0.0
    %4056 = vmatprep.subr.mxu0 0.0
    %4057 = vmatpush1.msra.mxu0 0.0
    %4058 = vmatprep.subr.mxu0 0.0
    %4059 = vmatpush1.msra.mxu0 0.0
    %4060 = vmatprep.subr.mxu0 0.0
    %4061 = vmatpush1.msra.mxu0 0.0
    %4062 = vmatprep.subr.mxu0 0.0
    %4063 = vmatpush1.msra.mxu0 0.0
    %4064 = vmatprep.subr.mxu0 0.0
    %4065 = vmatpush1.msra.mxu0 0.0
    %4066 = vmatprep.subr.mxu0 0.0
    %4067 = vmatpush1.msra.mxu0 0.0
    %4068 = vmatprep.subr.mxu0 0.0
    %4069 = vmatpush1.msra.mxu0 0.0
    %4070 = vmatprep.subr.mxu0 0.0
    %4071 = vmatpush1.msra.mxu0 0.0
    %4072 = vmatprep.subr.mxu0 0.0
    %4073 = vmatpush1.msra.mxu0 0.0
    %4074 = vmatprep.subr.mxu0 0.0
    %4075 = vmatpush1.msra.mxu0 0.0
    %4076 = vmatprep.subr.mxu0 0.0
    %4077 = vmatpush1.msra.mxu0 0.0
    %4078 = vmatprep.subr.mxu0 0.0
    %4079 = vmatpush1.msra.mxu0 0.0
    %4080 = vmatprep.subr.mxu0 0.0
    %4081 = vmatpush1.msra.mxu0 0.0
    %4082 = vmatprep.subr.mxu0 0.0
    %4083 = vmatpush1.msra.mxu0 0.0
    %4084 = vmatprep.subr.mxu0 0.0
    %4085 = vmatpush1.msra.mxu0 0.0
    %4086 = vmatprep.subr.mxu0 0.0
    %4087 = vmatpush1.msra.mxu0 0.0
    %4088 = vmatprep.subr.mxu0 0.0
    %4089 = vmatpush1.msra.mxu0 0.0
    %4090 = vmatprep.subr.mxu0 0.0
    %4091 = vmatpush1.msra.mxu0 0.0
    %4092 = vmatprep.subr.mxu0 0.0
    %4093 = vmatpush1.msra.mxu0 0.0
    %4094 = vmatprep.mubr.f32.mxu0 0.0
    %4095 = vmatmul.mubr.f32.gmra.mrb[0].mxu0 %v4028
    %v4096 = vpop.f32.mrb[0].mxu0
    %v4097 = vadd.f32 0.0, %v4096
    %v4098 = vpop.f32.mrb[0].mxu0
    %4099 = vdwg.mxu0
    %v4101 = vsel %vm206, %v3660, 0
    %4103 = vmatprep.subr.mxu0 0.0
    %4104 = vmatpush1.msra.mxu0 %v2964
    %4105 = vmatprep.subr.mxu0 0.0
    %4106 = vmatpush1.msra.mxu0 0.0
    %4107 = vmatprep.subr.mxu0 0.0
    %4108 = vmatpush1.msra.mxu0 0.0
    %4109 = vmatprep.subr.mxu0 0.0
    %4110 = vmatpush1.msra.mxu0 0.0
    %4111 = vmatprep.subr.mxu0 0.0
    %4112 = vmatpush1.msra.mxu0 0.0
    %4113 = vmatprep.subr.mxu0 0.0
    %4114 = vmatpush1.msra.mxu0 0.0
    %4115 = vmatprep.subr.mxu0 0.0
    %4116 = vmatpush1.msra.mxu0 0.0
    %4117 = vmatprep.subr.mxu0 0.0
    %4118 = vmatpush1.msra.mxu0 0.0
    %4119 = vmatprep.subr.mxu0 0.0
    %4120 = vmatpush1.msra.mxu0 0.0
    %4121 = vmatprep.subr.mxu0 0.0
    %4122 = vmatpush1.msra.mxu0 0.0
    %4123 = vmatprep.subr.mxu0 0.0
    %4124 = vmatpush1.msra.mxu0 0.0
    %4125 = vmatprep.subr.mxu0 0.0
    %4126 = vmatpush1.msra.mxu0 0.0
    %4127 = vmatprep.subr.mxu0 0.0
    %4128 = vmatpush1.msra.mxu0 0.0
    %4129 = vmatprep.subr.mxu0 0.0
    %4130 = vmatpush1.msra.mxu0 0.0
    %4131 = vmatprep.subr.mxu0 0.0
    %4132 = vmatpush1.msra.mxu0 0.0
    %4133 = vmatprep.subr.mxu0 0.0
    %4134 = vmatpush1.msra.mxu0 0.0
    %4135 = vmatprep.subr.mxu0 0.0
    %4136 = vmatpush1.msra.mxu0 0.0
    %4137 = vmatprep.subr.mxu0 0.0
    %4138 = vmatpush1.msra.mxu0 0.0
    %4139 = vmatprep.subr.mxu0 0.0
    %4140 = vmatpush1.msra.mxu0 0.0
    %4141 = vmatprep.subr.mxu0 0.0
    %4142 = vmatpush1.msra.mxu0 0.0
    %4143 = vmatprep.subr.mxu0 0.0
    %4144 = vmatpush1.msra.mxu0 0.0
    %4145 = vmatprep.subr.mxu0 0.0
    %4146 = vmatpush1.msra.mxu0 0.0
    %4147 = vmatprep.subr.mxu0 0.0
    %4148 = vmatpush1.msra.mxu0 0.0
    %4149 = vmatprep.subr.mxu0 0.0
    %4150 = vmatpush1.msra.mxu0 0.0
    %4151 = vmatprep.subr.mxu0 0.0
    %4152 = vmatpush1.msra.mxu0 0.0
    %4153 = vmatprep.subr.mxu0 0.0
    %4154 = vmatpush1.msra.mxu0 0.0
    %4155 = vmatprep.subr.mxu0 0.0
    %4156 = vmatpush1.msra.mxu0 0.0
    %4157 = vmatprep.subr.mxu0 0.0
    %4158 = vmatpush1.msra.mxu0 0.0
    %4159 = vmatprep.subr.mxu0 0.0
    %4160 = vmatpush1.msra.mxu0 0.0
    %4161 = vmatprep.subr.mxu0 0.0
    %4162 = vmatpush1.msra.mxu0 0.0
    %4163 = vmatprep.subr.mxu0 0.0
    %4164 = vmatpush1.msra.mxu0 0.0
    %4165 = vmatprep.subr.mxu0 0.0
    %4166 = vmatpush1.msra.mxu0 0.0
    %4167 = vmatprep.mubr.f32.mxu0 0.0
    %4168 = vmatmul.mubr.f32.gmra.mrb[0].mxu0 %v4101
    %v4169 = vpop.f32.mrb[0].mxu0
    %v4170 = vadd.f32 0.0, %v4169
    %v4171 = vpop.f32.mrb[0].mxu0
    %4172 = vdwg.mxu0
    %v4174 = vsel %vm206, %v3661, 0
    %4176 = vmatprep.subr.mxu0 0.0
    %4177 = vmatpush1.msra.mxu0 %v2965
    %4178 = vmatprep.subr.mxu0 0.0
    %4179 = vmatpush1.msra.mxu0 0.0
    %4180 = vmatprep.subr.mxu0 0.0
    %4181 = vmatpush1.msra.mxu0 0.0
    %4182 = vmatprep.subr.mxu0 0.0
    %4183 = vmatpush1.msra.mxu0 0.0
    %4184 = vmatprep.subr.mxu0 0.0
    %4185 = vmatpush1.msra.mxu0 0.0
    %4186 = vmatprep.subr.mxu0 0.0
    %4187 = vmatpush1.msra.mxu0 0.0
    %4188 = vmatprep.subr.mxu0 0.0
    %4189 = vmatpush1.msra.mxu0 0.0
    %4190 = vmatprep.subr.mxu0 0.0
    %4191 = vmatpush1.msra.mxu0 0.0
    %4192 = vmatprep.subr.mxu0 0.0
    %4193 = vmatpush1.msra.mxu0 0.0
    %4194 = vmatprep.subr.mxu0 0.0
    %4195 = vmatpush1.msra.mxu0 0.0
    %4196 = vmatprep.subr.mxu0 0.0
    %4197 = vmatpush1.msra.mxu0 0.0
    %4198 = vmatprep.subr.mxu0 0.0
    %4199 = vmatpush1.msra.mxu0 0.0
    %4200 = vmatprep.subr.mxu0 0.0
    %4201 = vmatpush1.msra.mxu0 0.0
    %4202 = vmatprep.subr.mxu0 0.0
    %4203 = vmatpush1.msra.mxu0 0.0
    %4204 = vmatprep.subr.mxu0 0.0
    %4205 = vmatpush1.msra.mxu0 0.0
    %4206 = vmatprep.subr.mxu0 0.0
    %4207 = vmatpush1.msra.mxu0 0.0
    %4208 = vmatprep.subr.mxu0 0.0
    %4209 = vmatpush1.msra.mxu0 0.0
    %4210 = vmatprep.subr.mxu0 0.0
    %4211 = vmatpush1.msra.mxu0 0.0
    %4212 = vmatprep.subr.mxu0 0.0
    %4213 = vmatpush1.msra.mxu0 0.0
    %4214 = vmatprep.subr.mxu0 0.0
    %4215 = vmatpush1.msra.mxu0 0.0
    %4216 = vmatprep.subr.mxu0 0.0
    %4217 = vmatpush1.msra.mxu0 0.0
    %4218 = vmatprep.subr.mxu0 0.0
    %4219 = vmatpush1.msra.mxu0 0.0
    %4220 = vmatprep.subr.mxu0 0.0
    %4221 = vmatpush1.msra.mxu0 0.0
    %4222 = vmatprep.subr.mxu0 0.0
    %4223 = vmatpush1.msra.mxu0 0.0
    %4224 = vmatprep.subr.mxu0 0.0
    %4225 = vmatpush1.msra.mxu0 0.0
    %4226 = vmatprep.subr.mxu0 0.0
    %4227 = vmatpush1.msra.mxu0 0.0
    %4228 = vmatprep.subr.mxu0 0.0
    %4229 = vmatpush1.msra.mxu0 0.0
    %4230 = vmatprep.subr.mxu0 0.0
    %4231 = vmatpush1.msra.mxu0 0.0
    %4232 = vmatprep.subr.mxu0 0.0
    %4233 = vmatpush1.msra.mxu0 0.0
    %4234 = vmatprep.subr.mxu0 0.0
    %4235 = vmatpush1.msra.mxu0 0.0
    %4236 = vmatprep.subr.mxu0 0.0
    %4237 = vmatpush1.msra.mxu0 0.0
    %4238 = vmatprep.subr.mxu0 0.0
    %4239 = vmatpush1.msra.mxu0 0.0
    %4240 = vmatprep.mubr.f32.mxu0 0.0
    %4241 = vmatmul.mubr.f32.gmra.mrb[0].mxu0 %v4174
    %v4242 = vpop.f32.mrb[0].mxu0
    %v4243 = vadd.f32 0.0, %v4242
    %v4244 = vpop.f32.mrb[0].mxu0
    %4245 = vdwg.mxu0
    %4246 = vst.msk [vmem:[#allocation2 + $0x8] sm:$0xff] %vm206, %v3732
    %4248 = vrot.lane.b32.xlu0 %v3805, 8
    %v4249 = vpop.permute.xlu0 %4248
    %4251 = vst.msk [vmem:[#allocation2 + $0x8] sm:$0xff] %vm2214, %v4249
    %4253 = vrot.lane.b32.xlu0 %v3878, 16
    %v4254 = vpop.permute.xlu0 %4253
    %4256 = vst.msk [vmem:[#allocation2 + $0x8] sm:$0xff] %vm2220, %v4254
    %4258 = vrot.lane.b32.xlu0 %v3951, 24
    %v4259 = vpop.permute.xlu0 %4258
    %4261 = vst.msk [vmem:[#allocation2 + $0x8] sm:$0xff] %vm2226, %v4259
    %4263 = vrot.lane.b32.xlu0 %v4024, 32
    %v4264 = vpop.permute.xlu0 %4263
    %4266 = vst.msk [vmem:[#allocation2 + $0x8] sm:$0xff] %vm2232, %v4264
    %4268 = vrot.lane.b32.xlu0 %v4097, 40
    %v4269 = vpop.permute.xlu0 %4268
    %4271 = vst.msk [vmem:[#allocation2 + $0x8] sm:$0xff] %vm2238, %v4269
    %4273 = vrot.lane.b32.xlu0 %v4170, 48
    %v4274 = vpop.permute.xlu0 %4273
    %4276 = vst.msk [vmem:[#allocation2 + $0x8] sm:$0xff] %vm2244, %v4274
    %4278 = vrot.lane.b32.xlu0 %v4243, 56
    %v4279 = vpop.permute.xlu0 %4278
    %4281 = vst.msk [vmem:[#allocation2 + $0x8] sm:$0xff] %vm2250, %v4279
    %v4282 = vld [vmem:[#allocation2] sm:$0xff]
    %v4283 = vld [vmem:[#allocation2 + $0x8] sm:$0xff]
    %v4284 = vld [vmem:[%s5] sm:$0xff]
    %v4285 = vld [vmem:[%s5 + $0x8] sm:$0xff]
    %v4286 = vld [vmem:[%s5 + $0x10] sm:$0xff]
    %v4287 = vld [vmem:[%s5 + $0x18] sm:$0xff]
    %v4288 = vld [vmem:[%s5 + $0x20] sm:$0xff]
    %v4289 = vld [vmem:[%s5 + $0x28] sm:$0xff]
    %v4290 = vld [vmem:[%s5 + $0x30] sm:$0xff]
    %v4291 = vld [vmem:[%s5 + $0x38] sm:$0xff]
    %v4292 = vld [vmem:[%s6] sm:$0x1]
    %v4294 = vlaneseq
    %v4295 = vshrl.u32 %v4294, 7
    %v4296 = vsub.s32 0, %v4295
    %v4297 = vrot.slane %v4292, %v4296
    %v4300 = vsel %vm49, %v4282, 0
    %v4303 = vsel %vm49, %v4283, 0
    %4305 = vmatprep.subr.mxu0 0.0
    %4306 = vmatpush1.msra.mxu0 %v4284
    %4307 = vmatprep.subr.mxu0 0.0
    %4308 = vmatpush1.msra.mxu0 %v4285
    %4309 = vmatprep.subr.mxu0 0.0
    %4310 = vmatpush1.msra.mxu0 %v4286
    %4311 = vmatprep.subr.mxu0 0.0
    %4312 = vmatpush1.msra.mxu0 %v4287
    %4313 = vmatprep.subr.mxu0 0.0
    %4314 = vmatpush1.msra.mxu0 %v4288
    %4315 = vmatprep.subr.mxu0 0.0
    %4316 = vmatpush1.msra.mxu0 %v4289
    %4317 = vmatprep.subr.mxu0 0.0
    %4318 = vmatpush1.msra.mxu0 %v4290
    %4319 = vmatprep.subr.mxu0 0.0
    %4320 = vmatpush1.msra.mxu0 %v4291
    %4321 = vmatprep.subr.mxu0 0.0
    %4322 = vmatpush1.msra.mxu0 0.0
    %4323 = vmatprep.subr.mxu0 0.0
    %4324 = vmatpush1.msra.mxu0 0.0
    %4325 = vmatprep.subr.mxu0 0.0
    %4326 = vmatpush1.msra.mxu0 0.0
    %4327 = vmatprep.subr.mxu0 0.0
    %4328 = vmatpush1.msra.mxu0 0.0
    %4329 = vmatprep.subr.mxu0 0.0
    %4330 = vmatpush1.msra.mxu0 0.0
    %4331 = vmatprep.subr.mxu0 0.0
    %4332 = vmatpush1.msra.mxu0 0.0
    %4333 = vmatprep.subr.mxu0 0.0
    %4334 = vmatpush1.msra.mxu0 0.0
    %4335 = vmatprep.subr.mxu0 0.0
    %4336 = vmatpush1.msra.mxu0 0.0
    %4337 = vmatprep.subr.mxu0 0.0
    %4338 = vmatpush1.msra.mxu0 0.0
    %4339 = vmatprep.subr.mxu0 0.0
    %4340 = vmatpush1.msra.mxu0 0.0
    %4341 = vmatprep.subr.mxu0 0.0
    %4342 = vmatpush1.msra.mxu0 0.0
    %4343 = vmatprep.subr.mxu0 0.0
    %4344 = vmatpush1.msra.mxu0 0.0
    %4345 = vmatprep.subr.mxu0 0.0
    %4346 = vmatpush1.msra.mxu0 0.0
    %4347 = vmatprep.subr.mxu0 0.0
    %4348 = vmatpush1.msra.mxu0 0.0
    %4349 = vmatprep.subr.mxu0 0.0
    %4350 = vmatpush1.msra.mxu0 0.0
    %4351 = vmatprep.subr.mxu0 0.0
    %4352 = vmatpush1.msra.mxu0 0.0
    %4353 = vmatprep.subr.mxu0 0.0
    %4354 = vmatpush1.msra.mxu0 0.0
    %4355 = vmatprep.subr.mxu0 0.0
    %4356 = vmatpush1.msra.mxu0 0.0
    %4357 = vmatprep.subr.mxu0 0.0
    %4358 = vmatpush1.msra.mxu0 0.0
    %4359 = vmatprep.subr.mxu0 0.0
    %4360 = vmatpush1.msra.mxu0 0.0
    %4361 = vmatprep.subr.mxu0 0.0
    %4362 = vmatpush1.msra.mxu0 0.0
    %4363 = vmatprep.subr.mxu0 0.0
    %4364 = vmatpush1.msra.mxu0 0.0
    %4365 = vmatprep.subr.mxu0 0.0
    %4366 = vmatpush1.msra.mxu0 0.0
    %4367 = vmatprep.subr.mxu0 0.0
    %4368 = vmatpush1.msra.mxu0 0.0
    %4369 = vmatprep.mubr.f32.mxu0 0.0
    %4370 = vmatmul.mubr.f32.gmra.mrb[0].mxu0 %v4300
    %v4371 = vpop.f32.mrb[0].mxu0
    %v4372 = vadd.f32 %v4297, %v4371
    %v4373 = vpop.f32.mrb[0].mxu0
    %4374 = vmatprep.mubr.f32.mxu0 0.0
    %4375 = vmatmul.mubr.f32.gmra.mrb[0].mxu0 %v4303
    %v4376 = vpop.f32.mrb[0].mxu0
    %v4377 = vadd.f32 %v4297, %v4376
    %v4378 = vpop.f32.mrb[0].mxu0
    %4379 = vdwg.mxu0
    %v4380 = vadd.f32 %v4372, %v45
    %v4381 = vadd.f32 %v4377, %v46
    %v4382 = vld [vmem:[%s7] sm:$0x1]
    %v4383 = vld [vmem:[%s8] sm:$0x1]
    %v4384 = vsel %vm49, %v4380, 0.0
    %4385 = vadd.xlane.f32.xlu0 %v4384
    %v4386 = vpop.xlane.xlu0 %4385
    %v4387 = vsel %vm49, %v4381, 0.0
    %4388 = vadd.xlane.f32.xlu0 %v4387
    %v4389 = vpop.xlane.xlu0 %4388
    %v4390 = vmul.f32 %v4386, %v56
    %v4391 = vmul.f32 %v4389, %v56
    %v4392 = vsub.f32 %v4380, %v4390
    %v4393 = vsub.f32 %v4381, %v4391
    %v4394 = vmul.f32 %v4392, %v4392
    %v4395 = vmul.f32 %v4393, %v4393
    %v4396 = vsel %vm49, %v4394, 0.0
    %4397 = vadd.xlane.f32.xlu0 %v4396
    %v4398 = vpop.xlane.xlu0 %4397
    %v4399 = vsel %vm49, %v4395, 0.0
    %4400 = vadd.xlane.f32.xlu0 %v4399
    %v4401 = vpop.xlane.xlu0 %4400
    %v4402 = vmul.f32 %v4398, %v56
    %v4403 = vmul.f32 %v4401, %v56
    %v4404 = vadd.f32 %v4402, 1e-05
    %v4405 = vadd.f32 %v4403, 1e-05
    %v4406 = vrsqrt.pop %v4404
    %v4407 = vrsqrt.pop %v4405
    %v4408 = vmul.f32 %v4392, %v4406
    %v4409 = vmul.f32 %v4393, %v4407
    %v4411 = vlaneseq
    %v4412 = vshrl.u32 %v4411, 7
    %v4413 = vsub.s32 0, %v4412
    %v4414 = vrot.slane %v4382, %v4413
    %v4416 = vmul.f32 %v4408, %v4414
    %v4417 = vmul.f32 %v4409, %v4414
    %v4419 = vlaneseq
    %v4420 = vshrl.u32 %v4419, 7
    %v4421 = vsub.s32 0, %v4420
    %v4422 = vrot.slane %v4383, %v4421
    %v4424 = vadd.f32 %v4416, %v4422
    %v4425 = vadd.f32 %v4417, %v4422
    %v4426 = vld [vmem:[%s9] sm:$0xff]
    %v4427 = vld [vmem:[%s9 + $0x8] sm:$0xff]
    %v4428 = vld [vmem:[%s9 + $0x10] sm:$0xff]
    %v4429 = vld [vmem:[%s9 + $0x18] sm:$0xff]
    %v4430 = vld [vmem:[%s9 + $0x20] sm:$0xff]
    %v4431 = vld [vmem:[%s9 + $0x28] sm:$0xff]
    %v4432 = vld [vmem:[%s9 + $0x30] sm:$0xff]
    %v4433 = vld [vmem:[%s9 + $0x38] sm:$0xff]
    %v4434 = vld [vmem:[%s9 + $0x40] sm:$0xff]
    %v4435 = vld [vmem:[%s9 + $0x48] sm:$0xff]
    %v4436 = vld [vmem:[%s9 + $0x50] sm:$0xff]
    %v4437 = vld [vmem:[%s9 + $0x58] sm:$0xff]
    %v4438 = vld [vmem:[%s9 + $0x60] sm:$0xff]
    %v4439 = vld [vmem:[%s9 + $0x68] sm:$0xff]
    %v4440 = vld [vmem:[%s9 + $0x70] sm:$0xff]
    %v4441 = vld [vmem:[%s9 + $0x78] sm:$0xff]
    %v4442 = vld [vmem:[%s10] sm:$0x3]
    %v4444 = vlaneseq
    %v4445 = vshrl.u32 %v4444, 7
    %v4446 = vsub.s32 0, %v4445
    %v4447 = vrot.slane %v4442, %v4446
    %v4448 = vlaneseq
    %v4449 = vshrl.u32 %v4448, 7
    %v4450 = vsub.s32 1, %v4449
    %v4451 = vrot.slane %v4442, %v4450
    %v4455 = vsel %vm49, %v4424, 0
    %v4458 = vsel %vm49, %v4425, 0
    %4460 = vmatprep.subr.mxu0 %v4427
    %4461 = vmatpush1.msra.mxu0 %v4426
    %4462 = vmatprep.subr.mxu0 %v4429
    %4463 = vmatpush1.msra.mxu0 %v4428
    %4464 = vmatprep.subr.mxu0 %v4431
    %4465 = vmatpush1.msra.mxu0 %v4430
    %4466 = vmatprep.subr.mxu0 %v4433
    %4467 = vmatpush1.msra.mxu0 %v4432
    %4468 = vmatprep.subr.mxu0 %v4435
    %4469 = vmatpush1.msra.mxu0 %v4434
    %4470 = vmatprep.subr.mxu0 %v4437
    %4471 = vmatpush1.msra.mxu0 %v4436
    %4472 = vmatprep.subr.mxu0 %v4439
    %4473 = vmatpush1.msra.mxu0 %v4438
    %4474 = vmatprep.subr.mxu0 %v4441
    %4475 = vmatpush1.msra.mxu0 %v4440
    %4476 = vmatprep.subr.mxu0 0.0
    %4477 = vmatpush1.msra.mxu0 0.0
    %4478 = vmatprep.subr.mxu0 0.0
    %4479 = vmatpush1.msra.mxu0 0.0
    %4480 = vmatprep.subr.mxu0 0.0
    %4481 = vmatpush1.msra.mxu0 0.0
    %4482 = vmatprep.subr.mxu0 0.0
    %4483 = vmatpush1.msra.mxu0 0.0
    %4484 = vmatprep.subr.mxu0 0.0
    %4485 = vmatpush1.msra.mxu0 0.0
    %4486 = vmatprep.subr.mxu0 0.0
    %4487 = vmatpush1.msra.mxu0 0.0
    %4488 = vmatprep.subr.mxu0 0.0
    %4489 = vmatpush1.msra.mxu0 0.0
    %4490 = vmatprep.subr.mxu0 0.0
    %4491 = vmatpush1.msra.mxu0 0.0
    %4492 = vmatprep.subr.mxu0 0.0
    %4493 = vmatpush1.msra.mxu0 0.0
    %4494 = vmatprep.subr.mxu0 0.0
    %4495 = vmatpush1.msra.mxu0 0.0
    %4496 = vmatprep.subr.mxu0 0.0
    %4497 = vmatpush1.msra.mxu0 0.0
    %4498 = vmatprep.subr.mxu0 0.0
    %4499 = vmatpush1.msra.mxu0 0.0
    %4500 = vmatprep.subr.mxu0 0.0
    %4501 = vmatpush1.msra.mxu0 0.0
    %4502 = vmatprep.subr.mxu0 0.0
    %4503 = vmatpush1.msra.mxu0 0.0
    %4504 = vmatprep.subr.mxu0 0.0
    %4505 = vmatpush1.msra.mxu0 0.0
    %4506 = vmatprep.subr.mxu0 0.0
    %4507 = vmatpush1.msra.mxu0 0.0
    %4508 = vmatprep.subr.mxu0 0.0
    %4509 = vmatpush1.msra.mxu0 0.0
    %4510 = vmatprep.subr.mxu0 0.0
    %4511 = vmatpush1.msra.mxu0 0.0
    %4512 = vmatprep.subr.mxu0 0.0
    %4513 = vmatpush1.msra.mxu0 0.0
    %4514 = vmatprep.subr.mxu0 0.0
    %4515 = vmatpush1.msra.mxu0 0.0
    %4516 = vmatprep.subr.mxu0 0.0
    %4517 = vmatpush1.msra.mxu0 0.0
    %4518 = vmatprep.subr.mxu0 0.0
    %4519 = vmatpush1.msra.mxu0 0.0
    %4520 = vmatprep.subr.mxu0 0.0
    %4521 = vmatpush1.msra.mxu0 0.0
    %4522 = vmatprep.subr.mxu0 0.0
    %4523 = vmatpush1.msra.mxu0 0.0
    %4524 = vmatprep.mubr.f32.mxu0 0.0
    %4525 = vmatmul.mubr.f32.gmra.mrb[0].mxu0 %v4455
    %v4526 = vpop.f32.mrb[0].mxu0
    %v4527 = vadd.f32 %v4447, %v4526
    %v4528 = vpop.f32.mrb[0].mxu0
    %v4529 = vadd.f32 %v4451, %v4528
    %4530 = vmatprep.mubr.f32.mxu0 0.0
    %4531 = vmatmul.mubr.f32.gmra.mrb[0].mxu0 %v4458
    %v4532 = vpop.f32.mrb[0].mxu0
    %v4533 = vadd.f32 %v4447, %v4532
    %v4534 = vpop.f32.mrb[0].mxu0
    %v4535 = vadd.f32 %v4451, %v4534
    %4536 = vdwg.mxu0
    %v4537 = vmul.f32 %v4527, 1.702
    %v4538 = vmul.f32 %v4529, 1.702
    %v4539 = vmul.f32 %v4533, 1.702
    %v4540 = vmul.f32 %v4535, 1.702
    %v4541 = vxor.u32 %v4537, 2147483648
    %v4542 = vxor.u32 %v4538, 2147483648
    %v4543 = vxor.u32 %v4539, 2147483648
    %v4544 = vxor.u32 %v4540, 2147483648
    %v4545 = vmul.f32 %v4541, 1.442695
    %v4546 = vpow.pop %v4545
    %v4547 = vmul.f32 %v4542, 1.442695
    %v4548 = vpow.pop %v4547
    %v4549 = vmul.f32 %v4543, 1.442695
    %v4550 = vpow.pop %v4549
    %v4551 = vmul.f32 %v4544, 1.442695
    %v4552 = vpow.pop %v4551
    %v4553 = vadd.f32 %v4546, 1.0
    %v4554 = vadd.f32 %v4548, 1.0
    %v4555 = vadd.f32 %v4550, 1.0
    %v4556 = vadd.f32 %v4552, 1.0
    %v4557 = vrcp.pop %v4553
    %v4558 = vmul.f32 1.0, %v4557
    %v4559 = vrcp.pop %v4554
    %v4560 = vmul.f32 1.0, %v4559
    %v4561 = vrcp.pop %v4555
    %v4562 = vmul.f32 1.0, %v4561
    %v4563 = vrcp.pop %v4556
    %v4564 = vmul.f32 1.0, %v4563
    %v4565 = vmul.f32 %v4527, %v4558
    %v4566 = vmul.f32 %v4529, %v4560
    %v4567 = vmul.f32 %v4533, %v4562
    %v4568 = vmul.f32 %v4535, %v4564
    %v4569 = vld [vmem:[%s11] sm:$0xff]
    %v4570 = vld [vmem:[%s11 + $0x8] sm:$0xff]
    %v4571 = vld [vmem:[%s11 + $0x10] sm:$0xff]
    %v4572 = vld [vmem:[%s11 + $0x18] sm:$0xff]
    %v4573 = vld [vmem:[%s11 + $0x20] sm:$0xff]
    %v4574 = vld [vmem:[%s11 + $0x28] sm:$0xff]
    %v4575 = vld [vmem:[%s11 + $0x30] sm:$0xff]
    %v4576 = vld [vmem:[%s11 + $0x38] sm:$0xff]
    %v4577 = vld [vmem:[%s11 + $0x40] sm:$0xff]
    %v4578 = vld [vmem:[%s11 + $0x48] sm:$0xff]
    %v4579 = vld [vmem:[%s11 + $0x50] sm:$0xff]
    %v4580 = vld [vmem:[%s11 + $0x58] sm:$0xff]
    %v4581 = vld [vmem:[%s11 + $0x60] sm:$0xff]
    %v4582 = vld [vmem:[%s11 + $0x68] sm:$0xff]
    %v4583 = vld [vmem:[%s11 + $0x70] sm:$0xff]
    %v4584 = vld [vmem:[%s11 + $0x78] sm:$0xff]
    %v4585 = vld [vmem:[%s11 + $0x80] sm:$0xff]
    %v4586 = vld [vmem:[%s11 + $0x88] sm:$0xff]
    %v4587 = vld [vmem:[%s11 + $0x90] sm:$0xff]
    %v4588 = vld [vmem:[%s11 + $0x98] sm:$0xff]
    %v4589 = vld [vmem:[%s11 + $0xa0] sm:$0xff]
    %v4590 = vld [vmem:[%s11 + $0xa8] sm:$0xff]
    %v4591 = vld [vmem:[%s11 + $0xb0] sm:$0xff]
    %v4592 = vld [vmem:[%s11 + $0xb8] sm:$0xff]
    %v4593 = vld [vmem:[%s11 + $0xc0] sm:$0xff]
    %v4594 = vld [vmem:[%s11 + $0xc8] sm:$0xff]
    %v4595 = vld [vmem:[%s11 + $0xd0] sm:$0xff]
    %v4596 = vld [vmem:[%s11 + $0xd8] sm:$0xff]
    %v4597 = vld [vmem:[%s11 + $0xe0] sm:$0xff]
    %v4598 = vld [vmem:[%s11 + $0xe8] sm:$0xff]
    %v4599 = vld [vmem:[%s11 + $0xf0] sm:$0xff]
    %v4600 = vld [vmem:[%s11 + $0xf8] sm:$0xff]
    %v4601 = vld [vmem:[%s12] sm:$0x1]
    %v4603 = vlaneseq
    %v4604 = vshrl.u32 %v4603, 7
    %v4605 = vsub.s32 0, %v4604
    %v4606 = vrot.slane %v4601, %v4605
    %4608 = vmatprep.subr.mxu0 0.0
    %4609 = vmatpush1.msra.mxu0 %v4569
    %4610 = vmatprep.subr.mxu0 0.0
    %4611 = vmatpush1.msra.mxu0 %v4570
    %4612 = vmatprep.subr.mxu0 0.0
    %4613 = vmatpush1.msra.mxu0 %v4571
    %4614 = vmatprep.subr.mxu0 0.0
    %4615 = vmatpush1.msra.mxu0 %v4572
    %4616 = vmatprep.subr.mxu0 0.0
    %4617 = vmatpush1.msra.mxu0 %v4573
    %4618 = vmatprep.subr.mxu0 0.0
    %4619 = vmatpush1.msra.mxu0 %v4574
    %4620 = vmatprep.subr.mxu0 0.0
    %4621 = vmatpush1.msra.mxu0 %v4575
    %4622 = vmatprep.subr.mxu0 0.0
    %4623 = vmatpush1.msra.mxu0 %v4576
    %4624 = vmatprep.subr.mxu0 0.0
    %4625 = vmatpush1.msra.mxu0 %v4577
    %4626 = vmatprep.subr.mxu0 0.0
    %4627 = vmatpush1.msra.mxu0 %v4578
    %4628 = vmatprep.subr.mxu0 0.0
    %4629 = vmatpush1.msra.mxu0 %v4579
    %4630 = vmatprep.subr.mxu0 0.0
    %4631 = vmatpush1.msra.mxu0 %v4580
    %4632 = vmatprep.subr.mxu0 0.0
    %4633 = vmatpush1.msra.mxu0 %v4581
    %4634 = vmatprep.subr.mxu0 0.0
    %4635 = vmatpush1.msra.mxu0 %v4582
    %4636 = vmatprep.subr.mxu0 0.0
    %4637 = vmatpush1.msra.mxu0 %v4583
    %4638 = vmatprep.subr.mxu0 0.0
    %4639 = vmatpush1.msra.mxu0 %v4584
    %4640 = vmatprep.subr.mxu0 0.0
    %4641 = vmatpush1.msra.mxu0 %v4585
    %4642 = vmatprep.subr.mxu0 0.0
    %4643 = vmatpush1.msra.mxu0 %v4586
    %4644 = vmatprep.subr.mxu0 0.0
    %4645 = vmatpush1.msra.mxu0 %v4587
    %4646 = vmatprep.subr.mxu0 0.0
    %4647 = vmatpush1.msra.mxu0 %v4588
    %4648 = vmatprep.subr.mxu0 0.0
    %4649 = vmatpush1.msra.mxu0 %v4589
    %4650 = vmatprep.subr.mxu0 0.0
    %4651 = vmatpush1.msra.mxu0 %v4590
    %4652 = vmatprep.subr.mxu0 0.0
    %4653 = vmatpush1.msra.mxu0 %v4591
    %4654 = vmatprep.subr.mxu0 0.0
    %4655 = vmatpush1.msra.mxu0 %v4592
    %4656 = vmatprep.subr.mxu0 0.0
    %4657 = vmatpush1.msra.mxu0 %v4593
    %4658 = vmatprep.subr.mxu0 0.0
    %4659 = vmatpush1.msra.mxu0 %v4594
    %4660 = vmatprep.subr.mxu0 0.0
    %4661 = vmatpush1.msra.mxu0 %v4595
    %4662 = vmatprep.subr.mxu0 0.0
    %4663 = vmatpush1.msra.mxu0 %v4596
    %4664 = vmatprep.subr.mxu0 0.0
    %4665 = vmatpush1.msra.mxu0 %v4597
    %4666 = vmatprep.subr.mxu0 0.0
    %4667 = vmatpush1.msra.mxu0 %v4598
    %4668 = vmatprep.subr.mxu0 0.0
    %4669 = vmatpush1.msra.mxu0 %v4599
    %4670 = vmatprep.subr.mxu0 0.0
    %4671 = vmatpush1.msra.mxu0 %v4600
    %4672 = vmatprep.mubr.f32.mxu0 %v4566
    %4673 = vmatmul.mubr.f32.gmra.mrb[0].mxu0 %v4565
    %v4674 = vpop.f32.mrb[0].mxu0
    %v4675 = vadd.f32 %v4606, %v4674
    %v4676 = vpop.f32.mrb[0].mxu0
    %4677 = vmatprep.mubr.f32.mxu0 %v4568
    %4678 = vmatmul.mubr.f32.gmra.mrb[0].mxu0 %v4567
    %v4679 = vpop.f32.mrb[0].mxu0
    %v4680 = vadd.f32 %v4606, %v4679
    %v4681 = vpop.f32.mrb[0].mxu0
    %4682 = vdwg.mxu0
    %v4683 = vadd.f32 %v4675, %v4380
    %v4684 = vadd.f32 %v4680, %v4381
    %4685 = vst.msk [vmem:[#allocation6] sm:$0xff] %vm49, %v4683
    %4686 = vst.msk [vmem:[#allocation6 + $0x8] sm:$0xff] %vm49, %v4684
    // Predicated region
    $region54: #{a_layer_forward.1} parent=1 // pred_check
      _
    $region55: #{a_layer_forward.1} parent=1 // pred_check_branch
      %4688 = sbr.rel (0) target = $region57
    $region56: #{a_layer_forward.1} parent=1 // pred_region
      %s4690 = ssub.s32 256, 256
      %4691 = vsyncadd [#allocation7], %s4690
      %s4692 = sshll.u32 [#allocation6], 4
      %s4693 = int_to_ptr.vmem [resolvable:$true] %s4692
      %4698 = dma.vmem_to_hbm [thread:$0]  %s4693, 256, %s13, [#allocation7], 128, 128, 8
    $region57: #{a_layer_forward.1} parent=1 // pred_fallthru
      _
    // Predicated region
    $region58: #{a_layer_forward.1} parent=1 // pred_check
      _
    $region59: #{a_layer_forward.1} parent=1 // pred_check_branch
      %4700 = sbr.rel (0) target = $region61
    $region60: #{a_layer_forward.1} parent=1 // pred_region
      %4701 = dma.done [#allocation7], 256
    $region61: #{a_layer_forward.1} parent=1 // pred_fallthru
      _
    %4702 = vsyncpa [#allocation7], 1

</llo_original>
